<compile_context>
chip_gen: v7x
topology: tpu7x:2x2x1
jax: 0.10.0
libtpu: 0.0.40
codegen_flags: <defaults>
</compile_context>

<pallas_src>
import jax
import jax.numpy as jnp
from jax.experimental import pallas as pl
from jax.experimental.pallas import tpu as pltpu  # noqa: F401  (TPU backend assumed)

# ---------------- static model config --------------------------------------------
SEQ_LEN = 16        # args.seq_len   -> in_feats of GATConv #1
INPUT_SIZE = 8      # args.input_size -> number of graph nodes N (and # MLP heads)
OUTPUT_SIZE = 8     # args.output_size
H_FEATS = 64        # hidden feats of GAT
OUT_FEATS = 128     # self.out_feats
HEADS = 4
NEG_SLOPE = 0.2     # PyG GATConv default negative_slope
MLP_HIDDEN = 64
BATCH = 2


# ---------------- in-kernel GATConv (dense block-diag adjacency, all heads at once)
def _gat_conv(xs, adj, w, att_src, att_dst, bias):
    """PyG-style GATConv with concat=False (mean over heads) on a dense mask.

    xs : (BN, Fin)  batch-major stacked node features (block-diag adj keeps the
         softmax per-graph).
    adj: (BN, BN)   adj[i, j] = 1 iff edge j -> i (self-loops included)
    w  : (H, Fin, Fout)   att_src/att_dst: (H, Fout)   bias: (1, Fout)
    """
    heads, fin, fout = w.shape
    bn = xs.shape[0]

    # per-head projection, one batched MXU matmul: (H, BN, Fout)
    x_h = jnp.broadcast_to(xs[None], (heads, bn, fin))
    h = jnp.einsum('hnf,hfo->hno', x_h, w, preferred_element_type=jnp.float32)

    # attention logits  e[h, i, j] = a_dst[h]·(W_h x_i) + a_src[h]·(W_h x_j)
    s_dst = jnp.einsum('hnf,hmf->hnm', h, att_dst[:, None, :],
                       preferred_element_type=jnp.float32)          # (H, BN, 1)
    s_src = jnp.einsum('hmf,hnf->hmn', att_src[:, None, :], h,
                       preferred_element_type=jnp.float32)          # (H, 1, BN)
    e = s_dst + s_src                                               # (H, BN, BN)
    e = jnp.where(e > 0.0, e, NEG_SLOPE * e)                        # leaky_relu(0.2)
    mask = jnp.broadcast_to(adj[None, :, :] > 0.5, e.shape)
    e = jnp.where(mask, e, -1e30)                                   # mask non-edges

    # softmax over source nodes j (every row has its self-loop, so it's safe)
    e = e - jnp.max(e, axis=-1, keepdims=True)
    p = jnp.exp(e)
    p = p / jnp.sum(p, axis=-1, keepdims=True)

    # aggregate + mean over heads + bias
    o = jnp.einsum('hnm,hmf->hnf', p, h, preferred_element_type=jnp.float32)
    return jnp.sum(o, axis=0) * (1.0 / heads) + bias                # (BN, Fout)


# ---------------- single fused kernel: permute -> GAT -> ELU -> GAT -> MLP heads --
def gat_mlp_kernel(x_ref, adj_ref,
                   w1_ref, as1_ref, ad1_ref, b1_ref,
                   w2_ref, as2_ref, ad2_ref, b2_ref,
                   fw1_ref, fb1_ref, fw2_ref, fb2_ref,
                   out_ref):
    b_sz, f_sz, n_sz = x_ref.shape                 # (BATCH, SEQ_LEN, INPUT_SIZE)
    bn = b_sz * n_sz
    adj = adj_ref[...]                             # (BN, BN) block-diagonal mask

    # x.permute(0, 2, 1), batches stacked batch-major along the row dimension
    xs = jnp.transpose(x_ref[...], (0, 2, 1)).reshape(bn, f_sz)     # (BN, SEQ_LEN)

    # ---- GAT: conv1 -> ELU -> conv2 ----
    h1 = _gat_conv(xs, adj, w1_ref[...], as1_ref[...], ad1_ref[...], b1_ref[...])
    h1 = jnp.where(h1 > 0.0, h1, jnp.exp(jnp.minimum(h1, 0.0)) - 1.0)   # F.elu
    h2 = _gat_conv(h1, adj, w2_ref[...], as2_ref[...], ad2_ref[...], b2_ref[...])
    # h2: (BN, 128), batch-major rows

    # ---- per-node MLP heads, fused (node axis = batch dim of the einsums) ----
    h_nb = jnp.transpose(h2.reshape(b_sz, n_sz, OUT_FEATS), (1, 0, 2))  # (N, B, 128)
    z = jnp.einsum('nbf,nfh->nbh', h_nb, fw1_ref[...],
                   preferred_element_type=jnp.float32) + fb1_ref[...]   # (N, B, 64)
    z = jnp.maximum(z, 0.0)                                             # ReLU
    out = jnp.einsum('nbh,nho->nbo', z, fw2_ref[...],
                     preferred_element_type=jnp.float32) + fb2_ref[...] # (N, B, O)
    out_ref[...] = out


# ---------------- forward: wrapper is glue-free (just the pallas_call) ------------
def gat_mlp_forward(x, adj_bd, p):
    B = x.shape[0]
    N = x.shape[2]
    return pl.pallas_call(
        gat_mlp_kernel,
        out_shape=jax.ShapeDtypeStruct((N, B, OUTPUT_SIZE), jnp.float32),
    )(x, adj_bd,
      p["w1"], p["as1"], p["ad1"], p["b1"],
      p["w2"], p["as2"], p["ad2"], p["b2"],
      p["fw1"], p["fb1"], p["fw2"], p["fb2"])


# ---------------- deterministic parameter / graph construction --------------------
def init_params(key):
    ks = jax.random.split(key, 12)
    s = 0.1
    p = {}
    # GATConv #1: in=SEQ_LEN, out=H_FEATS, heads=4 (per-head weight slabs)
    p["w1"] = s * jax.random.normal(ks[0], (HEADS, SEQ_LEN, H_FEATS), jnp.float32)
    p["as1"] = s * jax.random.normal(ks[1], (HEADS, H_FEATS), jnp.float32)
    p["ad1"] = s * jax.random.normal(ks[2], (HEADS, H_FEATS), jnp.float32)
    p["b1"] = s * jax.random.normal(ks[3], (1, H_FEATS), jnp.float32)
    # GATConv #2: in=H_FEATS, out=OUT_FEATS, heads=4
    p["w2"] = s * jax.random.normal(ks[4], (HEADS, H_FEATS, OUT_FEATS), jnp.float32)
    p["as2"] = s * jax.random.normal(ks[5], (HEADS, OUT_FEATS), jnp.float32)
    p["ad2"] = s * jax.random.normal(ks[6], (HEADS, OUT_FEATS), jnp.float32)
    p["b2"] = s * jax.random.normal(ks[7], (1, OUT_FEATS), jnp.float32)
    # per-node MLP heads: input_size x [Linear(128,64), ReLU, Linear(64,output_size)]
    p["fw1"] = s * jax.random.normal(ks[8], (INPUT_SIZE, OUT_FEATS, MLP_HIDDEN), jnp.float32)
    p["fb1"] = s * jax.random.normal(ks[9], (INPUT_SIZE, 1, MLP_HIDDEN), jnp.float32)
    p["fw2"] = s * jax.random.normal(ks[10], (INPUT_SIZE, MLP_HIDDEN, OUTPUT_SIZE), jnp.float32)
    p["fb2"] = s * jax.random.normal(ks[11], (INPUT_SIZE, 1, OUTPUT_SIZE), jnp.float32)
    return p


def build_adjacency(n):
    # deterministic bidirectional ring graph; edge_index = [src; dst]
    src = jnp.arange(n)
    dst = (src + 1) % n
    e_src = jnp.concatenate([src, dst])
    e_dst = jnp.concatenate([dst, src])
    adj = jnp.zeros((n, n), jnp.float32).at[e_dst, e_src].set(1.0)   # adj[i, j]: edge j->i
    adj = jnp.maximum(adj, jnp.eye(n, dtype=jnp.float32))            # PyG add_self_loops
    return adj


def block_diag_adjacency(adj, batch):
    # batch-major block-diagonal mask so softmax stays per-graph after stacking
    return jnp.kron(jnp.eye(batch, dtype=adj.dtype), adj)


if __name__ == "__main__":
    key = jax.random.PRNGKey(0)
    k_x, k_p = jax.random.split(key)
    x = jax.random.normal(k_x, (BATCH, SEQ_LEN, INPUT_SIZE), jnp.float32)
    params = init_params(k_p)
    adj_bd = block_diag_adjacency(build_adjacency(INPUT_SIZE), BATCH)  # built once, host-side

    pred = jax.jit(gat_mlp_forward)(x, adj_bd, params)
    jax.block_until_ready(pred)
    assert pred.shape == (INPUT_SIZE, BATCH, OUTPUT_SIZE)
    print("KERNEL_OK")
</pallas_src>

<mosaic_0001>
module attributes {stable_mosaic.version = 11 : i64} {
  func.func @gat_mlp_kernel(%arg0: memref<2x16x8xf32, #tpu.memory_space<vmem>>, %arg1: memref<16x16xf32, #tpu.memory_space<vmem>>, %arg2: memref<4x16x64xf32, #tpu.memory_space<vmem>>, %arg3: memref<4x64xf32, #tpu.memory_space<vmem>>, %arg4: memref<4x64xf32, #tpu.memory_space<vmem>>, %arg5: memref<1x64xf32, #tpu.memory_space<vmem>>, %arg6: memref<4x64x128xf32, #tpu.memory_space<vmem>>, %arg7: memref<4x128xf32, #tpu.memory_space<vmem>>, %arg8: memref<4x128xf32, #tpu.memory_space<vmem>>, %arg9: memref<1x128xf32, #tpu.memory_space<vmem>>, %arg10: memref<8x128x64xf32, #tpu.memory_space<vmem>>, %arg11: memref<8x1x64xf32, #tpu.memory_space<vmem>>, %arg12: memref<8x64x8xf32, #tpu.memory_space<vmem>>, %arg13: memref<8x1x8xf32, #tpu.memory_space<vmem>>, %arg14: memref<8x2x8xf32, #tpu.memory_space<vmem>>) attributes {dimension_semantics = [], scalar_prefetch = 0 : i64, scratch_operands = 0 : i64, tpu.core_type = #tpu.core_type<tc>} {
    %c0 = arith.constant 0 : index
    %c0_0 = arith.constant 0 : index
    %0 = vector.load %arg1[%c0, %c0_0] : memref<16x16xf32, #tpu.memory_space<vmem>>, vector<16x16xf32>
    %c0_1 = arith.constant 0 : index
    %c0_2 = arith.constant 0 : index
    %c0_3 = arith.constant 0 : index
    %1 = vector.load %arg0[%c0_1, %c0_2, %c0_3] : memref<2x16x8xf32, #tpu.memory_space<vmem>>, vector<2x16x8xf32>
    %2 = tpu.transpose %1, [0, 2, 1] : vector<2x16x8xf32> -> vector<2x8x16xf32>
    %3 = vector.shape_cast %2 : vector<2x8x16xf32> to vector<16x16xf32>
    %c0_4 = arith.constant 0 : index
    %c0_5 = arith.constant 0 : index
    %c0_6 = arith.constant 0 : index
    %4 = vector.load %arg2[%c0_4, %c0_5, %c0_6] : memref<4x16x64xf32, #tpu.memory_space<vmem>>, vector<4x16x64xf32>
    %c0_7 = arith.constant 0 : index
    %c0_8 = arith.constant 0 : index
    %5 = vector.load %arg3[%c0_7, %c0_8] : memref<4x64xf32, #tpu.memory_space<vmem>>, vector<4x64xf32>
    %c0_9 = arith.constant 0 : index
    %c0_10 = arith.constant 0 : index
    %6 = vector.load %arg4[%c0_9, %c0_10] : memref<4x64xf32, #tpu.memory_space<vmem>>, vector<4x64xf32>
    %c0_11 = arith.constant 0 : index
    %c0_12 = arith.constant 0 : index
    %7 = vector.load %arg5[%c0_11, %c0_12] : memref<1x64xf32, #tpu.memory_space<vmem>>, vector<1x64xf32>
    %8 = vector.shape_cast %3 : vector<16x16xf32> to vector<1x16x16xf32>
    %9 = vector.shape_cast %8 : vector<1x16x16xf32> to vector<1x16x16xf32>
    %10 = vector.broadcast %9 : vector<1x16x16xf32> to vector<4x16x16xf32>
    "tpu.trace_start"() <{level = 10 : i32, message = "hnf,hfo->hno"}> : () -> ()
    %cst = arith.constant dense<0.000000e+00> : vector<4x16x64xf32>
    %11 = tpu.matmul %10, %4, %cst {dimension_numbers = #tpu.dot_dimension_numbers<[2], [1], [1], [2], [0, 0, 0, 1, 1, 2], [0], [0]>} : vector<4x16x16xf32>, vector<4x16x64xf32>, vector<4x16x64xf32> -> vector<4x16x64xf32>
    "tpu.trace_stop"() : () -> ()
    %12 = vector.shape_cast %6 : vector<4x64xf32> to vector<4x1x64xf32>
    "tpu.trace_start"() <{level = 10 : i32, message = "hnf,hmf->hnm"}> : () -> ()
    %cst_13 = arith.constant dense<0.000000e+00> : vector<4x16x1xf32>
    %13 = tpu.matmul %11, %12, %cst_13 {dimension_numbers = #tpu.dot_dimension_numbers<[2], [2], [1], [1], [0, 0, 0, 1, 1, 1], [0], [0]>} : vector<4x16x64xf32>, vector<4x1x64xf32>, vector<4x16x1xf32> -> vector<4x16x1xf32>
    "tpu.trace_stop"() : () -> ()
    %14 = vector.shape_cast %5 : vector<4x64xf32> to vector<4x1x64xf32>
    "tpu.trace_start"() <{level = 10 : i32, message = "hmf,hnf->hmn"}> : () -> ()
    %cst_14 = arith.constant dense<0.000000e+00> : vector<4x1x16xf32>
    %15 = tpu.matmul %14, %11, %cst_14 {dimension_numbers = #tpu.dot_dimension_numbers<[2], [2], [1], [1], [0, 0, 0, 1, 1, 1], [0], [0]>} : vector<4x1x64xf32>, vector<4x16x64xf32>, vector<4x1x16xf32> -> vector<4x1x16xf32>
    "tpu.trace_stop"() : () -> ()
    %16 = vector.broadcast %13 : vector<4x16x1xf32> to vector<4x16x16xf32>
    %17 = vector.broadcast %15 : vector<4x1x16xf32> to vector<4x16x16xf32>
    %18 = arith.addf %16, %17 : vector<4x16x16xf32>
    %cst_15 = arith.constant 0.000000e+00 : f32
    %19 = vector.broadcast %cst_15 : f32 to vector<4x16x16xf32>
    %20 = arith.cmpf ogt, %18, %19 : vector<4x16x16xf32>
    %cst_16 = arith.constant 2.000000e-01 : f32
    %21 = vector.broadcast %cst_16 : f32 to vector<4x16x16xf32>
    %22 = arith.mulf %21, %18 : vector<4x16x16xf32>
    %23 = arith.select %20, %18, %22 : vector<4x16x16xi1>, vector<4x16x16xf32>
    %24 = vector.shape_cast %0 : vector<16x16xf32> to vector<1x16x16xf32>
    %cst_17 = arith.constant 5.000000e-01 : f32
    %25 = vector.broadcast %cst_17 : f32 to vector<1x16x16xf32>
    %26 = arith.cmpf ogt, %24, %25 : vector<1x16x16xf32>
    %27 = vector.shape_cast %26 : vector<1x16x16xi1> to vector<1x16x16xi1>
    %28 = vector.broadcast %27 : vector<1x16x16xi1> to vector<4x16x16xi1>
    %cst_18 = arith.constant -1.000000e+30 : f32
    %29 = vector.broadcast %cst_18 : f32 to vector<4x16x16xf32>
    %30 = arith.select %28, %23, %29 : vector<4x16x16xi1>, vector<4x16x16xf32>
    %cst_19 = arith.constant dense<0xFF800000> : vector<4x16xf32>
    %31 = vector.multi_reduction <maximumf>, %30, %cst_19 [2] : vector<4x16x16xf32> to vector<4x16xf32>
    %32 = vector.shape_cast %31 : vector<4x16xf32> to vector<4x16x1xf32>
    %33 = vector.broadcast %32 : vector<4x16x1xf32> to vector<4x16x16xf32>
    %34 = arith.subf %30, %33 : vector<4x16x16xf32>
    %35 = math.exp %34 : vector<4x16x16xf32>
    %cst_20 = arith.constant dense<0.000000e+00> : vector<4x16xf32>
    %36 = vector.multi_reduction <add>, %35, %cst_20 [2] : vector<4x16x16xf32> to vector<4x16xf32>
    %37 = vector.shape_cast %36 : vector<4x16xf32> to vector<4x16x1xf32>
    %38 = vector.broadcast %37 : vector<4x16x1xf32> to vector<4x16x16xf32>
    %39 = arith.divf %35, %38 : vector<4x16x16xf32>
    "tpu.trace_start"() <{level = 10 : i32, message = "hnm,hmf->hnf"}> : () -> ()
    %cst_21 = arith.constant dense<0.000000e+00> : vector<4x16x64xf32>
    %40 = tpu.matmul %39, %11, %cst_21 {dimension_numbers = #tpu.dot_dimension_numbers<[2], [1], [1], [2], [0, 0, 0, 1, 1, 2], [0], [0]>} : vector<4x16x16xf32>, vector<4x16x64xf32>, vector<4x16x64xf32> -> vector<4x16x64xf32>
    "tpu.trace_stop"() : () -> ()
    %cst_22 = arith.constant dense<0.000000e+00> : vector<16x64xf32>
    %41 = vector.multi_reduction <add>, %40, %cst_22 [0] : vector<4x16x64xf32> to vector<16x64xf32>
    %cst_23 = arith.constant 2.500000e-01 : f32
    %42 = vector.broadcast %cst_23 : f32 to vector<16x64xf32>
    %43 = arith.mulf %41, %42 : vector<16x64xf32>
    %44 = vector.broadcast %7 : vector<1x64xf32> to vector<16x64xf32>
    %45 = arith.addf %43, %44 : vector<16x64xf32>
    %cst_24 = arith.constant 0.000000e+00 : f32
    %46 = vector.broadcast %cst_24 : f32 to vector<16x64xf32>
    %47 = arith.cmpf ogt, %45, %46 : vector<16x64xf32>
    %cst_25 = arith.constant 0.000000e+00 : f32
    %48 = vector.broadcast %cst_25 : f32 to vector<16x64xf32>
    %49 = arith.minimumf %45, %48 : vector<16x64xf32>
    %50 = math.exp %49 : vector<16x64xf32>
    %cst_26 = arith.constant 1.000000e+00 : f32
    %51 = vector.broadcast %cst_26 : f32 to vector<16x64xf32>
    %52 = arith.subf %50, %51 : vector<16x64xf32>
    %53 = arith.select %47, %45, %52 : vector<16x64xi1>, vector<16x64xf32>
    %c0_27 = arith.constant 0 : index
    %c0_28 = arith.constant 0 : index
    %c0_29 = arith.constant 0 : index
    %54 = vector.load %arg6[%c0_27, %c0_28, %c0_29] : memref<4x64x128xf32, #tpu.memory_space<vmem>>, vector<4x64x128xf32>
    %c0_30 = arith.constant 0 : index
    %c0_31 = arith.constant 0 : index
    %55 = vector.load %arg7[%c0_30, %c0_31] : memref<4x128xf32, #tpu.memory_space<vmem>>, vector<4x128xf32>
    %c0_32 = arith.constant 0 : index
    %c0_33 = arith.constant 0 : index
    %56 = vector.load %arg8[%c0_32, %c0_33] : memref<4x128xf32, #tpu.memory_space<vmem>>, vector<4x128xf32>
    %c0_34 = arith.constant 0 : index
    %c0_35 = arith.constant 0 : index
    %57 = vector.load %arg9[%c0_34, %c0_35] : memref<1x128xf32, #tpu.memory_space<vmem>>, vector<1x128xf32>
    %58 = vector.shape_cast %53 : vector<16x64xf32> to vector<1x16x64xf32>
    %59 = vector.shape_cast %58 : vector<1x16x64xf32> to vector<1x16x64xf32>
    %60 = vector.broadcast %59 : vector<1x16x64xf32> to vector<4x16x64xf32>
    "tpu.trace_start"() <{level = 10 : i32, message = "hnf,hfo->hno"}> : () -> ()
    %cst_36 = arith.constant dense<0.000000e+00> : vector<4x16x128xf32>
    %61 = tpu.matmul %60, %54, %cst_36 {dimension_numbers = #tpu.dot_dimension_numbers<[2], [1], [1], [2], [0, 0, 0, 1, 1, 2], [0], [0]>} : vector<4x16x64xf32>, vector<4x64x128xf32>, vector<4x16x128xf32> -> vector<4x16x128xf32>
    "tpu.trace_stop"() : () -> ()
    %62 = vector.shape_cast %56 : vector<4x128xf32> to vector<4x1x128xf32>
    "tpu.trace_start"() <{level = 10 : i32, message = "hnf,hmf->hnm"}> : () -> ()
    %cst_37 = arith.constant dense<0.000000e+00> : vector<4x16x1xf32>
    %63 = tpu.matmul %61, %62, %cst_37 {dimension_numbers = #tpu.dot_dimension_numbers<[2], [2], [1], [1], [0, 0, 0, 1, 1, 1], [0], [0]>} : vector<4x16x128xf32>, vector<4x1x128xf32>, vector<4x16x1xf32> -> vector<4x16x1xf32>
    "tpu.trace_stop"() : () -> ()
    %64 = vector.shape_cast %55 : vector<4x128xf32> to vector<4x1x128xf32>
    "tpu.trace_start"() <{level = 10 : i32, message = "hmf,hnf->hmn"}> : () -> ()
    %cst_38 = arith.constant dense<0.000000e+00> : vector<4x1x16xf32>
    %65 = tpu.matmul %64, %61, %cst_38 {dimension_numbers = #tpu.dot_dimension_numbers<[2], [2], [1], [1], [0, 0, 0, 1, 1, 1], [0], [0]>} : vector<4x1x128xf32>, vector<4x16x128xf32>, vector<4x1x16xf32> -> vector<4x1x16xf32>
    "tpu.trace_stop"() : () -> ()
    %66 = vector.broadcast %63 : vector<4x16x1xf32> to vector<4x16x16xf32>
    %67 = vector.broadcast %65 : vector<4x1x16xf32> to vector<4x16x16xf32>
    %68 = arith.addf %66, %67 : vector<4x16x16xf32>
    %cst_39 = arith.constant 0.000000e+00 : f32
    %69 = vector.broadcast %cst_39 : f32 to vector<4x16x16xf32>
    %70 = arith.cmpf ogt, %68, %69 : vector<4x16x16xf32>
    %cst_40 = arith.constant 2.000000e-01 : f32
    %71 = vector.broadcast %cst_40 : f32 to vector<4x16x16xf32>
    %72 = arith.mulf %71, %68 : vector<4x16x16xf32>
    %73 = arith.select %70, %68, %72 : vector<4x16x16xi1>, vector<4x16x16xf32>
    %74 = vector.shape_cast %0 : vector<16x16xf32> to vector<1x16x16xf32>
    %cst_41 = arith.constant 5.000000e-01 : f32
    %75 = vector.broadcast %cst_41 : f32 to vector<1x16x16xf32>
    %76 = arith.cmpf ogt, %74, %75 : vector<1x16x16xf32>
    %77 = vector.shape_cast %76 : vector<1x16x16xi1> to vector<1x16x16xi1>
    %78 = vector.broadcast %77 : vector<1x16x16xi1> to vector<4x16x16xi1>
    %cst_42 = arith.constant -1.000000e+30 : f32
    %79 = vector.broadcast %cst_42 : f32 to vector<4x16x16xf32>
    %80 = arith.select %78, %73, %79 : vector<4x16x16xi1>, vector<4x16x16xf32>
    %cst_43 = arith.constant dense<0xFF800000> : vector<4x16xf32>
    %81 = vector.multi_reduction <maximumf>, %80, %cst_43 [2] : vector<4x16x16xf32> to vector<4x16xf32>
    %82 = vector.shape_cast %81 : vector<4x16xf32> to vector<4x16x1xf32>
    %83 = vector.broadcast %82 : vector<4x16x1xf32> to vector<4x16x16xf32>
    %84 = arith.subf %80, %83 : vector<4x16x16xf32>
    %85 = math.exp %84 : vector<4x16x16xf32>
    %cst_44 = arith.constant dense<0.000000e+00> : vector<4x16xf32>
    %86 = vector.multi_reduction <add>, %85, %cst_44 [2] : vector<4x16x16xf32> to vector<4x16xf32>
    %87 = vector.shape_cast %86 : vector<4x16xf32> to vector<4x16x1xf32>
    %88 = vector.broadcast %87 : vector<4x16x1xf32> to vector<4x16x16xf32>
    %89 = arith.divf %85, %88 : vector<4x16x16xf32>
    "tpu.trace_start"() <{level = 10 : i32, message = "hnm,hmf->hnf"}> : () -> ()
    %cst_45 = arith.constant dense<0.000000e+00> : vector<4x16x128xf32>
    %90 = tpu.matmul %89, %61, %cst_45 {dimension_numbers = #tpu.dot_dimension_numbers<[2], [1], [1], [2], [0, 0, 0, 1, 1, 2], [0], [0]>} : vector<4x16x16xf32>, vector<4x16x128xf32>, vector<4x16x128xf32> -> vector<4x16x128xf32>
    "tpu.trace_stop"() : () -> ()
    %cst_46 = arith.constant dense<0.000000e+00> : vector<16x128xf32>
    %91 = vector.multi_reduction <add>, %90, %cst_46 [0] : vector<4x16x128xf32> to vector<16x128xf32>
    %cst_47 = arith.constant 2.500000e-01 : f32
    %92 = vector.broadcast %cst_47 : f32 to vector<16x128xf32>
    %93 = arith.mulf %91, %92 : vector<16x128xf32>
    %94 = vector.broadcast %57 : vector<1x128xf32> to vector<16x128xf32>
    %95 = arith.addf %93, %94 : vector<16x128xf32>
    %96 = vector.shape_cast %95 : vector<16x128xf32> to vector<2x8x128xf32>
    %97 = tpu.transpose %96, [1, 0, 2] : vector<2x8x128xf32> -> vector<8x2x128xf32>
    %c0_48 = arith.constant 0 : index
    %c0_49 = arith.constant 0 : index
    %c0_50 = arith.constant 0 : index
    %98 = vector.load %arg10[%c0_48, %c0_49, %c0_50] : memref<8x128x64xf32, #tpu.memory_space<vmem>>, vector<8x128x64xf32>
    "tpu.trace_start"() <{level = 10 : i32, message = "nbf,nfh->nbh"}> : () -> ()
    %cst_51 = arith.constant dense<0.000000e+00> : vector<8x2x64xf32>
    %99 = tpu.matmul %97, %98, %cst_51 {dimension_numbers = #tpu.dot_dimension_numbers<[2], [1], [1], [2], [0, 0, 0, 1, 1, 2], [0], [0]>} : vector<8x2x128xf32>, vector<8x128x64xf32>, vector<8x2x64xf32> -> vector<8x2x64xf32>
    "tpu.trace_stop"() : () -> ()
    %c0_52 = arith.constant 0 : index
    %c0_53 = arith.constant 0 : index
    %c0_54 = arith.constant 0 : index
    %100 = vector.load %arg11[%c0_52, %c0_53, %c0_54] : memref<8x1x64xf32, #tpu.memory_space<vmem>>, vector<8x1x64xf32>
    %101 = vector.broadcast %100 : vector<8x1x64xf32> to vector<8x2x64xf32>
    %102 = arith.addf %99, %101 : vector<8x2x64xf32>
    %cst_55 = arith.constant 0.000000e+00 : f32
    %103 = vector.broadcast %cst_55 : f32 to vector<8x2x64xf32>
    %104 = arith.maximumf %102, %103 : vector<8x2x64xf32>
    %c0_56 = arith.constant 0 : index
    %c0_57 = arith.constant 0 : index
    %c0_58 = arith.constant 0 : index
    %105 = vector.load %arg12[%c0_56, %c0_57, %c0_58] : memref<8x64x8xf32, #tpu.memory_space<vmem>>, vector<8x64x8xf32>
    "tpu.trace_start"() <{level = 10 : i32, message = "nbh,nho->nbo"}> : () -> ()
    %cst_59 = arith.constant dense<0.000000e+00> : vector<8x2x8xf32>
    %106 = tpu.matmul %104, %105, %cst_59 {dimension_numbers = #tpu.dot_dimension_numbers<[2], [1], [1], [2], [0, 0, 0, 1, 1, 2], [0], [0]>} : vector<8x2x64xf32>, vector<8x64x8xf32>, vector<8x2x8xf32> -> vector<8x2x8xf32>
    "tpu.trace_stop"() : () -> ()
    %c0_60 = arith.constant 0 : index
    %c0_61 = arith.constant 0 : index
    %c0_62 = arith.constant 0 : index
    %107 = vector.load %arg13[%c0_60, %c0_61, %c0_62] : memref<8x1x8xf32, #tpu.memory_space<vmem>>, vector<8x1x8xf32>
    %108 = vector.broadcast %107 : vector<8x1x8xf32> to vector<8x2x8xf32>
    %109 = arith.addf %106, %108 : vector<8x2x8xf32>
    %c0_63 = arith.constant 0 : index
    %c0_64 = arith.constant 0 : index
    %c0_65 = arith.constant 0 : index
    %110 = vector.load %arg14[%c0_63, %c0_64, %c0_65] : memref<8x2x8xf32, #tpu.memory_space<vmem>>, vector<8x2x8xf32>
    tpu.vector_store %arg14[%c0_63, %c0_64, %c0_65], %109 {strides = array<i32>} : memref<8x2x8xf32, #tpu.memory_space<vmem>>, vector<8x2x8xf32>,
    return
  }
}

</mosaic_0001>

<llo_original>
// kernel: gat_mlp_forward.1
$region0: #{gat_mlp_forward.1}
  #allocation0 [shape = 'u32[]', space=smem, size = 0x4, offset = 0x4, fixed_abs, tag = 'smem constant byte address 0x4 - core index']
  #allocation1 [shape = 'u32[144,128]{1,0:T(1,128)}', space=vmem, size = 0x12000, scoped, tag = 'internal scratch']
  %s0 = inlined_call_operand.vmem [shape: f32[2,16,8], index: 0, kind: input, shape index: {}]
  %s1 = inlined_call_operand.vmem [shape: f32[16,16], index: 1, kind: input, shape index: {}]
  %s2 = inlined_call_operand.vmem [shape: f32[4,16,64], index: 2, kind: input, shape index: {}]
  %s3 = inlined_call_operand.vmem [shape: f32[4,64], index: 3, kind: input, shape index: {}]
  %s4 = inlined_call_operand.vmem [shape: f32[4,64], index: 4, kind: input, shape index: {}]
  %s5 = inlined_call_operand.vmem [shape: f32[1,64], index: 5, kind: input, shape index: {}]
  %s6 = inlined_call_operand.vmem [shape: f32[4,64,128], index: 6, kind: input, shape index: {}]
  %s7 = inlined_call_operand.vmem [shape: f32[4,128], index: 7, kind: input, shape index: {}]
  %s8 = inlined_call_operand.vmem [shape: f32[4,128], index: 8, kind: input, shape index: {}]
  %s9 = inlined_call_operand.vmem [shape: f32[1,128], index: 9, kind: input, shape index: {}]
  %s10 = inlined_call_operand.vmem [shape: f32[8,128,64], index: 10, kind: input, shape index: {}]
  %s11 = inlined_call_operand.vmem [shape: f32[8,1,64], index: 11, kind: input, shape index: {}]
  %s12 = inlined_call_operand.vmem [shape: f32[8,64,8], index: 12, kind: input, shape index: {}]
  %s13 = inlined_call_operand.vmem [shape: f32[8,1,8], index: 13, kind: input, shape index: {}]
  %s14 = inlined_call_operand.hbm [shape: f32[8,2,8], index: 14, kind: output, shape index: {}]
  %s15 = sld [smem:[#allocation0]]
  $region66: #{gat_mlp_forward.1} parent=0
    _
  %s17 = ssub.s32 1, %s15
  %s18 = scalar_select 0, %s17, %s15
  $region1: #{gat_mlp_forward.1} parent=0
    #allocation2 [shape = 'u8[8192]{0}', space=vmem, size = 0x2000, scoped, tag = 'output window, operand 0, single buffered']
    #allocation3 [shape = 's32[1]{0}', space=sflag, size = 0x4, scoped, tag = 'scoped memory for gat_mlp_forward.1']
    %19 = vsyncpa [#allocation3], 0
    // Predicated region
    $region2: #{gat_mlp_forward.1} parent=1 // pred_check
      _
    $region3: #{gat_mlp_forward.1} parent=1 // pred_check_branch
      %21 = sbr.rel (0) target = $region5
    $region4: #{gat_mlp_forward.1} parent=1 // pred_region
      _
    $region5: #{gat_mlp_forward.1} parent=1 // pred_fallthru
      _
    // Predicated region
    $region6: #{gat_mlp_forward.1} parent=1 // pred_check
      _
    $region7: #{gat_mlp_forward.1} parent=1 // pred_check_branch
      %23 = sbr.rel (0) target = $region9
    $region8: #{gat_mlp_forward.1} parent=1 // pred_region
      _
    $region9: #{gat_mlp_forward.1} parent=1 // pred_fallthru
      _
    // Predicated region
    $region10: #{gat_mlp_forward.1} parent=1 // pred_check
      _
    $region11: #{gat_mlp_forward.1} parent=1 // pred_check_branch
      %25 = sbr.rel (0) target = $region13
    $region12: #{gat_mlp_forward.1} parent=1 // pred_region
      _
    $region13: #{gat_mlp_forward.1} parent=1 // pred_fallthru
      _
    // Predicated region
    $region14: #{gat_mlp_forward.1} parent=1 // pred_check
      _
    $region15: #{gat_mlp_forward.1} parent=1 // pred_check_branch
      %27 = sbr.rel (0) target = $region17
    $region16: #{gat_mlp_forward.1} parent=1 // pred_region
      _
    $region17: #{gat_mlp_forward.1} parent=1 // pred_fallthru
      _
    // Predicated region
    $region18: #{gat_mlp_forward.1} parent=1 // pred_check
      _
    $region19: #{gat_mlp_forward.1} parent=1 // pred_check_branch
      %29 = sbr.rel (0) target = $region21
    $region20: #{gat_mlp_forward.1} parent=1 // pred_region
      _
    $region21: #{gat_mlp_forward.1} parent=1 // pred_fallthru
      _
    // Predicated region
    $region22: #{gat_mlp_forward.1} parent=1 // pred_check
      _
    $region23: #{gat_mlp_forward.1} parent=1 // pred_check_branch
      %31 = sbr.rel (0) target = $region25
    $region24: #{gat_mlp_forward.1} parent=1 // pred_region
      _
    $region25: #{gat_mlp_forward.1} parent=1 // pred_fallthru
      _
    // Predicated region
    $region26: #{gat_mlp_forward.1} parent=1 // pred_check
      _
    $region27: #{gat_mlp_forward.1} parent=1 // pred_check_branch
      %33 = sbr.rel (0) target = $region29
    $region28: #{gat_mlp_forward.1} parent=1 // pred_region
      _
    $region29: #{gat_mlp_forward.1} parent=1 // pred_fallthru
      _
    // Predicated region
    $region30: #{gat_mlp_forward.1} parent=1 // pred_check
      _
    $region31: #{gat_mlp_forward.1} parent=1 // pred_check_branch
      %35 = sbr.rel (0) target = $region33
    $region32: #{gat_mlp_forward.1} parent=1 // pred_region
      _
    $region33: #{gat_mlp_forward.1} parent=1 // pred_fallthru
      _
    // Predicated region
    $region34: #{gat_mlp_forward.1} parent=1 // pred_check
      _
    $region35: #{gat_mlp_forward.1} parent=1 // pred_check_branch
      %37 = sbr.rel (0) target = $region37
    $region36: #{gat_mlp_forward.1} parent=1 // pred_region
      _
    $region37: #{gat_mlp_forward.1} parent=1 // pred_fallthru
      _
    // Predicated region
    $region38: #{gat_mlp_forward.1} parent=1 // pred_check
      _
    $region39: #{gat_mlp_forward.1} parent=1 // pred_check_branch
      %39 = sbr.rel (0) target = $region41
    $region40: #{gat_mlp_forward.1} parent=1 // pred_region
      _
    $region41: #{gat_mlp_forward.1} parent=1 // pred_fallthru
      _
    // Predicated region
    $region42: #{gat_mlp_forward.1} parent=1 // pred_check
      _
    $region43: #{gat_mlp_forward.1} parent=1 // pred_check_branch
      %41 = sbr.rel (0) target = $region45
    $region44: #{gat_mlp_forward.1} parent=1 // pred_region
      _
    $region45: #{gat_mlp_forward.1} parent=1 // pred_fallthru
      _
    // Predicated region
    $region46: #{gat_mlp_forward.1} parent=1 // pred_check
      _
    $region47: #{gat_mlp_forward.1} parent=1 // pred_check_branch
      %43 = sbr.rel (0) target = $region49
    $region48: #{gat_mlp_forward.1} parent=1 // pred_region
      _
    $region49: #{gat_mlp_forward.1} parent=1 // pred_fallthru
      _
    // Predicated region
    $region50: #{gat_mlp_forward.1} parent=1 // pred_check
      _
    $region51: #{gat_mlp_forward.1} parent=1 // pred_check_branch
      %45 = sbr.rel (0) target = $region53
    $region52: #{gat_mlp_forward.1} parent=1 // pred_region
      _
    $region53: #{gat_mlp_forward.1} parent=1 // pred_fallthru
      _
    // Predicated region
    $region54: #{gat_mlp_forward.1} parent=1 // pred_check
      _
    $region55: #{gat_mlp_forward.1} parent=1 // pred_check_branch
      %47 = sbr.rel (0) target = $region57
    $region56: #{gat_mlp_forward.1} parent=1 // pred_region
      _
    $region57: #{gat_mlp_forward.1} parent=1 // pred_fallthru
      _
    %v48 = vld [vmem:[%s1] sm:$0xff]
    %v49 = vld [vmem:[%s1 + $0x8] sm:$0xff]
    %v50 = vld [vmem:[%s0] sm:$0xff]
    %v51 = vld [vmem:[%s0 + $0x8] sm:$0xff]
    %v52 = vld [vmem:[%s0 + $0x10] sm:$0xff]
    %v53 = vld [vmem:[%s0 + $0x18] sm:$0xff]
    %54 = vxpose.xlu0.b32.start [1/16] %v50, 128
    %55 = vxpose.xlu0.b32.cont [2/16] %v51, 128
    %56 = vxpose.xlu0.b32.cont [3/16] 0.0, 128
    %57 = vxpose.xlu0.b32.cont [4/16] 0.0, 128
    %58 = vxpose.xlu0.b32.cont [5/16] 0.0, 128
    %59 = vxpose.xlu0.b32.cont [6/16] 0.0, 128
    %60 = vxpose.xlu0.b32.cont [7/16] 0.0, 128
    %61 = vxpose.xlu0.b32.cont [8/16] 0.0, 128
    %62 = vxpose.xlu0.b32.cont [9/16] 0.0, 128
    %63 = vxpose.xlu0.b32.cont [10/16] 0.0, 128
    %64 = vxpose.xlu0.b32.cont [11/16] 0.0, 128
    %65 = vxpose.xlu0.b32.cont [12/16] 0.0, 128
    %66 = vxpose.xlu0.b32.cont [13/16] 0.0, 128
    %67 = vxpose.xlu0.b32.cont [14/16] 0.0, 128
    %68 = vxpose.xlu0.b32.cont [15/16] 0.0, 128
    %69 = vxpose.xlu0.b32.end [16/16] 0.0, 128
    %v70 = vpop.trf.xlu0
    %v71 = vpop.trf.xlu0
    %v72 = vpop.trf.xlu0
    %v73 = vpop.trf.xlu0
    %v74 = vpop.trf.xlu0
    %v75 = vpop.trf.xlu0
    %v76 = vpop.trf.xlu0
    %v77 = vpop.trf.xlu0
    %v78 = vpop.trf.xlu0
    %v79 = vpop.trf.xlu0
    %v80 = vpop.trf.xlu0
    %v81 = vpop.trf.xlu0
    %v82 = vpop.trf.xlu0
    %v83 = vpop.trf.xlu0
    %v84 = vpop.trf.xlu0
    %v85 = vpop.trf.xlu0
    %86 = vxpose.xlu0.b32.start [1/16] %v52, 128
    %87 = vxpose.xlu0.b32.cont [2/16] %v53, 128
    %88 = vxpose.xlu0.b32.cont [3/16] 0.0, 128
    %89 = vxpose.xlu0.b32.cont [4/16] 0.0, 128
    %90 = vxpose.xlu0.b32.cont [5/16] 0.0, 128
    %91 = vxpose.xlu0.b32.cont [6/16] 0.0, 128
    %92 = vxpose.xlu0.b32.cont [7/16] 0.0, 128
    %93 = vxpose.xlu0.b32.cont [8/16] 0.0, 128
    %94 = vxpose.xlu0.b32.cont [9/16] 0.0, 128
    %95 = vxpose.xlu0.b32.cont [10/16] 0.0, 128
    %96 = vxpose.xlu0.b32.cont [11/16] 0.0, 128
    %97 = vxpose.xlu0.b32.cont [12/16] 0.0, 128
    %98 = vxpose.xlu0.b32.cont [13/16] 0.0, 128
    %99 = vxpose.xlu0.b32.cont [14/16] 0.0, 128
    %100 = vxpose.xlu0.b32.cont [15/16] 0.0, 128
    %101 = vxpose.xlu0.b32.end [16/16] 0.0, 128
    %v102 = vpop.trf.xlu0
    %v103 = vpop.trf.xlu0
    %v104 = vpop.trf.xlu0
    %v105 = vpop.trf.xlu0
    %v106 = vpop.trf.xlu0
    %v107 = vpop.trf.xlu0
    %v108 = vpop.trf.xlu0
    %v109 = vpop.trf.xlu0
    %v110 = vpop.trf.xlu0
    %v111 = vpop.trf.xlu0
    %v112 = vpop.trf.xlu0
    %v113 = vpop.trf.xlu0
    %v114 = vpop.trf.xlu0
    %v115 = vpop.trf.xlu0
    %v116 = vpop.trf.xlu0
    %v117 = vpop.trf.xlu0
    %v118 = vld [vmem:[%s2] sm:$0xff]
    %v119 = vld [vmem:[%s2 + $0x8] sm:$0xff]
    %v120 = vld [vmem:[%s2 + $0x10] sm:$0xff]
    %v121 = vld [vmem:[%s2 + $0x18] sm:$0xff]
    %v122 = vld [vmem:[%s2 + $0x20] sm:$0xff]
    %v123 = vld [vmem:[%s2 + $0x28] sm:$0xff]
    %v124 = vld [vmem:[%s2 + $0x30] sm:$0xff]
    %v125 = vld [vmem:[%s2 + $0x38] sm:$0xff]
    %v126 = vld [vmem:[%s3] sm:$0xf]
    %v127 = vld [vmem:[%s4] sm:$0xf]
    %v128 = vld [vmem:[%s5] sm:$0x1]
    %vm129 = vcmask 130048
    %v131 = vsel %vm129, %v70, 0
    %v134 = vsel %vm129, %v102, 0
    %136 = vmatprep.subr.mxu0 0.0
    %137 = vmatpush1.msra.mxu0 %v118
    %138 = vmatprep.subr.mxu0 0.0
    %139 = vmatpush1.msra.mxu0 %v119
    %140 = vmatprep.subr.mxu0 0.0
    %141 = vmatpush1.msra.mxu0 0.0
    %142 = vmatprep.subr.mxu0 0.0
    %143 = vmatpush1.msra.mxu0 0.0
    %144 = vmatprep.subr.mxu0 0.0
    %145 = vmatpush1.msra.mxu0 0.0
    %146 = vmatprep.subr.mxu0 0.0
    %147 = vmatpush1.msra.mxu0 0.0
    %148 = vmatprep.subr.mxu0 0.0
    %149 = vmatpush1.msra.mxu0 0.0
    %150 = vmatprep.subr.mxu0 0.0
    %151 = vmatpush1.msra.mxu0 0.0
    %152 = vmatprep.subr.mxu0 0.0
    %153 = vmatpush1.msra.mxu0 0.0
    %154 = vmatprep.subr.mxu0 0.0
    %155 = vmatpush1.msra.mxu0 0.0
    %156 = vmatprep.subr.mxu0 0.0
    %157 = vmatpush1.msra.mxu0 0.0
    %158 = vmatprep.subr.mxu0 0.0
    %159 = vmatpush1.msra.mxu0 0.0
    %160 = vmatprep.subr.mxu0 0.0
    %161 = vmatpush1.msra.mxu0 0.0
    %162 = vmatprep.subr.mxu0 0.0
    %163 = vmatpush1.msra.mxu0 0.0
    %164 = vmatprep.subr.mxu0 0.0
    %165 = vmatpush1.msra.mxu0 0.0
    %166 = vmatprep.subr.mxu0 0.0
    %167 = vmatpush1.msra.mxu0 0.0
    %168 = vmatprep.subr.mxu0 0.0
    %169 = vmatpush1.msra.mxu0 0.0
    %170 = vmatprep.subr.mxu0 0.0
    %171 = vmatpush1.msra.mxu0 0.0
    %172 = vmatprep.subr.mxu0 0.0
    %173 = vmatpush1.msra.mxu0 0.0
    %174 = vmatprep.subr.mxu0 0.0
    %175 = vmatpush1.msra.mxu0 0.0
    %176 = vmatprep.subr.mxu0 0.0
    %177 = vmatpush1.msra.mxu0 0.0
    %178 = vmatprep.subr.mxu0 0.0
    %179 = vmatpush1.msra.mxu0 0.0
    %180 = vmatprep.subr.mxu0 0.0
    %181 = vmatpush1.msra.mxu0 0.0
    %182 = vmatprep.subr.mxu0 0.0
    %183 = vmatpush1.msra.mxu0 0.0
    %184 = vmatprep.subr.mxu0 0.0
    %185 = vmatpush1.msra.mxu0 0.0
    %186 = vmatprep.subr.mxu0 0.0
    %187 = vmatpush1.msra.mxu0 0.0
    %188 = vmatprep.subr.mxu0 0.0
    %189 = vmatpush1.msra.mxu0 0.0
    %190 = vmatprep.subr.mxu0 0.0
    %191 = vmatpush1.msra.mxu0 0.0
    %192 = vmatprep.subr.mxu0 0.0
    %193 = vmatpush1.msra.mxu0 0.0
    %194 = vmatprep.subr.mxu0 0.0
    %195 = vmatpush1.msra.mxu0 0.0
    %196 = vmatprep.subr.mxu0 0.0
    %197 = vmatpush1.msra.mxu0 0.0
    %198 = vmatprep.subr.mxu0 0.0
    %199 = vmatpush1.msra.mxu0 0.0
    %200 = vmatprep.mubr.f32.mxu0 0.0
    %201 = vmatmul.mubr.f32.gmra.mrb[0].mxu0 %v131
    %v202 = vpop.f32.mrb[0].mxu0
    %v203 = vadd.f32 0.0, %v202
    %v204 = vpop.f32.mrb[0].mxu0
    %205 = vmatprep.mubr.f32.mxu0 0.0
    %206 = vmatmul.mubr.f32.gmra.mrb[0].mxu0 %v134
    %v207 = vpop.f32.mrb[0].mxu0
    %v208 = vadd.f32 0.0, %v207
    %v209 = vpop.f32.mrb[0].mxu0
    %210 = vdwg.mxu0
    %211 = vmatprep.subr.mxu0 0.0
    %212 = vmatpush1.msra.mxu0 %v120
    %213 = vmatprep.subr.mxu0 0.0
    %214 = vmatpush1.msra.mxu0 %v121
    %215 = vmatprep.subr.mxu0 0.0
    %216 = vmatpush1.msra.mxu0 0.0
    %217 = vmatprep.subr.mxu0 0.0
    %218 = vmatpush1.msra.mxu0 0.0
    %219 = vmatprep.subr.mxu0 0.0
    %220 = vmatpush1.msra.mxu0 0.0
    %221 = vmatprep.subr.mxu0 0.0
    %222 = vmatpush1.msra.mxu0 0.0
    %223 = vmatprep.subr.mxu0 0.0
    %224 = vmatpush1.msra.mxu0 0.0
    %225 = vmatprep.subr.mxu0 0.0
    %226 = vmatpush1.msra.mxu0 0.0
    %227 = vmatprep.subr.mxu0 0.0
    %228 = vmatpush1.msra.mxu0 0.0
    %229 = vmatprep.subr.mxu0 0.0
    %230 = vmatpush1.msra.mxu0 0.0
    %231 = vmatprep.subr.mxu0 0.0
    %232 = vmatpush1.msra.mxu0 0.0
    %233 = vmatprep.subr.mxu0 0.0
    %234 = vmatpush1.msra.mxu0 0.0
    %235 = vmatprep.subr.mxu0 0.0
    %236 = vmatpush1.msra.mxu0 0.0
    %237 = vmatprep.subr.mxu0 0.0
    %238 = vmatpush1.msra.mxu0 0.0
    %239 = vmatprep.subr.mxu0 0.0
    %240 = vmatpush1.msra.mxu0 0.0
    %241 = vmatprep.subr.mxu0 0.0
    %242 = vmatpush1.msra.mxu0 0.0
    %243 = vmatprep.subr.mxu0 0.0
    %244 = vmatpush1.msra.mxu0 0.0
    %245 = vmatprep.subr.mxu0 0.0
    %246 = vmatpush1.msra.mxu0 0.0
    %247 = vmatprep.subr.mxu0 0.0
    %248 = vmatpush1.msra.mxu0 0.0
    %249 = vmatprep.subr.mxu0 0.0
    %250 = vmatpush1.msra.mxu0 0.0
    %251 = vmatprep.subr.mxu0 0.0
    %252 = vmatpush1.msra.mxu0 0.0
    %253 = vmatprep.subr.mxu0 0.0
    %254 = vmatpush1.msra.mxu0 0.0
    %255 = vmatprep.subr.mxu0 0.0
    %256 = vmatpush1.msra.mxu0 0.0
    %257 = vmatprep.subr.mxu0 0.0
    %258 = vmatpush1.msra.mxu0 0.0
    %259 = vmatprep.subr.mxu0 0.0
    %260 = vmatpush1.msra.mxu0 0.0
    %261 = vmatprep.subr.mxu0 0.0
    %262 = vmatpush1.msra.mxu0 0.0
    %263 = vmatprep.subr.mxu0 0.0
    %264 = vmatpush1.msra.mxu0 0.0
    %265 = vmatprep.subr.mxu0 0.0
    %266 = vmatpush1.msra.mxu0 0.0
    %267 = vmatprep.subr.mxu0 0.0
    %268 = vmatpush1.msra.mxu0 0.0
    %269 = vmatprep.subr.mxu0 0.0
    %270 = vmatpush1.msra.mxu0 0.0
    %271 = vmatprep.subr.mxu0 0.0
    %272 = vmatpush1.msra.mxu0 0.0
    %273 = vmatprep.subr.mxu0 0.0
    %274 = vmatpush1.msra.mxu0 0.0
    %275 = vmatprep.mubr.f32.mxu0 0.0
    %276 = vmatmul.mubr.f32.gmra.mrb[0].mxu0 %v131
    %v277 = vpop.f32.mrb[0].mxu0
    %v278 = vadd.f32 0.0, %v277
    %v279 = vpop.f32.mrb[0].mxu0
    %280 = vmatprep.mubr.f32.mxu0 0.0
    %281 = vmatmul.mubr.f32.gmra.mrb[0].mxu0 %v134
    %v282 = vpop.f32.mrb[0].mxu0
    %v283 = vadd.f32 0.0, %v282
    %v284 = vpop.f32.mrb[0].mxu0
    %285 = vdwg.mxu0
    %286 = vmatprep.subr.mxu0 0.0
    %287 = vmatpush1.msra.mxu0 %v122
    %288 = vmatprep.subr.mxu0 0.0
    %289 = vmatpush1.msra.mxu0 %v123
    %290 = vmatprep.subr.mxu0 0.0
    %291 = vmatpush1.msra.mxu0 0.0
    %292 = vmatprep.subr.mxu0 0.0
    %293 = vmatpush1.msra.mxu0 0.0
    %294 = vmatprep.subr.mxu0 0.0
    %295 = vmatpush1.msra.mxu0 0.0
    %296 = vmatprep.subr.mxu0 0.0
    %297 = vmatpush1.msra.mxu0 0.0
    %298 = vmatprep.subr.mxu0 0.0
    %299 = vmatpush1.msra.mxu0 0.0
    %300 = vmatprep.subr.mxu0 0.0
    %301 = vmatpush1.msra.mxu0 0.0
    %302 = vmatprep.subr.mxu0 0.0
    %303 = vmatpush1.msra.mxu0 0.0
    %304 = vmatprep.subr.mxu0 0.0
    %305 = vmatpush1.msra.mxu0 0.0
    %306 = vmatprep.subr.mxu0 0.0
    %307 = vmatpush1.msra.mxu0 0.0
    %308 = vmatprep.subr.mxu0 0.0
    %309 = vmatpush1.msra.mxu0 0.0
    %310 = vmatprep.subr.mxu0 0.0
    %311 = vmatpush1.msra.mxu0 0.0
    %312 = vmatprep.subr.mxu0 0.0
    %313 = vmatpush1.msra.mxu0 0.0
    %314 = vmatprep.subr.mxu0 0.0
    %315 = vmatpush1.msra.mxu0 0.0
    %316 = vmatprep.subr.mxu0 0.0
    %317 = vmatpush1.msra.mxu0 0.0
    %318 = vmatprep.subr.mxu0 0.0
    %319 = vmatpush1.msra.mxu0 0.0
    %320 = vmatprep.subr.mxu0 0.0
    %321 = vmatpush1.msra.mxu0 0.0
    %322 = vmatprep.subr.mxu0 0.0
    %323 = vmatpush1.msra.mxu0 0.0
    %324 = vmatprep.subr.mxu0 0.0
    %325 = vmatpush1.msra.mxu0 0.0
    %326 = vmatprep.subr.mxu0 0.0
    %327 = vmatpush1.msra.mxu0 0.0
    %328 = vmatprep.subr.mxu0 0.0
    %329 = vmatpush1.msra.mxu0 0.0
    %330 = vmatprep.subr.mxu0 0.0
    %331 = vmatpush1.msra.mxu0 0.0
    %332 = vmatprep.subr.mxu0 0.0
    %333 = vmatpush1.msra.mxu0 0.0
    %334 = vmatprep.subr.mxu0 0.0
    %335 = vmatpush1.msra.mxu0 0.0
    %336 = vmatprep.subr.mxu0 0.0
    %337 = vmatpush1.msra.mxu0 0.0
    %338 = vmatprep.subr.mxu0 0.0
    %339 = vmatpush1.msra.mxu0 0.0
    %340 = vmatprep.subr.mxu0 0.0
    %341 = vmatpush1.msra.mxu0 0.0
    %342 = vmatprep.subr.mxu0 0.0
    %343 = vmatpush1.msra.mxu0 0.0
    %344 = vmatprep.subr.mxu0 0.0
    %345 = vmatpush1.msra.mxu0 0.0
    %346 = vmatprep.subr.mxu0 0.0
    %347 = vmatpush1.msra.mxu0 0.0
    %348 = vmatprep.subr.mxu0 0.0
    %349 = vmatpush1.msra.mxu0 0.0
    %350 = vmatprep.mubr.f32.mxu0 0.0
    %351 = vmatmul.mubr.f32.gmra.mrb[0].mxu0 %v131
    %v352 = vpop.f32.mrb[0].mxu0
    %v353 = vadd.f32 0.0, %v352
    %v354 = vpop.f32.mrb[0].mxu0
    %355 = vmatprep.mubr.f32.mxu0 0.0
    %356 = vmatmul.mubr.f32.gmra.mrb[0].mxu0 %v134
    %v357 = vpop.f32.mrb[0].mxu0
    %v358 = vadd.f32 0.0, %v357
    %v359 = vpop.f32.mrb[0].mxu0
    %360 = vdwg.mxu0
    %361 = vmatprep.subr.mxu0 0.0
    %362 = vmatpush1.msra.mxu0 %v124
    %363 = vmatprep.subr.mxu0 0.0
    %364 = vmatpush1.msra.mxu0 %v125
    %365 = vmatprep.subr.mxu0 0.0
    %366 = vmatpush1.msra.mxu0 0.0
    %367 = vmatprep.subr.mxu0 0.0
    %368 = vmatpush1.msra.mxu0 0.0
    %369 = vmatprep.subr.mxu0 0.0
    %370 = vmatpush1.msra.mxu0 0.0
    %371 = vmatprep.subr.mxu0 0.0
    %372 = vmatpush1.msra.mxu0 0.0
    %373 = vmatprep.subr.mxu0 0.0
    %374 = vmatpush1.msra.mxu0 0.0
    %375 = vmatprep.subr.mxu0 0.0
    %376 = vmatpush1.msra.mxu0 0.0
    %377 = vmatprep.subr.mxu0 0.0
    %378 = vmatpush1.msra.mxu0 0.0
    %379 = vmatprep.subr.mxu0 0.0
    %380 = vmatpush1.msra.mxu0 0.0
    %381 = vmatprep.subr.mxu0 0.0
    %382 = vmatpush1.msra.mxu0 0.0
    %383 = vmatprep.subr.mxu0 0.0
    %384 = vmatpush1.msra.mxu0 0.0
    %385 = vmatprep.subr.mxu0 0.0
    %386 = vmatpush1.msra.mxu0 0.0
    %387 = vmatprep.subr.mxu0 0.0
    %388 = vmatpush1.msra.mxu0 0.0
    %389 = vmatprep.subr.mxu0 0.0
    %390 = vmatpush1.msra.mxu0 0.0
    %391 = vmatprep.subr.mxu0 0.0
    %392 = vmatpush1.msra.mxu0 0.0
    %393 = vmatprep.subr.mxu0 0.0
    %394 = vmatpush1.msra.mxu0 0.0
    %395 = vmatprep.subr.mxu0 0.0
    %396 = vmatpush1.msra.mxu0 0.0
    %397 = vmatprep.subr.mxu0 0.0
    %398 = vmatpush1.msra.mxu0 0.0
    %399 = vmatprep.subr.mxu0 0.0
    %400 = vmatpush1.msra.mxu0 0.0
    %401 = vmatprep.subr.mxu0 0.0
    %402 = vmatpush1.msra.mxu0 0.0
    %403 = vmatprep.subr.mxu0 0.0
    %404 = vmatpush1.msra.mxu0 0.0
    %405 = vmatprep.subr.mxu0 0.0
    %406 = vmatpush1.msra.mxu0 0.0
    %407 = vmatprep.subr.mxu0 0.0
    %408 = vmatpush1.msra.mxu0 0.0
    %409 = vmatprep.subr.mxu0 0.0
    %410 = vmatpush1.msra.mxu0 0.0
    %411 = vmatprep.subr.mxu0 0.0
    %412 = vmatpush1.msra.mxu0 0.0
    %413 = vmatprep.subr.mxu0 0.0
    %414 = vmatpush1.msra.mxu0 0.0
    %415 = vmatprep.subr.mxu0 0.0
    %416 = vmatpush1.msra.mxu0 0.0
    %417 = vmatprep.subr.mxu0 0.0
    %418 = vmatpush1.msra.mxu0 0.0
    %419 = vmatprep.subr.mxu0 0.0
    %420 = vmatpush1.msra.mxu0 0.0
    %421 = vmatprep.subr.mxu0 0.0
    %422 = vmatpush1.msra.mxu0 0.0
    %423 = vmatprep.subr.mxu0 0.0
    %424 = vmatpush1.msra.mxu0 0.0
    %425 = vmatprep.mubr.f32.mxu0 0.0
    %426 = vmatmul.mubr.f32.gmra.mrb[0].mxu0 %v131
    %v427 = vpop.f32.mrb[0].mxu0
    %v428 = vadd.f32 0.0, %v427
    %v429 = vpop.f32.mrb[0].mxu0
    %430 = vmatprep.mubr.f32.mxu0 0.0
    %431 = vmatmul.mubr.f32.gmra.mrb[0].mxu0 %v134
    %v432 = vpop.f32.mrb[0].mxu0
    %v433 = vadd.f32 0.0, %v432
    %v434 = vpop.f32.mrb[0].mxu0
    %435 = vdwg.mxu0
    %v438 = vunpack.c.l.s4 1966171168
    %v439 = vunpack.c.0.s8 %v438
    %v440 = vlaneseq
    %v441 = vshrl.u32 %v440, 7
    %v442 = vsub.s32 %v439, %v441
    %v443 = vrot.slane %v127, %v442
    %v444 = vcombine.high %v443, %v443
    %v446 = vunpack.c.l.s4 1966171168
    %v447 = vunpack.c.0.s8 %v446
    %v448 = vlaneseq
    %v449 = vshrl.u32 %v448, 7
    %v450 = vsub.s32 %v447, %v449
    %v451 = vrot.slane %v443, %v450
    %v453 = vunpack.c.l.s4 1966171168
    %v454 = vunpack.c.0.s8 %v453
    %v455 = vlaneseq
    %v456 = vshrl.u32 %v455, 7
    %v457 = vsub.s32 %v454, %v456
    %v458 = vrot.slane %v444, %v457
    %v459 = vcombine.high %v451, %v451
    %v460 = vcombine.high %v458, %v458
    %v461 = vlaneseq
    %v462 = vshrl.u32 %v461, 7
    %v463 = vsub.s32 0, %v462
    %v464 = vrot.slane %v451, %v463
    %v466 = vmul.f32 %v203, %v464
    %v467 = vmul.f32 %v208, %v464
    %vm468 = vcmask 523264
    %v469 = vsel %vm468, %v466, 0.0
    %470 = vadd.xlane.f32.xlu0 %v469
    %v471 = vpop.xlane.xlu0 %470
    %v472 = vsel %vm468, %v467, 0.0
    %473 = vadd.xlane.f32.xlu0 %v472
    %v474 = vpop.xlane.xlu0 %473
    %v475 = vlaneseq
    %v476 = vshrl.u32 %v475, 7
    %v477 = vsub.s32 0, %v476
    %v478 = vrot.slane %v458, %v477
    %v480 = vmul.f32 %v278, %v478
    %v481 = vmul.f32 %v283, %v478
    %v482 = vsel %vm468, %v480, 0.0
    %483 = vadd.xlane.f32.xlu0 %v482
    %v484 = vpop.xlane.xlu0 %483
    %v485 = vsel %vm468, %v481, 0.0
    %486 = vadd.xlane.f32.xlu0 %v485
    %v487 = vpop.xlane.xlu0 %486
    %v488 = vlaneseq
    %v489 = vshrl.u32 %v488, 7
    %v490 = vsub.s32 0, %v489
    %v491 = vrot.slane %v459, %v490
    %v493 = vmul.f32 %v353, %v491
    %v494 = vmul.f32 %v358, %v491
    %v495 = vsel %vm468, %v493, 0.0
    %496 = vadd.xlane.f32.xlu0 %v495
    %v497 = vpop.xlane.xlu0 %496
    %v498 = vsel %vm468, %v494, 0.0
    %499 = vadd.xlane.f32.xlu0 %v498
    %v500 = vpop.xlane.xlu0 %499
    %v501 = vlaneseq
    %v502 = vshrl.u32 %v501, 7
    %v503 = vsub.s32 0, %v502
    %v504 = vrot.slane %v460, %v503
    %v506 = vmul.f32 %v428, %v504
    %v507 = vmul.f32 %v433, %v504
    %v508 = vsel %vm468, %v506, 0.0
    %509 = vadd.xlane.f32.xlu0 %v508
    %v510 = vpop.xlane.xlu0 %509
    %v511 = vsel %vm468, %v507, 0.0
    %512 = vadd.xlane.f32.xlu0 %v511
    %v513 = vpop.xlane.xlu0 %512
    %v516 = vunpack.c.l.s4 1966171168
    %v517 = vunpack.c.0.s8 %v516
    %v518 = vlaneseq
    %v519 = vshrl.u32 %v518, 7
    %v520 = vsub.s32 %v517, %v519
    %v521 = vrot.slane %v126, %v520
    %v522 = vcombine.high %v521, %v521
    %v524 = vunpack.c.l.s4 1966171168
    %v525 = vunpack.c.0.s8 %v524
    %v526 = vlaneseq
    %v527 = vshrl.u32 %v526, 7
    %v528 = vsub.s32 %v525, %v527
    %v529 = vrot.slane %v521, %v528
    %v531 = vunpack.c.l.s4 1966171168
    %v532 = vunpack.c.0.s8 %v531
    %v533 = vlaneseq
    %v534 = vshrl.u32 %v533, 7
    %v535 = vsub.s32 %v532, %v534
    %v536 = vrot.slane %v522, %v535
    %v537 = vcombine.high %v529, %v529
    %v538 = vcombine.high %v536, %v536
    %v539 = vsel %vm468, %v529, 0
    %v542 = vsel %vm468, %v203, 0
    %v545 = vsel %vm468, %v208, 0
    %547 = vmatprep.subr.mxu0 0.0
    %548 = vmatpush1.xpose.msra.mxu0 %v542
    %549 = vmatprep.subr.mxu0 0.0
    %550 = vmatpush1.xpose.msra.mxu0 %v545
    %551 = vmatprep.subr.mxu0 0.0
    %552 = vmatpush1.xpose.msra.mxu0 0.0
    %553 = vmatprep.subr.mxu0 0.0
    %554 = vmatpush1.xpose.msra.mxu0 0.0
    %555 = vmatprep.subr.mxu0 0.0
    %556 = vmatpush1.xpose.msra.mxu0 0.0
    %557 = vmatprep.subr.mxu0 0.0
    %558 = vmatpush1.xpose.msra.mxu0 0.0
    %559 = vmatprep.subr.mxu0 0.0
    %560 = vmatpush1.xpose.msra.mxu0 0.0
    %561 = vmatprep.subr.mxu0 0.0
    %562 = vmatpush1.xpose.msra.mxu0 0.0
    %563 = vmatprep.subr.mxu0 0.0
    %564 = vmatpush1.xpose.msra.mxu0 0.0
    %565 = vmatprep.subr.mxu0 0.0
    %566 = vmatpush1.xpose.msra.mxu0 0.0
    %567 = vmatprep.subr.mxu0 0.0
    %568 = vmatpush1.xpose.msra.mxu0 0.0
    %569 = vmatprep.subr.mxu0 0.0
    %570 = vmatpush1.xpose.msra.mxu0 0.0
    %571 = vmatprep.subr.mxu0 0.0
    %572 = vmatpush1.xpose.msra.mxu0 0.0
    %573 = vmatprep.subr.mxu0 0.0
    %574 = vmatpush1.xpose.msra.mxu0 0.0
    %575 = vmatprep.subr.mxu0 0.0
    %576 = vmatpush1.xpose.msra.mxu0 0.0
    %577 = vmatprep.subr.mxu0 0.0
    %578 = vmatpush1.xpose.msra.mxu0 0.0
    %579 = vmatprep.subr.mxu0 0.0
    %580 = vmatpush1.xpose.msra.mxu0 0.0
    %581 = vmatprep.subr.mxu0 0.0
    %582 = vmatpush1.xpose.msra.mxu0 0.0
    %583 = vmatprep.subr.mxu0 0.0
    %584 = vmatpush1.xpose.msra.mxu0 0.0
    %585 = vmatprep.subr.mxu0 0.0
    %586 = vmatpush1.xpose.msra.mxu0 0.0
    %587 = vmatprep.subr.mxu0 0.0
    %588 = vmatpush1.xpose.msra.mxu0 0.0
    %589 = vmatprep.subr.mxu0 0.0
    %590 = vmatpush1.xpose.msra.mxu0 0.0
    %591 = vmatprep.subr.mxu0 0.0
    %592 = vmatpush1.xpose.msra.mxu0 0.0
    %593 = vmatprep.subr.mxu0 0.0
    %594 = vmatpush1.xpose.msra.mxu0 0.0
    %595 = vmatprep.subr.mxu0 0.0
    %596 = vmatpush1.xpose.msra.mxu0 0.0
    %597 = vmatprep.subr.mxu0 0.0
    %598 = vmatpush1.xpose.msra.mxu0 0.0
    %599 = vmatprep.subr.mxu0 0.0
    %600 = vmatpush1.xpose.msra.mxu0 0.0
    %601 = vmatprep.subr.mxu0 0.0
    %602 = vmatpush1.xpose.msra.mxu0 0.0
    %603 = vmatprep.subr.mxu0 0.0
    %604 = vmatpush1.xpose.msra.mxu0 0.0
    %605 = vmatprep.subr.mxu0 0.0
    %606 = vmatpush1.xpose.msra.mxu0 0.0
    %607 = vmatprep.subr.mxu0 0.0
    %608 = vmatpush1.xpose.msra.mxu0 0.0
    %609 = vmatprep.subr.mxu0 0.0
    %610 = vmatpush1.xpose.msra.mxu0 0.0
    %611 = vmatprep.mubr.f32.mxu0 0.0
    %612 = vmatmul.mubr.f32.gmra.mrb[0].mxu0 %v539
    %v613 = vpop.f32.mrb[0].mxu0
    %v614 = vadd.f32 0.0, %v613
    %v615 = vpop.f32.mrb[0].mxu0
    %616 = vdwg.mxu0
    %v617 = vsel %vm468, %v536, 0
    %v620 = vsel %vm468, %v278, 0
    %v623 = vsel %vm468, %v283, 0
    %625 = vmatprep.subr.mxu0 0.0
    %626 = vmatpush1.xpose.msra.mxu0 %v620
    %627 = vmatprep.subr.mxu0 0.0
    %628 = vmatpush1.xpose.msra.mxu0 %v623
    %629 = vmatprep.subr.mxu0 0.0
    %630 = vmatpush1.xpose.msra.mxu0 0.0
    %631 = vmatprep.subr.mxu0 0.0
    %632 = vmatpush1.xpose.msra.mxu0 0.0
    %633 = vmatprep.subr.mxu0 0.0
    %634 = vmatpush1.xpose.msra.mxu0 0.0
    %635 = vmatprep.subr.mxu0 0.0
    %636 = vmatpush1.xpose.msra.mxu0 0.0
    %637 = vmatprep.subr.mxu0 0.0
    %638 = vmatpush1.xpose.msra.mxu0 0.0
    %639 = vmatprep.subr.mxu0 0.0
    %640 = vmatpush1.xpose.msra.mxu0 0.0
    %641 = vmatprep.subr.mxu0 0.0
    %642 = vmatpush1.xpose.msra.mxu0 0.0
    %643 = vmatprep.subr.mxu0 0.0
    %644 = vmatpush1.xpose.msra.mxu0 0.0
    %645 = vmatprep.subr.mxu0 0.0
    %646 = vmatpush1.xpose.msra.mxu0 0.0
    %647 = vmatprep.subr.mxu0 0.0
    %648 = vmatpush1.xpose.msra.mxu0 0.0
    %649 = vmatprep.subr.mxu0 0.0
    %650 = vmatpush1.xpose.msra.mxu0 0.0
    %651 = vmatprep.subr.mxu0 0.0
    %652 = vmatpush1.xpose.msra.mxu0 0.0
    %653 = vmatprep.subr.mxu0 0.0
    %654 = vmatpush1.xpose.msra.mxu0 0.0
    %655 = vmatprep.subr.mxu0 0.0
    %656 = vmatpush1.xpose.msra.mxu0 0.0
    %657 = vmatprep.subr.mxu0 0.0
    %658 = vmatpush1.xpose.msra.mxu0 0.0
    %659 = vmatprep.subr.mxu0 0.0
    %660 = vmatpush1.xpose.msra.mxu0 0.0
    %661 = vmatprep.subr.mxu0 0.0
    %662 = vmatpush1.xpose.msra.mxu0 0.0
    %663 = vmatprep.subr.mxu0 0.0
    %664 = vmatpush1.xpose.msra.mxu0 0.0
    %665 = vmatprep.subr.mxu0 0.0
    %666 = vmatpush1.xpose.msra.mxu0 0.0
    %667 = vmatprep.subr.mxu0 0.0
    %668 = vmatpush1.xpose.msra.mxu0 0.0
    %669 = vmatprep.subr.mxu0 0.0
    %670 = vmatpush1.xpose.msra.mxu0 0.0
    %671 = vmatprep.subr.mxu0 0.0
    %672 = vmatpush1.xpose.msra.mxu0 0.0
    %673 = vmatprep.subr.mxu0 0.0
    %674 = vmatpush1.xpose.msra.mxu0 0.0
    %675 = vmatprep.subr.mxu0 0.0
    %676 = vmatpush1.xpose.msra.mxu0 0.0
    %677 = vmatprep.subr.mxu0 0.0
    %678 = vmatpush1.xpose.msra.mxu0 0.0
    %679 = vmatprep.subr.mxu0 0.0
    %680 = vmatpush1.xpose.msra.mxu0 0.0
    %681 = vmatprep.subr.mxu0 0.0
    %682 = vmatpush1.xpose.msra.mxu0 0.0
    %683 = vmatprep.subr.mxu0 0.0
    %684 = vmatpush1.xpose.msra.mxu0 0.0
    %685 = vmatprep.subr.mxu0 0.0
    %686 = vmatpush1.xpose.msra.mxu0 0.0
    %687 = vmatprep.subr.mxu0 0.0
    %688 = vmatpush1.xpose.msra.mxu0 0.0
    %689 = vmatprep.mubr.f32.mxu0 0.0
    %690 = vmatmul.mubr.f32.gmra.mrb[0].mxu0 %v617
    %v691 = vpop.f32.mrb[0].mxu0
    %v692 = vadd.f32 0.0, %v691
    %v693 = vpop.f32.mrb[0].mxu0
    %694 = vdwg.mxu0
    %v695 = vsel %vm468, %v537, 0
    %v698 = vsel %vm468, %v353, 0
    %v701 = vsel %vm468, %v358, 0
    %703 = vmatprep.subr.mxu0 0.0
    %704 = vmatpush1.xpose.msra.mxu0 %v698
    %705 = vmatprep.subr.mxu0 0.0
    %706 = vmatpush1.xpose.msra.mxu0 %v701
    %707 = vmatprep.subr.mxu0 0.0
    %708 = vmatpush1.xpose.msra.mxu0 0.0
    %709 = vmatprep.subr.mxu0 0.0
    %710 = vmatpush1.xpose.msra.mxu0 0.0
    %711 = vmatprep.subr.mxu0 0.0
    %712 = vmatpush1.xpose.msra.mxu0 0.0
    %713 = vmatprep.subr.mxu0 0.0
    %714 = vmatpush1.xpose.msra.mxu0 0.0
    %715 = vmatprep.subr.mxu0 0.0
    %716 = vmatpush1.xpose.msra.mxu0 0.0
    %717 = vmatprep.subr.mxu0 0.0
    %718 = vmatpush1.xpose.msra.mxu0 0.0
    %719 = vmatprep.subr.mxu0 0.0
    %720 = vmatpush1.xpose.msra.mxu0 0.0
    %721 = vmatprep.subr.mxu0 0.0
    %722 = vmatpush1.xpose.msra.mxu0 0.0
    %723 = vmatprep.subr.mxu0 0.0
    %724 = vmatpush1.xpose.msra.mxu0 0.0
    %725 = vmatprep.subr.mxu0 0.0
    %726 = vmatpush1.xpose.msra.mxu0 0.0
    %727 = vmatprep.subr.mxu0 0.0
    %728 = vmatpush1.xpose.msra.mxu0 0.0
    %729 = vmatprep.subr.mxu0 0.0
    %730 = vmatpush1.xpose.msra.mxu0 0.0
    %731 = vmatprep.subr.mxu0 0.0
    %732 = vmatpush1.xpose.msra.mxu0 0.0
    %733 = vmatprep.subr.mxu0 0.0
    %734 = vmatpush1.xpose.msra.mxu0 0.0
    %735 = vmatprep.subr.mxu0 0.0
    %736 = vmatpush1.xpose.msra.mxu0 0.0
    %737 = vmatprep.subr.mxu0 0.0
    %738 = vmatpush1.xpose.msra.mxu0 0.0
    %739 = vmatprep.subr.mxu0 0.0
    %740 = vmatpush1.xpose.msra.mxu0 0.0
    %741 = vmatprep.subr.mxu0 0.0
    %742 = vmatpush1.xpose.msra.mxu0 0.0
    %743 = vmatprep.subr.mxu0 0.0
    %744 = vmatpush1.xpose.msra.mxu0 0.0
    %745 = vmatprep.subr.mxu0 0.0
    %746 = vmatpush1.xpose.msra.mxu0 0.0
    %747 = vmatprep.subr.mxu0 0.0
    %748 = vmatpush1.xpose.msra.mxu0 0.0
    %749 = vmatprep.subr.mxu0 0.0
    %750 = vmatpush1.xpose.msra.mxu0 0.0
    %751 = vmatprep.subr.mxu0 0.0
    %752 = vmatpush1.xpose.msra.mxu0 0.0
    %753 = vmatprep.subr.mxu0 0.0
    %754 = vmatpush1.xpose.msra.mxu0 0.0
    %755 = vmatprep.subr.mxu0 0.0
    %756 = vmatpush1.xpose.msra.mxu0 0.0
    %757 = vmatprep.subr.mxu0 0.0
    %758 = vmatpush1.xpose.msra.mxu0 0.0
    %759 = vmatprep.subr.mxu0 0.0
    %760 = vmatpush1.xpose.msra.mxu0 0.0
    %761 = vmatprep.subr.mxu0 0.0
    %762 = vmatpush1.xpose.msra.mxu0 0.0
    %763 = vmatprep.subr.mxu0 0.0
    %764 = vmatpush1.xpose.msra.mxu0 0.0
    %765 = vmatprep.subr.mxu0 0.0
    %766 = vmatpush1.xpose.msra.mxu0 0.0
    %767 = vmatprep.mubr.f32.mxu0 0.0
    %768 = vmatmul.mubr.f32.gmra.mrb[0].mxu0 %v695
    %v769 = vpop.f32.mrb[0].mxu0
    %v770 = vadd.f32 0.0, %v769
    %v771 = vpop.f32.mrb[0].mxu0
    %772 = vdwg.mxu0
    %v773 = vsel %vm468, %v538, 0
    %v776 = vsel %vm468, %v428, 0
    %v779 = vsel %vm468, %v433, 0
    %781 = vmatprep.subr.mxu0 0.0
    %782 = vmatpush1.xpose.msra.mxu0 %v776
    %783 = vmatprep.subr.mxu0 0.0
    %784 = vmatpush1.xpose.msra.mxu0 %v779
    %785 = vmatprep.subr.mxu0 0.0
    %786 = vmatpush1.xpose.msra.mxu0 0.0
    %787 = vmatprep.subr.mxu0 0.0
    %788 = vmatpush1.xpose.msra.mxu0 0.0
    %789 = vmatprep.subr.mxu0 0.0
    %790 = vmatpush1.xpose.msra.mxu0 0.0
    %791 = vmatprep.subr.mxu0 0.0
    %792 = vmatpush1.xpose.msra.mxu0 0.0
    %793 = vmatprep.subr.mxu0 0.0
    %794 = vmatpush1.xpose.msra.mxu0 0.0
    %795 = vmatprep.subr.mxu0 0.0
    %796 = vmatpush1.xpose.msra.mxu0 0.0
    %797 = vmatprep.subr.mxu0 0.0
    %798 = vmatpush1.xpose.msra.mxu0 0.0
    %799 = vmatprep.subr.mxu0 0.0
    %800 = vmatpush1.xpose.msra.mxu0 0.0
    %801 = vmatprep.subr.mxu0 0.0
    %802 = vmatpush1.xpose.msra.mxu0 0.0
    %803 = vmatprep.subr.mxu0 0.0
    %804 = vmatpush1.xpose.msra.mxu0 0.0
    %805 = vmatprep.subr.mxu0 0.0
    %806 = vmatpush1.xpose.msra.mxu0 0.0
    %807 = vmatprep.subr.mxu0 0.0
    %808 = vmatpush1.xpose.msra.mxu0 0.0
    %809 = vmatprep.subr.mxu0 0.0
    %810 = vmatpush1.xpose.msra.mxu0 0.0
    %811 = vmatprep.subr.mxu0 0.0
    %812 = vmatpush1.xpose.msra.mxu0 0.0
    %813 = vmatprep.subr.mxu0 0.0
    %814 = vmatpush1.xpose.msra.mxu0 0.0
    %815 = vmatprep.subr.mxu0 0.0
    %816 = vmatpush1.xpose.msra.mxu0 0.0
    %817 = vmatprep.subr.mxu0 0.0
    %818 = vmatpush1.xpose.msra.mxu0 0.0
    %819 = vmatprep.subr.mxu0 0.0
    %820 = vmatpush1.xpose.msra.mxu0 0.0
    %821 = vmatprep.subr.mxu0 0.0
    %822 = vmatpush1.xpose.msra.mxu0 0.0
    %823 = vmatprep.subr.mxu0 0.0
    %824 = vmatpush1.xpose.msra.mxu0 0.0
    %825 = vmatprep.subr.mxu0 0.0
    %826 = vmatpush1.xpose.msra.mxu0 0.0
    %827 = vmatprep.subr.mxu0 0.0
    %828 = vmatpush1.xpose.msra.mxu0 0.0
    %829 = vmatprep.subr.mxu0 0.0
    %830 = vmatpush1.xpose.msra.mxu0 0.0
    %831 = vmatprep.subr.mxu0 0.0
    %832 = vmatpush1.xpose.msra.mxu0 0.0
    %833 = vmatprep.subr.mxu0 0.0
    %834 = vmatpush1.xpose.msra.mxu0 0.0
    %835 = vmatprep.subr.mxu0 0.0
    %836 = vmatpush1.xpose.msra.mxu0 0.0
    %837 = vmatprep.subr.mxu0 0.0
    %838 = vmatpush1.xpose.msra.mxu0 0.0
    %839 = vmatprep.subr.mxu0 0.0
    %840 = vmatpush1.xpose.msra.mxu0 0.0
    %841 = vmatprep.subr.mxu0 0.0
    %842 = vmatpush1.xpose.msra.mxu0 0.0
    %843 = vmatprep.subr.mxu0 0.0
    %844 = vmatpush1.xpose.msra.mxu0 0.0
    %845 = vmatprep.mubr.f32.mxu0 0.0
    %846 = vmatmul.mubr.f32.gmra.mrb[0].mxu0 %v773
    %v847 = vpop.f32.mrb[0].mxu0
    %v848 = vadd.f32 0.0, %v847
    %v849 = vpop.f32.mrb[0].mxu0
    %850 = vdwg.mxu0
    %852 = vset.pattern.permute.xlu0 0
    %853 = vperm.xlu0 %852, %v471
    %v854 = vpop.permute.xlu0 %853
    %857 = vset.pattern.permute.xlu0 0
    %858 = vperm.xlu0 %857, %v474
    %v859 = vpop.permute.xlu0 %858
    %862 = vset.pattern.permute.xlu0 0
    %863 = vperm.xlu0 %862, %v484
    %v864 = vpop.permute.xlu0 %863
    %867 = vset.pattern.permute.xlu0 0
    %868 = vperm.xlu0 %867, %v487
    %v869 = vpop.permute.xlu0 %868
    %872 = vset.pattern.permute.xlu0 0
    %873 = vperm.xlu0 %872, %v497
    %v874 = vpop.permute.xlu0 %873
    %877 = vset.pattern.permute.xlu0 0
    %878 = vperm.xlu0 %877, %v500
    %v879 = vpop.permute.xlu0 %878
    %882 = vset.pattern.permute.xlu0 0
    %883 = vperm.xlu0 %882, %v510
    %v884 = vpop.permute.xlu0 %883
    %887 = vset.pattern.permute.xlu0 0
    %888 = vperm.xlu0 %887, %v513
    %v889 = vpop.permute.xlu0 %888
    %v891 = vlaneseq
    %v892 = vshrl.u32 %v891, 7
    %v893 = vsub.s32 0, %v892
    %v894 = vrot.slane %v614, %v893
    %v895 = vlaneseq
    %v896 = vshrl.u32 %v895, 7
    %v897 = vsub.s32 0, %v896
    %v898 = vrot.slane %v692, %v897
    %v899 = vlaneseq
    %v900 = vshrl.u32 %v899, 7
    %v901 = vsub.s32 0, %v900
    %v902 = vrot.slane %v770, %v901
    %v903 = vlaneseq
    %v904 = vshrl.u32 %v903, 7
    %v905 = vsub.s32 0, %v904
    %v906 = vrot.slane %v848, %v905
    %v907 = vadd.f32 %v854, %v894
    %v908 = vadd.f32 %v859, %v894
    %v909 = vadd.f32 %v864, %v898
    %v910 = vadd.f32 %v869, %v898
    %v911 = vadd.f32 %v874, %v902
    %v912 = vadd.f32 %v879, %v902
    %v913 = vadd.f32 %v884, %v906
    %v914 = vadd.f32 %v889, %v906
    %vm915 = vcmp.gt.f32.partialorder %v907, 0.0
    %vm916 = vcmp.gt.f32.partialorder %v908, 0.0
    %vm917 = vcmp.gt.f32.partialorder %v909, 0.0
    %vm918 = vcmp.gt.f32.partialorder %v910, 0.0
    %vm919 = vcmp.gt.f32.partialorder %v911, 0.0
    %vm920 = vcmp.gt.f32.partialorder %v912, 0.0
    %vm921 = vcmp.gt.f32.partialorder %v913, 0.0
    %vm922 = vcmp.gt.f32.partialorder %v914, 0.0
    %v923 = vmul.f32 %v907, 0.2
    %v924 = vmul.f32 %v908, 0.2
    %v925 = vmul.f32 %v909, 0.2
    %v926 = vmul.f32 %v910, 0.2
    %v927 = vmul.f32 %v911, 0.2
    %v928 = vmul.f32 %v912, 0.2
    %v929 = vmul.f32 %v913, 0.2
    %v930 = vmul.f32 %v914, 0.2
    %v931 = vsel %vm915, %v907, %v923
    %v932 = vsel %vm916, %v908, %v924
    %v933 = vsel %vm917, %v909, %v925
    %v934 = vsel %vm918, %v910, %v926
    %v935 = vsel %vm919, %v911, %v927
    %v936 = vsel %vm920, %v912, %v928
    %v937 = vsel %vm921, %v913, %v929
    %v938 = vsel %vm922, %v914, %v930
    %vm939 = vcmp.gt.f32.partialorder %v48, 0.5
    %vm940 = vcmp.gt.f32.partialorder %v49, 0.5
    %v941 = vsel %vm939, 1, 0
    %v942 = vsel %vm940, 1, 0
    %vm943 = vcmp.eq.s32.totalorder %v941, 1
    %vm944 = vcmp.eq.s32.totalorder %v942, 1
    %v945 = vsel %vm943, %v931, -1e+30
    %v946 = vsel %vm944, %v932, -1e+30
    %v947 = vsel %vm943, %v933, -1e+30
    %v948 = vsel %vm944, %v934, -1e+30
    %v949 = vsel %vm943, %v935, -1e+30
    %v950 = vsel %vm944, %v936, -1e+30
    %v951 = vsel %vm943, %v937, -1e+30
    %v952 = vsel %vm944, %v938, -1e+30
    %v953 = vsel %vm129, %v945, -inf
    %954 = vmax.xlane.f32.xlu0 %v953
    %v955 = vpop.xlane.xlu0 %954
    %v956 = vsel %vm129, %v946, -inf
    %957 = vmax.xlane.f32.xlu0 %v956
    %v958 = vpop.xlane.xlu0 %957
    %v959 = vsel %vm129, %v947, -inf
    %960 = vmax.xlane.f32.xlu0 %v959
    %v961 = vpop.xlane.xlu0 %960
    %v962 = vsel %vm129, %v948, -inf
    %963 = vmax.xlane.f32.xlu0 %v962
    %v964 = vpop.xlane.xlu0 %963
    %v965 = vsel %vm129, %v949, -inf
    %966 = vmax.xlane.f32.xlu0 %v965
    %v967 = vpop.xlane.xlu0 %966
    %v968 = vsel %vm129, %v950, -inf
    %969 = vmax.xlane.f32.xlu0 %v968
    %v970 = vpop.xlane.xlu0 %969
    %v971 = vsel %vm129, %v951, -inf
    %972 = vmax.xlane.f32.xlu0 %v971
    %v973 = vpop.xlane.xlu0 %972
    %v974 = vsel %vm129, %v952, -inf
    %975 = vmax.xlane.f32.xlu0 %v974
    %v976 = vpop.xlane.xlu0 %975
    %v977 = vsub.f32 %v945, %v955
    %v978 = vsub.f32 %v946, %v958
    %v979 = vsub.f32 %v947, %v961
    %v980 = vsub.f32 %v948, %v964
    %v981 = vsub.f32 %v949, %v967
    %v982 = vsub.f32 %v950, %v970
    %v983 = vsub.f32 %v951, %v973
    %v984 = vsub.f32 %v952, %v976
    %v985 = vmul.f32 %v977, 1.442695
    %v986 = vpow.pop %v985
    %v987 = vmul.f32 %v978, 1.442695
    %v988 = vpow.pop %v987
    %v989 = vmul.f32 %v979, 1.442695
    %v990 = vpow.pop %v989
    %v991 = vmul.f32 %v980, 1.442695
    %v992 = vpow.pop %v991
    %v993 = vmul.f32 %v981, 1.442695
    %v994 = vpow.pop %v993
    %v995 = vmul.f32 %v982, 1.442695
    %v996 = vpow.pop %v995
    %v997 = vmul.f32 %v983, 1.442695
    %v998 = vpow.pop %v997
    %v999 = vmul.f32 %v984, 1.442695
    %v1000 = vpow.pop %v999
    %v1001 = vsel %vm129, %v986, 0.0
    %1002 = vadd.xlane.f32.xlu0 %v1001
    %v1003 = vpop.xlane.xlu0 %1002
    %v1004 = vsel %vm129, %v988, 0.0
    %1005 = vadd.xlane.f32.xlu0 %v1004
    %v1006 = vpop.xlane.xlu0 %1005
    %v1007 = vsel %vm129, %v990, 0.0
    %1008 = vadd.xlane.f32.xlu0 %v1007
    %v1009 = vpop.xlane.xlu0 %1008
    %v1010 = vsel %vm129, %v992, 0.0
    %1011 = vadd.xlane.f32.xlu0 %v1010
    %v1012 = vpop.xlane.xlu0 %1011
    %v1013 = vsel %vm129, %v994, 0.0
    %1014 = vadd.xlane.f32.xlu0 %v1013
    %v1015 = vpop.xlane.xlu0 %1014
    %v1016 = vsel %vm129, %v996, 0.0
    %1017 = vadd.xlane.f32.xlu0 %v1016
    %v1018 = vpop.xlane.xlu0 %1017
    %v1019 = vsel %vm129, %v998, 0.0
    %1020 = vadd.xlane.f32.xlu0 %v1019
    %v1021 = vpop.xlane.xlu0 %1020
    %v1022 = vsel %vm129, %v1000, 0.0
    %1023 = vadd.xlane.f32.xlu0 %v1022
    %v1024 = vpop.xlane.xlu0 %1023
    %v1025 = vrcp.pop %v1003
    %v1026 = vmul.f32 %v986, %v1025
    %v1027 = vrcp.pop %v1006
    %v1028 = vmul.f32 %v988, %v1027
    %v1029 = vrcp.pop %v1009
    %v1030 = vmul.f32 %v990, %v1029
    %v1031 = vrcp.pop %v1012
    %v1032 = vmul.f32 %v992, %v1031
    %v1033 = vrcp.pop %v1015
    %v1034 = vmul.f32 %v994, %v1033
    %v1035 = vrcp.pop %v1018
    %v1036 = vmul.f32 %v996, %v1035
    %v1037 = vrcp.pop %v1021
    %v1038 = vmul.f32 %v998, %v1037
    %v1039 = vrcp.pop %v1024
    %v1040 = vmul.f32 %v1000, %v1039
    %v1042 = vsel %vm129, %v1026, 0
    %v1045 = vsel %vm129, %v1028, 0
    %1047 = vmatprep.subr.mxu0 0.0
    %1048 = vmatpush1.msra.mxu0 %v203
    %1049 = vmatprep.subr.mxu0 0.0
    %1050 = vmatpush1.msra.mxu0 %v208
    %1051 = vmatprep.subr.mxu0 0.0
    %1052 = vmatpush1.msra.mxu0 0.0
    %1053 = vmatprep.subr.mxu0 0.0
    %1054 = vmatpush1.msra.mxu0 0.0
    %1055 = vmatprep.subr.mxu0 0.0
    %1056 = vmatpush1.msra.mxu0 0.0
    %1057 = vmatprep.subr.mxu0 0.0
    %1058 = vmatpush1.msra.mxu0 0.0
    %1059 = vmatprep.subr.mxu0 0.0
    %1060 = vmatpush1.msra.mxu0 0.0
    %1061 = vmatprep.subr.mxu0 0.0
    %1062 = vmatpush1.msra.mxu0 0.0
    %1063 = vmatprep.subr.mxu0 0.0
    %1064 = vmatpush1.msra.mxu0 0.0
    %1065 = vmatprep.subr.mxu0 0.0
    %1066 = vmatpush1.msra.mxu0 0.0
    %1067 = vmatprep.subr.mxu0 0.0
    %1068 = vmatpush1.msra.mxu0 0.0
    %1069 = vmatprep.subr.mxu0 0.0
    %1070 = vmatpush1.msra.mxu0 0.0
    %1071 = vmatprep.subr.mxu0 0.0
    %1072 = vmatpush1.msra.mxu0 0.0
    %1073 = vmatprep.subr.mxu0 0.0
    %1074 = vmatpush1.msra.mxu0 0.0
    %1075 = vmatprep.subr.mxu0 0.0
    %1076 = vmatpush1.msra.mxu0 0.0
    %1077 = vmatprep.subr.mxu0 0.0
    %1078 = vmatpush1.msra.mxu0 0.0
    %1079 = vmatprep.subr.mxu0 0.0
    %1080 = vmatpush1.msra.mxu0 0.0
    %1081 = vmatprep.subr.mxu0 0.0
    %1082 = vmatpush1.msra.mxu0 0.0
    %1083 = vmatprep.subr.mxu0 0.0
    %1084 = vmatpush1.msra.mxu0 0.0
    %1085 = vmatprep.subr.mxu0 0.0
    %1086 = vmatpush1.msra.mxu0 0.0
    %1087 = vmatprep.subr.mxu0 0.0
    %1088 = vmatpush1.msra.mxu0 0.0
    %1089 = vmatprep.subr.mxu0 0.0
    %1090 = vmatpush1.msra.mxu0 0.0
    %1091 = vmatprep.subr.mxu0 0.0
    %1092 = vmatpush1.msra.mxu0 0.0
    %1093 = vmatprep.subr.mxu0 0.0
    %1094 = vmatpush1.msra.mxu0 0.0
    %1095 = vmatprep.subr.mxu0 0.0
    %1096 = vmatpush1.msra.mxu0 0.0
    %1097 = vmatprep.subr.mxu0 0.0
    %1098 = vmatpush1.msra.mxu0 0.0
    %1099 = vmatprep.subr.mxu0 0.0
    %1100 = vmatpush1.msra.mxu0 0.0
    %1101 = vmatprep.subr.mxu0 0.0
    %1102 = vmatpush1.msra.mxu0 0.0
    %1103 = vmatprep.subr.mxu0 0.0
    %1104 = vmatpush1.msra.mxu0 0.0
    %1105 = vmatprep.subr.mxu0 0.0
    %1106 = vmatpush1.msra.mxu0 0.0
    %1107 = vmatprep.subr.mxu0 0.0
    %1108 = vmatpush1.msra.mxu0 0.0
    %1109 = vmatprep.subr.mxu0 0.0
    %1110 = vmatpush1.msra.mxu0 0.0
    %1111 = vmatprep.mubr.f32.mxu0 0.0
    %1112 = vmatmul.mubr.f32.gmra.mrb[0].mxu0 %v1042
    %v1113 = vpop.f32.mrb[0].mxu0
    %v1114 = vadd.f32 0.0, %v1113
    %v1115 = vpop.f32.mrb[0].mxu0
    %1116 = vmatprep.mubr.f32.mxu0 0.0
    %1117 = vmatmul.mubr.f32.gmra.mrb[0].mxu0 %v1045
    %v1118 = vpop.f32.mrb[0].mxu0
    %v1119 = vadd.f32 0.0, %v1118
    %v1120 = vpop.f32.mrb[0].mxu0
    %1121 = vdwg.mxu0
    %v1123 = vsel %vm129, %v1030, 0
    %v1126 = vsel %vm129, %v1032, 0
    %1128 = vmatprep.subr.mxu0 0.0
    %1129 = vmatpush1.msra.mxu0 %v278
    %1130 = vmatprep.subr.mxu0 0.0
    %1131 = vmatpush1.msra.mxu0 %v283
    %1132 = vmatprep.subr.mxu0 0.0
    %1133 = vmatpush1.msra.mxu0 0.0
    %1134 = vmatprep.subr.mxu0 0.0
    %1135 = vmatpush1.msra.mxu0 0.0
    %1136 = vmatprep.subr.mxu0 0.0
    %1137 = vmatpush1.msra.mxu0 0.0
    %1138 = vmatprep.subr.mxu0 0.0
    %1139 = vmatpush1.msra.mxu0 0.0
    %1140 = vmatprep.subr.mxu0 0.0
    %1141 = vmatpush1.msra.mxu0 0.0
    %1142 = vmatprep.subr.mxu0 0.0
    %1143 = vmatpush1.msra.mxu0 0.0
    %1144 = vmatprep.subr.mxu0 0.0
    %1145 = vmatpush1.msra.mxu0 0.0
    %1146 = vmatprep.subr.mxu0 0.0
    %1147 = vmatpush1.msra.mxu0 0.0
    %1148 = vmatprep.subr.mxu0 0.0
    %1149 = vmatpush1.msra.mxu0 0.0
    %1150 = vmatprep.subr.mxu0 0.0
    %1151 = vmatpush1.msra.mxu0 0.0
    %1152 = vmatprep.subr.mxu0 0.0
    %1153 = vmatpush1.msra.mxu0 0.0
    %1154 = vmatprep.subr.mxu0 0.0
    %1155 = vmatpush1.msra.mxu0 0.0
    %1156 = vmatprep.subr.mxu0 0.0
    %1157 = vmatpush1.msra.mxu0 0.0
    %1158 = vmatprep.subr.mxu0 0.0
    %1159 = vmatpush1.msra.mxu0 0.0
    %1160 = vmatprep.subr.mxu0 0.0
    %1161 = vmatpush1.msra.mxu0 0.0
    %1162 = vmatprep.subr.mxu0 0.0
    %1163 = vmatpush1.msra.mxu0 0.0
    %1164 = vmatprep.subr.mxu0 0.0
    %1165 = vmatpush1.msra.mxu0 0.0
    %1166 = vmatprep.subr.mxu0 0.0
    %1167 = vmatpush1.msra.mxu0 0.0
    %1168 = vmatprep.subr.mxu0 0.0
    %1169 = vmatpush1.msra.mxu0 0.0
    %1170 = vmatprep.subr.mxu0 0.0
    %1171 = vmatpush1.msra.mxu0 0.0
    %1172 = vmatprep.subr.mxu0 0.0
    %1173 = vmatpush1.msra.mxu0 0.0
    %1174 = vmatprep.subr.mxu0 0.0
    %1175 = vmatpush1.msra.mxu0 0.0
    %1176 = vmatprep.subr.mxu0 0.0
    %1177 = vmatpush1.msra.mxu0 0.0
    %1178 = vmatprep.subr.mxu0 0.0
    %1179 = vmatpush1.msra.mxu0 0.0
    %1180 = vmatprep.subr.mxu0 0.0
    %1181 = vmatpush1.msra.mxu0 0.0
    %1182 = vmatprep.subr.mxu0 0.0
    %1183 = vmatpush1.msra.mxu0 0.0
    %1184 = vmatprep.subr.mxu0 0.0
    %1185 = vmatpush1.msra.mxu0 0.0
    %1186 = vmatprep.subr.mxu0 0.0
    %1187 = vmatpush1.msra.mxu0 0.0
    %1188 = vmatprep.subr.mxu0 0.0
    %1189 = vmatpush1.msra.mxu0 0.0
    %1190 = vmatprep.subr.mxu0 0.0
    %1191 = vmatpush1.msra.mxu0 0.0
    %1192 = vmatprep.mubr.f32.mxu0 0.0
    %1193 = vmatmul.mubr.f32.gmra.mrb[0].mxu0 %v1123
    %v1194 = vpop.f32.mrb[0].mxu0
    %v1195 = vadd.f32 0.0, %v1194
    %v1196 = vpop.f32.mrb[0].mxu0
    %1197 = vmatprep.mubr.f32.mxu0 0.0
    %1198 = vmatmul.mubr.f32.gmra.mrb[0].mxu0 %v1126
    %v1199 = vpop.f32.mrb[0].mxu0
    %v1200 = vadd.f32 0.0, %v1199
    %v1201 = vpop.f32.mrb[0].mxu0
    %1202 = vdwg.mxu0
    %v1204 = vsel %vm129, %v1034, 0
    %v1207 = vsel %vm129, %v1036, 0
    %1209 = vmatprep.subr.mxu0 0.0
    %1210 = vmatpush1.msra.mxu0 %v353
    %1211 = vmatprep.subr.mxu0 0.0
    %1212 = vmatpush1.msra.mxu0 %v358
    %1213 = vmatprep.subr.mxu0 0.0
    %1214 = vmatpush1.msra.mxu0 0.0
    %1215 = vmatprep.subr.mxu0 0.0
    %1216 = vmatpush1.msra.mxu0 0.0
    %1217 = vmatprep.subr.mxu0 0.0
    %1218 = vmatpush1.msra.mxu0 0.0
    %1219 = vmatprep.subr.mxu0 0.0
    %1220 = vmatpush1.msra.mxu0 0.0
    %1221 = vmatprep.subr.mxu0 0.0
    %1222 = vmatpush1.msra.mxu0 0.0
    %1223 = vmatprep.subr.mxu0 0.0
    %1224 = vmatpush1.msra.mxu0 0.0
    %1225 = vmatprep.subr.mxu0 0.0
    %1226 = vmatpush1.msra.mxu0 0.0
    %1227 = vmatprep.subr.mxu0 0.0
    %1228 = vmatpush1.msra.mxu0 0.0
    %1229 = vmatprep.subr.mxu0 0.0
    %1230 = vmatpush1.msra.mxu0 0.0
    %1231 = vmatprep.subr.mxu0 0.0
    %1232 = vmatpush1.msra.mxu0 0.0
    %1233 = vmatprep.subr.mxu0 0.0
    %1234 = vmatpush1.msra.mxu0 0.0
    %1235 = vmatprep.subr.mxu0 0.0
    %1236 = vmatpush1.msra.mxu0 0.0
    %1237 = vmatprep.subr.mxu0 0.0
    %1238 = vmatpush1.msra.mxu0 0.0
    %1239 = vmatprep.subr.mxu0 0.0
    %1240 = vmatpush1.msra.mxu0 0.0
    %1241 = vmatprep.subr.mxu0 0.0
    %1242 = vmatpush1.msra.mxu0 0.0
    %1243 = vmatprep.subr.mxu0 0.0
    %1244 = vmatpush1.msra.mxu0 0.0
    %1245 = vmatprep.subr.mxu0 0.0
    %1246 = vmatpush1.msra.mxu0 0.0
    %1247 = vmatprep.subr.mxu0 0.0
    %1248 = vmatpush1.msra.mxu0 0.0
    %1249 = vmatprep.subr.mxu0 0.0
    %1250 = vmatpush1.msra.mxu0 0.0
    %1251 = vmatprep.subr.mxu0 0.0
    %1252 = vmatpush1.msra.mxu0 0.0
    %1253 = vmatprep.subr.mxu0 0.0
    %1254 = vmatpush1.msra.mxu0 0.0
    %1255 = vmatprep.subr.mxu0 0.0
    %1256 = vmatpush1.msra.mxu0 0.0
    %1257 = vmatprep.subr.mxu0 0.0
    %1258 = vmatpush1.msra.mxu0 0.0
    %1259 = vmatprep.subr.mxu0 0.0
    %1260 = vmatpush1.msra.mxu0 0.0
    %1261 = vmatprep.subr.mxu0 0.0
    %1262 = vmatpush1.msra.mxu0 0.0
    %1263 = vmatprep.subr.mxu0 0.0
    %1264 = vmatpush1.msra.mxu0 0.0
    %1265 = vmatprep.subr.mxu0 0.0
    %1266 = vmatpush1.msra.mxu0 0.0
    %1267 = vmatprep.subr.mxu0 0.0
    %1268 = vmatpush1.msra.mxu0 0.0
    %1269 = vmatprep.subr.mxu0 0.0
    %1270 = vmatpush1.msra.mxu0 0.0
    %1271 = vmatprep.subr.mxu0 0.0
    %1272 = vmatpush1.msra.mxu0 0.0
    %1273 = vmatprep.mubr.f32.mxu0 0.0
    %1274 = vmatmul.mubr.f32.gmra.mrb[0].mxu0 %v1204
    %v1275 = vpop.f32.mrb[0].mxu0
    %v1276 = vadd.f32 0.0, %v1275
    %v1277 = vpop.f32.mrb[0].mxu0
    %1278 = vmatprep.mubr.f32.mxu0 0.0
    %1279 = vmatmul.mubr.f32.gmra.mrb[0].mxu0 %v1207
    %v1280 = vpop.f32.mrb[0].mxu0
    %v1281 = vadd.f32 0.0, %v1280
    %v1282 = vpop.f32.mrb[0].mxu0
    %1283 = vdwg.mxu0
    %v1285 = vsel %vm129, %v1038, 0
    %v1288 = vsel %vm129, %v1040, 0
    %1290 = vmatprep.subr.mxu0 0.0
    %1291 = vmatpush1.msra.mxu0 %v428
    %1292 = vmatprep.subr.mxu0 0.0
    %1293 = vmatpush1.msra.mxu0 %v433
    %1294 = vmatprep.subr.mxu0 0.0
    %1295 = vmatpush1.msra.mxu0 0.0
    %1296 = vmatprep.subr.mxu0 0.0
    %1297 = vmatpush1.msra.mxu0 0.0
    %1298 = vmatprep.subr.mxu0 0.0
    %1299 = vmatpush1.msra.mxu0 0.0
    %1300 = vmatprep.subr.mxu0 0.0
    %1301 = vmatpush1.msra.mxu0 0.0
    %1302 = vmatprep.subr.mxu0 0.0
    %1303 = vmatpush1.msra.mxu0 0.0
    %1304 = vmatprep.subr.mxu0 0.0
    %1305 = vmatpush1.msra.mxu0 0.0
    %1306 = vmatprep.subr.mxu0 0.0
    %1307 = vmatpush1.msra.mxu0 0.0
    %1308 = vmatprep.subr.mxu0 0.0
    %1309 = vmatpush1.msra.mxu0 0.0
    %1310 = vmatprep.subr.mxu0 0.0
    %1311 = vmatpush1.msra.mxu0 0.0
    %1312 = vmatprep.subr.mxu0 0.0
    %1313 = vmatpush1.msra.mxu0 0.0
    %1314 = vmatprep.subr.mxu0 0.0
    %1315 = vmatpush1.msra.mxu0 0.0
    %1316 = vmatprep.subr.mxu0 0.0
    %1317 = vmatpush1.msra.mxu0 0.0
    %1318 = vmatprep.subr.mxu0 0.0
    %1319 = vmatpush1.msra.mxu0 0.0
    %1320 = vmatprep.subr.mxu0 0.0
    %1321 = vmatpush1.msra.mxu0 0.0
    %1322 = vmatprep.subr.mxu0 0.0
    %1323 = vmatpush1.msra.mxu0 0.0
    %1324 = vmatprep.subr.mxu0 0.0
    %1325 = vmatpush1.msra.mxu0 0.0
    %1326 = vmatprep.subr.mxu0 0.0
    %1327 = vmatpush1.msra.mxu0 0.0
    %1328 = vmatprep.subr.mxu0 0.0
    %1329 = vmatpush1.msra.mxu0 0.0
    %1330 = vmatprep.subr.mxu0 0.0
    %1331 = vmatpush1.msra.mxu0 0.0
    %1332 = vmatprep.subr.mxu0 0.0
    %1333 = vmatpush1.msra.mxu0 0.0
    %1334 = vmatprep.subr.mxu0 0.0
    %1335 = vmatpush1.msra.mxu0 0.0
    %1336 = vmatprep.subr.mxu0 0.0
    %1337 = vmatpush1.msra.mxu0 0.0
    %1338 = vmatprep.subr.mxu0 0.0
    %1339 = vmatpush1.msra.mxu0 0.0
    %1340 = vmatprep.subr.mxu0 0.0
    %1341 = vmatpush1.msra.mxu0 0.0
    %1342 = vmatprep.subr.mxu0 0.0
    %1343 = vmatpush1.msra.mxu0 0.0
    %1344 = vmatprep.subr.mxu0 0.0
    %1345 = vmatpush1.msra.mxu0 0.0
    %1346 = vmatprep.subr.mxu0 0.0
    %1347 = vmatpush1.msra.mxu0 0.0
    %1348 = vmatprep.subr.mxu0 0.0
    %1349 = vmatpush1.msra.mxu0 0.0
    %1350 = vmatprep.subr.mxu0 0.0
    %1351 = vmatpush1.msra.mxu0 0.0
    %1352 = vmatprep.subr.mxu0 0.0
    %1353 = vmatpush1.msra.mxu0 0.0
    %1354 = vmatprep.mubr.f32.mxu0 0.0
    %1355 = vmatmul.mubr.f32.gmra.mrb[0].mxu0 %v1285
    %v1356 = vpop.f32.mrb[0].mxu0
    %v1357 = vadd.f32 0.0, %v1356
    %v1358 = vpop.f32.mrb[0].mxu0
    %1359 = vmatprep.mubr.f32.mxu0 0.0
    %1360 = vmatmul.mubr.f32.gmra.mrb[0].mxu0 %v1288
    %v1361 = vpop.f32.mrb[0].mxu0
    %v1362 = vadd.f32 0.0, %v1361
    %v1363 = vpop.f32.mrb[0].mxu0
    %1364 = vdwg.mxu0
    %v1365 = vsel %vm468, %v1114, 0.0
    %v1366 = vsel %vm468, %v1195, 0.0
    %v1367 = vadd.f32 %v1365, %v1366
    %v1368 = vsel %vm468, %v1276, 0.0
    %v1369 = vadd.f32 %v1367, %v1368
    %v1370 = vsel %vm468, %v1357, 0.0
    %v1371 = vadd.f32 %v1369, %v1370
    %v1372 = vsel %vm468, %v1119, 0.0
    %v1373 = vsel %vm468, %v1200, 0.0
    %v1374 = vadd.f32 %v1372, %v1373
    %v1375 = vsel %vm468, %v1281, 0.0
    %v1376 = vadd.f32 %v1374, %v1375
    %v1377 = vsel %vm468, %v1362, 0.0
    %v1378 = vadd.f32 %v1376, %v1377
    %v1379 = vmul.f32 %v1371, 0.25
    %v1380 = vmul.f32 %v1378, 0.25
    %v1382 = vlaneseq
    %v1383 = vshrl.u32 %v1382, 7
    %v1384 = vsub.s32 0, %v1383
    %v1385 = vrot.slane %v128, %v1384
    %v1387 = vadd.f32 %v1379, %v1385
    %v1388 = vadd.f32 %v1380, %v1385
    %vm1389 = vcmp.gt.f32.partialorder %v1387, 0.0
    %vm1390 = vcmp.gt.f32.partialorder %v1388, 0.0
    %v1391 = vmin.f32 %v1387, 0.0
    %v1392 = vmin.f32 %v1388, 0.0
    %v1393 = vmul.f32 %v1391, 1.442695
    %v1394 = vpow.pop %v1393
    %v1395 = vmul.f32 %v1392, 1.442695
    %v1396 = vpow.pop %v1395
    %v1397 = vsub.f32 %v1394, 1.0
    %v1398 = vsub.f32 %v1396, 1.0
    %v1399 = vsel %vm1389, %v1387, %v1397
    %v1400 = vsel %vm1390, %v1388, %v1398
    %v1401 = vld [vmem:[%s6] sm:$0xff]
    %v1402 = vld [vmem:[%s6 + $0x8] sm:$0xff]
    %v1403 = vld [vmem:[%s6 + $0x10] sm:$0xff]
    %v1404 = vld [vmem:[%s6 + $0x18] sm:$0xff]
    %v1405 = vld [vmem:[%s6 + $0x20] sm:$0xff]
    %v1406 = vld [vmem:[%s6 + $0x28] sm:$0xff]
    %v1407 = vld [vmem:[%s6 + $0x30] sm:$0xff]
    %v1408 = vld [vmem:[%s6 + $0x38] sm:$0xff]
    %v1409 = vld [vmem:[%s6 + $0x40] sm:$0xff]
    %v1410 = vld [vmem:[%s6 + $0x48] sm:$0xff]
    %v1411 = vld [vmem:[%s6 + $0x50] sm:$0xff]
    %v1412 = vld [vmem:[%s6 + $0x58] sm:$0xff]
    %v1413 = vld [vmem:[%s6 + $0x60] sm:$0xff]
    %v1414 = vld [vmem:[%s6 + $0x68] sm:$0xff]
    %v1415 = vld [vmem:[%s6 + $0x70] sm:$0xff]
    %v1416 = vld [vmem:[%s6 + $0x78] sm:$0xff]
    %v1417 = vld [vmem:[%s6 + $0x80] sm:$0xff]
    %v1418 = vld [vmem:[%s6 + $0x88] sm:$0xff]
    %v1419 = vld [vmem:[%s6 + $0x90] sm:$0xff]
    %v1420 = vld [vmem:[%s6 + $0x98] sm:$0xff]
    %v1421 = vld [vmem:[%s6 + $0xa0] sm:$0xff]
    %v1422 = vld [vmem:[%s6 + $0xa8] sm:$0xff]
    %v1423 = vld [vmem:[%s6 + $0xb0] sm:$0xff]
    %v1424 = vld [vmem:[%s6 + $0xb8] sm:$0xff]
    %v1425 = vld [vmem:[%s6 + $0xc0] sm:$0xff]
    %v1426 = vld [vmem:[%s6 + $0xc8] sm:$0xff]
    %v1427 = vld [vmem:[%s6 + $0xd0] sm:$0xff]
    %v1428 = vld [vmem:[%s6 + $0xd8] sm:$0xff]
    %v1429 = vld [vmem:[%s6 + $0xe0] sm:$0xff]
    %v1430 = vld [vmem:[%s6 + $0xe8] sm:$0xff]
    %v1431 = vld [vmem:[%s6 + $0xf0] sm:$0xff]
    %v1432 = vld [vmem:[%s6 + $0xf8] sm:$0xff]
    %v1433 = vld [vmem:[%s7] sm:$0xf]
    %v1434 = vld [vmem:[%s8] sm:$0xf]
    %v1435 = vld [vmem:[%s9] sm:$0x1]
    %v1437 = vsel %vm468, %v1399, 0
    %v1440 = vsel %vm468, %v1400, 0
    %1442 = vmatprep.subr.mxu0 0.0
    %1443 = vmatpush1.msra.mxu0 %v1401
    %1444 = vmatprep.subr.mxu0 0.0
    %1445 = vmatpush1.msra.mxu0 %v1402
    %1446 = vmatprep.subr.mxu0 0.0
    %1447 = vmatpush1.msra.mxu0 %v1403
    %1448 = vmatprep.subr.mxu0 0.0
    %1449 = vmatpush1.msra.mxu0 %v1404
    %1450 = vmatprep.subr.mxu0 0.0
    %1451 = vmatpush1.msra.mxu0 %v1405
    %1452 = vmatprep.subr.mxu0 0.0
    %1453 = vmatpush1.msra.mxu0 %v1406
    %1454 = vmatprep.subr.mxu0 0.0
    %1455 = vmatpush1.msra.mxu0 %v1407
    %1456 = vmatprep.subr.mxu0 0.0
    %1457 = vmatpush1.msra.mxu0 %v1408
    %1458 = vmatprep.subr.mxu0 0.0
    %1459 = vmatpush1.msra.mxu0 0.0
    %1460 = vmatprep.subr.mxu0 0.0
    %1461 = vmatpush1.msra.mxu0 0.0
    %1462 = vmatprep.subr.mxu0 0.0
    %1463 = vmatpush1.msra.mxu0 0.0
    %1464 = vmatprep.subr.mxu0 0.0
    %1465 = vmatpush1.msra.mxu0 0.0
    %1466 = vmatprep.subr.mxu0 0.0
    %1467 = vmatpush1.msra.mxu0 0.0
    %1468 = vmatprep.subr.mxu0 0.0
    %1469 = vmatpush1.msra.mxu0 0.0
    %1470 = vmatprep.subr.mxu0 0.0
    %1471 = vmatpush1.msra.mxu0 0.0
    %1472 = vmatprep.subr.mxu0 0.0
    %1473 = vmatpush1.msra.mxu0 0.0
    %1474 = vmatprep.subr.mxu0 0.0
    %1475 = vmatpush1.msra.mxu0 0.0
    %1476 = vmatprep.subr.mxu0 0.0
    %1477 = vmatpush1.msra.mxu0 0.0
    %1478 = vmatprep.subr.mxu0 0.0
    %1479 = vmatpush1.msra.mxu0 0.0
    %1480 = vmatprep.subr.mxu0 0.0
    %1481 = vmatpush1.msra.mxu0 0.0
    %1482 = vmatprep.subr.mxu0 0.0
    %1483 = vmatpush1.msra.mxu0 0.0
    %1484 = vmatprep.subr.mxu0 0.0
    %1485 = vmatpush1.msra.mxu0 0.0
    %1486 = vmatprep.subr.mxu0 0.0
    %1487 = vmatpush1.msra.mxu0 0.0
    %1488 = vmatprep.subr.mxu0 0.0
    %1489 = vmatpush1.msra.mxu0 0.0
    %1490 = vmatprep.subr.mxu0 0.0
    %1491 = vmatpush1.msra.mxu0 0.0
    %1492 = vmatprep.subr.mxu0 0.0
    %1493 = vmatpush1.msra.mxu0 0.0
    %1494 = vmatprep.subr.mxu0 0.0
    %1495 = vmatpush1.msra.mxu0 0.0
    %1496 = vmatprep.subr.mxu0 0.0
    %1497 = vmatpush1.msra.mxu0 0.0
    %1498 = vmatprep.subr.mxu0 0.0
    %1499 = vmatpush1.msra.mxu0 0.0
    %1500 = vmatprep.subr.mxu0 0.0
    %1501 = vmatpush1.msra.mxu0 0.0
    %1502 = vmatprep.subr.mxu0 0.0
    %1503 = vmatpush1.msra.mxu0 0.0
    %1504 = vmatprep.subr.mxu0 0.0
    %1505 = vmatpush1.msra.mxu0 0.0
    %1506 = vmatprep.mubr.f32.mxu0 0.0
    %1507 = vmatmul.mubr.f32.gmra.mrb[0].mxu0 %v1437
    %v1508 = vpop.f32.mrb[0].mxu0
    %v1509 = vadd.f32 0.0, %v1508
    %v1510 = vpop.f32.mrb[0].mxu0
    %1511 = vmatprep.mubr.f32.mxu0 0.0
    %1512 = vmatmul.mubr.f32.gmra.mrb[0].mxu0 %v1440
    %v1513 = vpop.f32.mrb[0].mxu0
    %v1514 = vadd.f32 0.0, %v1513
    %v1515 = vpop.f32.mrb[0].mxu0
    %1516 = vdwg.mxu0
    %1517 = vmatprep.subr.mxu0 0.0
    %1518 = vmatpush1.msra.mxu0 %v1409
    %1519 = vmatprep.subr.mxu0 0.0
    %1520 = vmatpush1.msra.mxu0 %v1410
    %1521 = vmatprep.subr.mxu0 0.0
    %1522 = vmatpush1.msra.mxu0 %v1411
    %1523 = vmatprep.subr.mxu0 0.0
    %1524 = vmatpush1.msra.mxu0 %v1412
    %1525 = vmatprep.subr.mxu0 0.0
    %1526 = vmatpush1.msra.mxu0 %v1413
    %1527 = vmatprep.subr.mxu0 0.0
    %1528 = vmatpush1.msra.mxu0 %v1414
    %1529 = vmatprep.subr.mxu0 0.0
    %1530 = vmatpush1.msra.mxu0 %v1415
    %1531 = vmatprep.subr.mxu0 0.0
    %1532 = vmatpush1.msra.mxu0 %v1416
    %1533 = vmatprep.subr.mxu0 0.0
    %1534 = vmatpush1.msra.mxu0 0.0
    %1535 = vmatprep.subr.mxu0 0.0
    %1536 = vmatpush1.msra.mxu0 0.0
    %1537 = vmatprep.subr.mxu0 0.0
    %1538 = vmatpush1.msra.mxu0 0.0
    %1539 = vmatprep.subr.mxu0 0.0
    %1540 = vmatpush1.msra.mxu0 0.0
    %1541 = vmatprep.subr.mxu0 0.0
    %1542 = vmatpush1.msra.mxu0 0.0
    %1543 = vmatprep.subr.mxu0 0.0
    %1544 = vmatpush1.msra.mxu0 0.0
    %1545 = vmatprep.subr.mxu0 0.0
    %1546 = vmatpush1.msra.mxu0 0.0
    %1547 = vmatprep.subr.mxu0 0.0
    %1548 = vmatpush1.msra.mxu0 0.0
    %1549 = vmatprep.subr.mxu0 0.0
    %1550 = vmatpush1.msra.mxu0 0.0
    %1551 = vmatprep.subr.mxu0 0.0
    %1552 = vmatpush1.msra.mxu0 0.0
    %1553 = vmatprep.subr.mxu0 0.0
    %1554 = vmatpush1.msra.mxu0 0.0
    %1555 = vmatprep.subr.mxu0 0.0
    %1556 = vmatpush1.msra.mxu0 0.0
    %1557 = vmatprep.subr.mxu0 0.0
    %1558 = vmatpush1.msra.mxu0 0.0
    %1559 = vmatprep.subr.mxu0 0.0
    %1560 = vmatpush1.msra.mxu0 0.0
    %1561 = vmatprep.subr.mxu0 0.0
    %1562 = vmatpush1.msra.mxu0 0.0
    %1563 = vmatprep.subr.mxu0 0.0
    %1564 = vmatpush1.msra.mxu0 0.0
    %1565 = vmatprep.subr.mxu0 0.0
    %1566 = vmatpush1.msra.mxu0 0.0
    %1567 = vmatprep.subr.mxu0 0.0
    %1568 = vmatpush1.msra.mxu0 0.0
    %1569 = vmatprep.subr.mxu0 0.0
    %1570 = vmatpush1.msra.mxu0 0.0
    %1571 = vmatprep.subr.mxu0 0.0
    %1572 = vmatpush1.msra.mxu0 0.0
    %1573 = vmatprep.subr.mxu0 0.0
    %1574 = vmatpush1.msra.mxu0 0.0
    %1575 = vmatprep.subr.mxu0 0.0
    %1576 = vmatpush1.msra.mxu0 0.0
    %1577 = vmatprep.subr.mxu0 0.0
    %1578 = vmatpush1.msra.mxu0 0.0
    %1579 = vmatprep.subr.mxu0 0.0
    %1580 = vmatpush1.msra.mxu0 0.0
    %1581 = vmatprep.mubr.f32.mxu0 0.0
    %1582 = vmatmul.mubr.f32.gmra.mrb[0].mxu0 %v1437
    %v1583 = vpop.f32.mrb[0].mxu0
    %v1584 = vadd.f32 0.0, %v1583
    %v1585 = vpop.f32.mrb[0].mxu0
    %1586 = vmatprep.mubr.f32.mxu0 0.0
    %1587 = vmatmul.mubr.f32.gmra.mrb[0].mxu0 %v1440
    %v1588 = vpop.f32.mrb[0].mxu0
    %v1589 = vadd.f32 0.0, %v1588
    %v1590 = vpop.f32.mrb[0].mxu0
    %1591 = vdwg.mxu0
    %1592 = vmatprep.subr.mxu0 0.0
    %1593 = vmatpush1.msra.mxu0 %v1417
    %1594 = vmatprep.subr.mxu0 0.0
    %1595 = vmatpush1.msra.mxu0 %v1418
    %1596 = vmatprep.subr.mxu0 0.0
    %1597 = vmatpush1.msra.mxu0 %v1419
    %1598 = vmatprep.subr.mxu0 0.0
    %1599 = vmatpush1.msra.mxu0 %v1420
    %1600 = vmatprep.subr.mxu0 0.0
    %1601 = vmatpush1.msra.mxu0 %v1421
    %1602 = vmatprep.subr.mxu0 0.0
    %1603 = vmatpush1.msra.mxu0 %v1422
    %1604 = vmatprep.subr.mxu0 0.0
    %1605 = vmatpush1.msra.mxu0 %v1423
    %1606 = vmatprep.subr.mxu0 0.0
    %1607 = vmatpush1.msra.mxu0 %v1424
    %1608 = vmatprep.subr.mxu0 0.0
    %1609 = vmatpush1.msra.mxu0 0.0
    %1610 = vmatprep.subr.mxu0 0.0
    %1611 = vmatpush1.msra.mxu0 0.0
    %1612 = vmatprep.subr.mxu0 0.0
    %1613 = vmatpush1.msra.mxu0 0.0
    %1614 = vmatprep.subr.mxu0 0.0
    %1615 = vmatpush1.msra.mxu0 0.0
    %1616 = vmatprep.subr.mxu0 0.0
    %1617 = vmatpush1.msra.mxu0 0.0
    %1618 = vmatprep.subr.mxu0 0.0
    %1619 = vmatpush1.msra.mxu0 0.0
    %1620 = vmatprep.subr.mxu0 0.0
    %1621 = vmatpush1.msra.mxu0 0.0
    %1622 = vmatprep.subr.mxu0 0.0
    %1623 = vmatpush1.msra.mxu0 0.0
    %1624 = vmatprep.subr.mxu0 0.0
    %1625 = vmatpush1.msra.mxu0 0.0
    %1626 = vmatprep.subr.mxu0 0.0
    %1627 = vmatpush1.msra.mxu0 0.0
    %1628 = vmatprep.subr.mxu0 0.0
    %1629 = vmatpush1.msra.mxu0 0.0
    %1630 = vmatprep.subr.mxu0 0.0
    %1631 = vmatpush1.msra.mxu0 0.0
    %1632 = vmatprep.subr.mxu0 0.0
    %1633 = vmatpush1.msra.mxu0 0.0
    %1634 = vmatprep.subr.mxu0 0.0
    %1635 = vmatpush1.msra.mxu0 0.0
    %1636 = vmatprep.subr.mxu0 0.0
    %1637 = vmatpush1.msra.mxu0 0.0
    %1638 = vmatprep.subr.mxu0 0.0
    %1639 = vmatpush1.msra.mxu0 0.0
    %1640 = vmatprep.subr.mxu0 0.0
    %1641 = vmatpush1.msra.mxu0 0.0
    %1642 = vmatprep.subr.mxu0 0.0
    %1643 = vmatpush1.msra.mxu0 0.0
    %1644 = vmatprep.subr.mxu0 0.0
    %1645 = vmatpush1.msra.mxu0 0.0
    %1646 = vmatprep.subr.mxu0 0.0
    %1647 = vmatpush1.msra.mxu0 0.0
    %1648 = vmatprep.subr.mxu0 0.0
    %1649 = vmatpush1.msra.mxu0 0.0
    %1650 = vmatprep.subr.mxu0 0.0
    %1651 = vmatpush1.msra.mxu0 0.0
    %1652 = vmatprep.subr.mxu0 0.0
    %1653 = vmatpush1.msra.mxu0 0.0
    %1654 = vmatprep.subr.mxu0 0.0
    %1655 = vmatpush1.msra.mxu0 0.0
    %1656 = vmatprep.mubr.f32.mxu0 0.0
    %1657 = vmatmul.mubr.f32.gmra.mrb[0].mxu0 %v1437
    %v1658 = vpop.f32.mrb[0].mxu0
    %v1659 = vadd.f32 0.0, %v1658
    %v1660 = vpop.f32.mrb[0].mxu0
    %1661 = vmatprep.mubr.f32.mxu0 0.0
    %1662 = vmatmul.mubr.f32.gmra.mrb[0].mxu0 %v1440
    %v1663 = vpop.f32.mrb[0].mxu0
    %v1664 = vadd.f32 0.0, %v1663
    %v1665 = vpop.f32.mrb[0].mxu0
    %1666 = vdwg.mxu0
    %1667 = vmatprep.subr.mxu0 0.0
    %1668 = vmatpush1.msra.mxu0 %v1425
    %1669 = vmatprep.subr.mxu0 0.0
    %1670 = vmatpush1.msra.mxu0 %v1426
    %1671 = vmatprep.subr.mxu0 0.0
    %1672 = vmatpush1.msra.mxu0 %v1427
    %1673 = vmatprep.subr.mxu0 0.0
    %1674 = vmatpush1.msra.mxu0 %v1428
    %1675 = vmatprep.subr.mxu0 0.0
    %1676 = vmatpush1.msra.mxu0 %v1429
    %1677 = vmatprep.subr.mxu0 0.0
    %1678 = vmatpush1.msra.mxu0 %v1430
    %1679 = vmatprep.subr.mxu0 0.0
    %1680 = vmatpush1.msra.mxu0 %v1431
    %1681 = vmatprep.subr.mxu0 0.0
    %1682 = vmatpush1.msra.mxu0 %v1432
    %1683 = vmatprep.subr.mxu0 0.0
    %1684 = vmatpush1.msra.mxu0 0.0
    %1685 = vmatprep.subr.mxu0 0.0
    %1686 = vmatpush1.msra.mxu0 0.0
    %1687 = vmatprep.subr.mxu0 0.0
    %1688 = vmatpush1.msra.mxu0 0.0
    %1689 = vmatprep.subr.mxu0 0.0
    %1690 = vmatpush1.msra.mxu0 0.0
    %1691 = vmatprep.subr.mxu0 0.0
    %1692 = vmatpush1.msra.mxu0 0.0
    %1693 = vmatprep.subr.mxu0 0.0
    %1694 = vmatpush1.msra.mxu0 0.0
    %1695 = vmatprep.subr.mxu0 0.0
    %1696 = vmatpush1.msra.mxu0 0.0
    %1697 = vmatprep.subr.mxu0 0.0
    %1698 = vmatpush1.msra.mxu0 0.0
    %1699 = vmatprep.subr.mxu0 0.0
    %1700 = vmatpush1.msra.mxu0 0.0
    %1701 = vmatprep.subr.mxu0 0.0
    %1702 = vmatpush1.msra.mxu0 0.0
    %1703 = vmatprep.subr.mxu0 0.0
    %1704 = vmatpush1.msra.mxu0 0.0
    %1705 = vmatprep.subr.mxu0 0.0
    %1706 = vmatpush1.msra.mxu0 0.0
    %1707 = vmatprep.subr.mxu0 0.0
    %1708 = vmatpush1.msra.mxu0 0.0
    %1709 = vmatprep.subr.mxu0 0.0
    %1710 = vmatpush1.msra.mxu0 0.0
    %1711 = vmatprep.subr.mxu0 0.0
    %1712 = vmatpush1.msra.mxu0 0.0
    %1713 = vmatprep.subr.mxu0 0.0
    %1714 = vmatpush1.msra.mxu0 0.0
    %1715 = vmatprep.subr.mxu0 0.0
    %1716 = vmatpush1.msra.mxu0 0.0
    %1717 = vmatprep.subr.mxu0 0.0
    %1718 = vmatpush1.msra.mxu0 0.0
    %1719 = vmatprep.subr.mxu0 0.0
    %1720 = vmatpush1.msra.mxu0 0.0
    %1721 = vmatprep.subr.mxu0 0.0
    %1722 = vmatpush1.msra.mxu0 0.0
    %1723 = vmatprep.subr.mxu0 0.0
    %1724 = vmatpush1.msra.mxu0 0.0
    %1725 = vmatprep.subr.mxu0 0.0
    %1726 = vmatpush1.msra.mxu0 0.0
    %1727 = vmatprep.subr.mxu0 0.0
    %1728 = vmatpush1.msra.mxu0 0.0
    %1729 = vmatprep.subr.mxu0 0.0
    %1730 = vmatpush1.msra.mxu0 0.0
    %1731 = vmatprep.mubr.f32.mxu0 0.0
    %1732 = vmatmul.mubr.f32.gmra.mrb[0].mxu0 %v1437
    %v1733 = vpop.f32.mrb[0].mxu0
    %v1734 = vadd.f32 0.0, %v1733
    %v1735 = vpop.f32.mrb[0].mxu0
    %1736 = vmatprep.mubr.f32.mxu0 0.0
    %1737 = vmatmul.mubr.f32.gmra.mrb[0].mxu0 %v1440
    %v1738 = vpop.f32.mrb[0].mxu0
    %v1739 = vadd.f32 0.0, %v1738
    %v1740 = vpop.f32.mrb[0].mxu0
    %1741 = vdwg.mxu0
    %v1744 = vunpack.c.l.s4 1966171168
    %v1745 = vunpack.c.0.s8 %v1744
    %v1746 = vlaneseq
    %v1747 = vshrl.u32 %v1746, 7
    %v1748 = vsub.s32 %v1745, %v1747
    %v1749 = vrot.slane %v1434, %v1748
    %v1750 = vcombine.high %v1749, %v1749
    %v1752 = vunpack.c.l.s4 1966171168
    %v1753 = vunpack.c.0.s8 %v1752
    %v1754 = vlaneseq
    %v1755 = vshrl.u32 %v1754, 7
    %v1756 = vsub.s32 %v1753, %v1755
    %v1757 = vrot.slane %v1749, %v1756
    %v1759 = vunpack.c.l.s4 1966171168
    %v1760 = vunpack.c.0.s8 %v1759
    %v1761 = vlaneseq
    %v1762 = vshrl.u32 %v1761, 7
    %v1763 = vsub.s32 %v1760, %v1762
    %v1764 = vrot.slane %v1750, %v1763
    %v1765 = vcombine.high %v1757, %v1757
    %v1766 = vcombine.high %v1764, %v1764
    %v1767 = vlaneseq
    %v1768 = vshrl.u32 %v1767, 7
    %v1769 = vsub.s32 0, %v1768
    %v1770 = vrot.slane %v1757, %v1769
    %v1772 = vmul.f32 %v1509, %v1770
    %v1773 = vmul.f32 %v1514, %v1770
    %1774 = vadd.xlane.f32.xlu0 %v1772
    %v1775 = vpop.xlane.xlu0 %1774
    %1776 = vadd.xlane.f32.xlu0 %v1773
    %v1777 = vpop.xlane.xlu0 %1776
    %v1778 = vlaneseq
    %v1779 = vshrl.u32 %v1778, 7
    %v1780 = vsub.s32 0, %v1779
    %v1781 = vrot.slane %v1764, %v1780
    %v1783 = vmul.f32 %v1584, %v1781
    %v1784 = vmul.f32 %v1589, %v1781
    %1785 = vadd.xlane.f32.xlu0 %v1783
    %v1786 = vpop.xlane.xlu0 %1785
    %1787 = vadd.xlane.f32.xlu0 %v1784
    %v1788 = vpop.xlane.xlu0 %1787
    %v1789 = vlaneseq
    %v1790 = vshrl.u32 %v1789, 7
    %v1791 = vsub.s32 0, %v1790
    %v1792 = vrot.slane %v1765, %v1791
    %v1794 = vmul.f32 %v1659, %v1792
    %v1795 = vmul.f32 %v1664, %v1792
    %1796 = vadd.xlane.f32.xlu0 %v1794
    %v1797 = vpop.xlane.xlu0 %1796
    %1798 = vadd.xlane.f32.xlu0 %v1795
    %v1799 = vpop.xlane.xlu0 %1798
    %v1800 = vlaneseq
    %v1801 = vshrl.u32 %v1800, 7
    %v1802 = vsub.s32 0, %v1801
    %v1803 = vrot.slane %v1766, %v1802
    %v1805 = vmul.f32 %v1734, %v1803
    %v1806 = vmul.f32 %v1739, %v1803
    %1807 = vadd.xlane.f32.xlu0 %v1805
    %v1808 = vpop.xlane.xlu0 %1807
    %1809 = vadd.xlane.f32.xlu0 %v1806
    %v1810 = vpop.xlane.xlu0 %1809
    %v1813 = vunpack.c.l.s4 1966171168
    %v1814 = vunpack.c.0.s8 %v1813
    %v1815 = vlaneseq
    %v1816 = vshrl.u32 %v1815, 7
    %v1817 = vsub.s32 %v1814, %v1816
    %v1818 = vrot.slane %v1433, %v1817
    %v1819 = vcombine.high %v1818, %v1818
    %v1821 = vunpack.c.l.s4 1966171168
    %v1822 = vunpack.c.0.s8 %v1821
    %v1823 = vlaneseq
    %v1824 = vshrl.u32 %v1823, 7
    %v1825 = vsub.s32 %v1822, %v1824
    %v1826 = vrot.slane %v1818, %v1825
    %v1828 = vunpack.c.l.s4 1966171168
    %v1829 = vunpack.c.0.s8 %v1828
    %v1830 = vlaneseq
    %v1831 = vshrl.u32 %v1830, 7
    %v1832 = vsub.s32 %v1829, %v1831
    %v1833 = vrot.slane %v1819, %v1832
    %v1834 = vcombine.high %v1826, %v1826
    %v1835 = vcombine.high %v1833, %v1833
    %1840 = vmatprep.subr.mxu0 0.0
    %1841 = vmatpush1.xpose.msra.mxu0 %v1509
    %1842 = vmatprep.subr.mxu0 0.0
    %1843 = vmatpush1.xpose.msra.mxu0 %v1514
    %1844 = vmatprep.subr.mxu0 0.0
    %1845 = vmatpush1.xpose.msra.mxu0 0.0
    %1846 = vmatprep.subr.mxu0 0.0
    %1847 = vmatpush1.xpose.msra.mxu0 0.0
    %1848 = vmatprep.subr.mxu0 0.0
    %1849 = vmatpush1.xpose.msra.mxu0 0.0
    %1850 = vmatprep.subr.mxu0 0.0
    %1851 = vmatpush1.xpose.msra.mxu0 0.0
    %1852 = vmatprep.subr.mxu0 0.0
    %1853 = vmatpush1.xpose.msra.mxu0 0.0
    %1854 = vmatprep.subr.mxu0 0.0
    %1855 = vmatpush1.xpose.msra.mxu0 0.0
    %1856 = vmatprep.subr.mxu0 0.0
    %1857 = vmatpush1.xpose.msra.mxu0 0.0
    %1858 = vmatprep.subr.mxu0 0.0
    %1859 = vmatpush1.xpose.msra.mxu0 0.0
    %1860 = vmatprep.subr.mxu0 0.0
    %1861 = vmatpush1.xpose.msra.mxu0 0.0
    %1862 = vmatprep.subr.mxu0 0.0
    %1863 = vmatpush1.xpose.msra.mxu0 0.0
    %1864 = vmatprep.subr.mxu0 0.0
    %1865 = vmatpush1.xpose.msra.mxu0 0.0
    %1866 = vmatprep.subr.mxu0 0.0
    %1867 = vmatpush1.xpose.msra.mxu0 0.0
    %1868 = vmatprep.subr.mxu0 0.0
    %1869 = vmatpush1.xpose.msra.mxu0 0.0
    %1870 = vmatprep.subr.mxu0 0.0
    %1871 = vmatpush1.xpose.msra.mxu0 0.0
    %1872 = vmatprep.subr.mxu0 0.0
    %1873 = vmatpush1.xpose.msra.mxu0 0.0
    %1874 = vmatprep.subr.mxu0 0.0
    %1875 = vmatpush1.xpose.msra.mxu0 0.0
    %1876 = vmatprep.subr.mxu0 0.0
    %1877 = vmatpush1.xpose.msra.mxu0 0.0
    %1878 = vmatprep.subr.mxu0 0.0
    %1879 = vmatpush1.xpose.msra.mxu0 0.0
    %1880 = vmatprep.subr.mxu0 0.0
    %1881 = vmatpush1.xpose.msra.mxu0 0.0
    %1882 = vmatprep.subr.mxu0 0.0
    %1883 = vmatpush1.xpose.msra.mxu0 0.0
    %1884 = vmatprep.subr.mxu0 0.0
    %1885 = vmatpush1.xpose.msra.mxu0 0.0
    %1886 = vmatprep.subr.mxu0 0.0
    %1887 = vmatpush1.xpose.msra.mxu0 0.0
    %1888 = vmatprep.subr.mxu0 0.0
    %1889 = vmatpush1.xpose.msra.mxu0 0.0
    %1890 = vmatprep.subr.mxu0 0.0
    %1891 = vmatpush1.xpose.msra.mxu0 0.0
    %1892 = vmatprep.subr.mxu0 0.0
    %1893 = vmatpush1.xpose.msra.mxu0 0.0
    %1894 = vmatprep.subr.mxu0 0.0
    %1895 = vmatpush1.xpose.msra.mxu0 0.0
    %1896 = vmatprep.subr.mxu0 0.0
    %1897 = vmatpush1.xpose.msra.mxu0 0.0
    %1898 = vmatprep.subr.mxu0 0.0
    %1899 = vmatpush1.xpose.msra.mxu0 0.0
    %1900 = vmatprep.subr.mxu0 0.0
    %1901 = vmatpush1.xpose.msra.mxu0 0.0
    %1902 = vmatprep.subr.mxu0 0.0
    %1903 = vmatpush1.xpose.msra.mxu0 0.0
    %1904 = vmatprep.mubr.f32.mxu0 0.0
    %1905 = vmatmul.mubr.f32.gmra.mrb[0].mxu0 %v1826
    %v1906 = vpop.f32.mrb[0].mxu0
    %v1907 = vadd.f32 0.0, %v1906
    %v1908 = vpop.f32.mrb[0].mxu0
    %1909 = vdwg.mxu0
    %1910 = vmatprep.subr.mxu0 0.0
    %1911 = vmatpush1.xpose.msra.mxu0 %v1584
    %1912 = vmatprep.subr.mxu0 0.0
    %1913 = vmatpush1.xpose.msra.mxu0 %v1589
    %1914 = vmatprep.subr.mxu0 0.0
    %1915 = vmatpush1.xpose.msra.mxu0 0.0
    %1916 = vmatprep.subr.mxu0 0.0
    %1917 = vmatpush1.xpose.msra.mxu0 0.0
    %1918 = vmatprep.subr.mxu0 0.0
    %1919 = vmatpush1.xpose.msra.mxu0 0.0
    %1920 = vmatprep.subr.mxu0 0.0
    %1921 = vmatpush1.xpose.msra.mxu0 0.0
    %1922 = vmatprep.subr.mxu0 0.0
    %1923 = vmatpush1.xpose.msra.mxu0 0.0
    %1924 = vmatprep.subr.mxu0 0.0
    %1925 = vmatpush1.xpose.msra.mxu0 0.0
    %1926 = vmatprep.subr.mxu0 0.0
    %1927 = vmatpush1.xpose.msra.mxu0 0.0
    %1928 = vmatprep.subr.mxu0 0.0
    %1929 = vmatpush1.xpose.msra.mxu0 0.0
    %1930 = vmatprep.subr.mxu0 0.0
    %1931 = vmatpush1.xpose.msra.mxu0 0.0
    %1932 = vmatprep.subr.mxu0 0.0
    %1933 = vmatpush1.xpose.msra.mxu0 0.0
    %1934 = vmatprep.subr.mxu0 0.0
    %1935 = vmatpush1.xpose.msra.mxu0 0.0
    %1936 = vmatprep.subr.mxu0 0.0
    %1937 = vmatpush1.xpose.msra.mxu0 0.0
    %1938 = vmatprep.subr.mxu0 0.0
    %1939 = vmatpush1.xpose.msra.mxu0 0.0
    %1940 = vmatprep.subr.mxu0 0.0
    %1941 = vmatpush1.xpose.msra.mxu0 0.0
    %1942 = vmatprep.subr.mxu0 0.0
    %1943 = vmatpush1.xpose.msra.mxu0 0.0
    %1944 = vmatprep.subr.mxu0 0.0
    %1945 = vmatpush1.xpose.msra.mxu0 0.0
    %1946 = vmatprep.subr.mxu0 0.0
    %1947 = vmatpush1.xpose.msra.mxu0 0.0
    %1948 = vmatprep.subr.mxu0 0.0
    %1949 = vmatpush1.xpose.msra.mxu0 0.0
    %1950 = vmatprep.subr.mxu0 0.0
    %1951 = vmatpush1.xpose.msra.mxu0 0.0
    %1952 = vmatprep.subr.mxu0 0.0
    %1953 = vmatpush1.xpose.msra.mxu0 0.0
    %1954 = vmatprep.subr.mxu0 0.0
    %1955 = vmatpush1.xpose.msra.mxu0 0.0
    %1956 = vmatprep.subr.mxu0 0.0
    %1957 = vmatpush1.xpose.msra.mxu0 0.0
    %1958 = vmatprep.subr.mxu0 0.0
    %1959 = vmatpush1.xpose.msra.mxu0 0.0
    %1960 = vmatprep.subr.mxu0 0.0
    %1961 = vmatpush1.xpose.msra.mxu0 0.0
    %1962 = vmatprep.subr.mxu0 0.0
    %1963 = vmatpush1.xpose.msra.mxu0 0.0
    %1964 = vmatprep.subr.mxu0 0.0
    %1965 = vmatpush1.xpose.msra.mxu0 0.0
    %1966 = vmatprep.subr.mxu0 0.0
    %1967 = vmatpush1.xpose.msra.mxu0 0.0
    %1968 = vmatprep.subr.mxu0 0.0
    %1969 = vmatpush1.xpose.msra.mxu0 0.0
    %1970 = vmatprep.subr.mxu0 0.0
    %1971 = vmatpush1.xpose.msra.mxu0 0.0
    %1972 = vmatprep.subr.mxu0 0.0
    %1973 = vmatpush1.xpose.msra.mxu0 0.0
    %1974 = vmatprep.mubr.f32.mxu0 0.0
    %1975 = vmatmul.mubr.f32.gmra.mrb[0].mxu0 %v1833
    %v1976 = vpop.f32.mrb[0].mxu0
    %v1977 = vadd.f32 0.0, %v1976
    %v1978 = vpop.f32.mrb[0].mxu0
    %1979 = vdwg.mxu0
    %1980 = vmatprep.subr.mxu0 0.0
    %1981 = vmatpush1.xpose.msra.mxu0 %v1659
    %1982 = vmatprep.subr.mxu0 0.0
    %1983 = vmatpush1.xpose.msra.mxu0 %v1664
    %1984 = vmatprep.subr.mxu0 0.0
    %1985 = vmatpush1.xpose.msra.mxu0 0.0
    %1986 = vmatprep.subr.mxu0 0.0
    %1987 = vmatpush1.xpose.msra.mxu0 0.0
    %1988 = vmatprep.subr.mxu0 0.0
    %1989 = vmatpush1.xpose.msra.mxu0 0.0
    %1990 = vmatprep.subr.mxu0 0.0
    %1991 = vmatpush1.xpose.msra.mxu0 0.0
    %1992 = vmatprep.subr.mxu0 0.0
    %1993 = vmatpush1.xpose.msra.mxu0 0.0
    %1994 = vmatprep.subr.mxu0 0.0
    %1995 = vmatpush1.xpose.msra.mxu0 0.0
    %1996 = vmatprep.subr.mxu0 0.0
    %1997 = vmatpush1.xpose.msra.mxu0 0.0
    %1998 = vmatprep.subr.mxu0 0.0
    %1999 = vmatpush1.xpose.msra.mxu0 0.0
    %2000 = vmatprep.subr.mxu0 0.0
    %2001 = vmatpush1.xpose.msra.mxu0 0.0
    %2002 = vmatprep.subr.mxu0 0.0
    %2003 = vmatpush1.xpose.msra.mxu0 0.0
    %2004 = vmatprep.subr.mxu0 0.0
    %2005 = vmatpush1.xpose.msra.mxu0 0.0
    %2006 = vmatprep.subr.mxu0 0.0
    %2007 = vmatpush1.xpose.msra.mxu0 0.0
    %2008 = vmatprep.subr.mxu0 0.0
    %2009 = vmatpush1.xpose.msra.mxu0 0.0
    %2010 = vmatprep.subr.mxu0 0.0
    %2011 = vmatpush1.xpose.msra.mxu0 0.0
    %2012 = vmatprep.subr.mxu0 0.0
    %2013 = vmatpush1.xpose.msra.mxu0 0.0
    %2014 = vmatprep.subr.mxu0 0.0
    %2015 = vmatpush1.xpose.msra.mxu0 0.0
    %2016 = vmatprep.subr.mxu0 0.0
    %2017 = vmatpush1.xpose.msra.mxu0 0.0
    %2018 = vmatprep.subr.mxu0 0.0
    %2019 = vmatpush1.xpose.msra.mxu0 0.0
    %2020 = vmatprep.subr.mxu0 0.0
    %2021 = vmatpush1.xpose.msra.mxu0 0.0
    %2022 = vmatprep.subr.mxu0 0.0
    %2023 = vmatpush1.xpose.msra.mxu0 0.0
    %2024 = vmatprep.subr.mxu0 0.0
    %2025 = vmatpush1.xpose.msra.mxu0 0.0
    %2026 = vmatprep.subr.mxu0 0.0
    %2027 = vmatpush1.xpose.msra.mxu0 0.0
    %2028 = vmatprep.subr.mxu0 0.0
    %2029 = vmatpush1.xpose.msra.mxu0 0.0
    %2030 = vmatprep.subr.mxu0 0.0
    %2031 = vmatpush1.xpose.msra.mxu0 0.0
    %2032 = vmatprep.subr.mxu0 0.0
    %2033 = vmatpush1.xpose.msra.mxu0 0.0
    %2034 = vmatprep.subr.mxu0 0.0
    %2035 = vmatpush1.xpose.msra.mxu0 0.0
    %2036 = vmatprep.subr.mxu0 0.0
    %2037 = vmatpush1.xpose.msra.mxu0 0.0
    %2038 = vmatprep.subr.mxu0 0.0
    %2039 = vmatpush1.xpose.msra.mxu0 0.0
    %2040 = vmatprep.subr.mxu0 0.0
    %2041 = vmatpush1.xpose.msra.mxu0 0.0
    %2042 = vmatprep.subr.mxu0 0.0
    %2043 = vmatpush1.xpose.msra.mxu0 0.0
    %2044 = vmatprep.mubr.f32.mxu0 0.0
    %2045 = vmatmul.mubr.f32.gmra.mrb[0].mxu0 %v1834
    %v2046 = vpop.f32.mrb[0].mxu0
    %v2047 = vadd.f32 0.0, %v2046
    %v2048 = vpop.f32.mrb[0].mxu0
    %2049 = vdwg.mxu0
    %2050 = vmatprep.subr.mxu0 0.0
    %2051 = vmatpush1.xpose.msra.mxu0 %v1734
    %2052 = vmatprep.subr.mxu0 0.0
    %2053 = vmatpush1.xpose.msra.mxu0 %v1739
    %2054 = vmatprep.subr.mxu0 0.0
    %2055 = vmatpush1.xpose.msra.mxu0 0.0
    %2056 = vmatprep.subr.mxu0 0.0
    %2057 = vmatpush1.xpose.msra.mxu0 0.0
    %2058 = vmatprep.subr.mxu0 0.0
    %2059 = vmatpush1.xpose.msra.mxu0 0.0
    %2060 = vmatprep.subr.mxu0 0.0
    %2061 = vmatpush1.xpose.msra.mxu0 0.0
    %2062 = vmatprep.subr.mxu0 0.0
    %2063 = vmatpush1.xpose.msra.mxu0 0.0
    %2064 = vmatprep.subr.mxu0 0.0
    %2065 = vmatpush1.xpose.msra.mxu0 0.0
    %2066 = vmatprep.subr.mxu0 0.0
    %2067 = vmatpush1.xpose.msra.mxu0 0.0
    %2068 = vmatprep.subr.mxu0 0.0
    %2069 = vmatpush1.xpose.msra.mxu0 0.0
    %2070 = vmatprep.subr.mxu0 0.0
    %2071 = vmatpush1.xpose.msra.mxu0 0.0
    %2072 = vmatprep.subr.mxu0 0.0
    %2073 = vmatpush1.xpose.msra.mxu0 0.0
    %2074 = vmatprep.subr.mxu0 0.0
    %2075 = vmatpush1.xpose.msra.mxu0 0.0
    %2076 = vmatprep.subr.mxu0 0.0
    %2077 = vmatpush1.xpose.msra.mxu0 0.0
    %2078 = vmatprep.subr.mxu0 0.0
    %2079 = vmatpush1.xpose.msra.mxu0 0.0
    %2080 = vmatprep.subr.mxu0 0.0
    %2081 = vmatpush1.xpose.msra.mxu0 0.0
    %2082 = vmatprep.subr.mxu0 0.0
    %2083 = vmatpush1.xpose.msra.mxu0 0.0
    %2084 = vmatprep.subr.mxu0 0.0
    %2085 = vmatpush1.xpose.msra.mxu0 0.0
    %2086 = vmatprep.subr.mxu0 0.0
    %2087 = vmatpush1.xpose.msra.mxu0 0.0
    %2088 = vmatprep.subr.mxu0 0.0
    %2089 = vmatpush1.xpose.msra.mxu0 0.0
    %2090 = vmatprep.subr.mxu0 0.0
    %2091 = vmatpush1.xpose.msra.mxu0 0.0
    %2092 = vmatprep.subr.mxu0 0.0
    %2093 = vmatpush1.xpose.msra.mxu0 0.0
    %2094 = vmatprep.subr.mxu0 0.0
    %2095 = vmatpush1.xpose.msra.mxu0 0.0
    %2096 = vmatprep.subr.mxu0 0.0
    %2097 = vmatpush1.xpose.msra.mxu0 0.0
    %2098 = vmatprep.subr.mxu0 0.0
    %2099 = vmatpush1.xpose.msra.mxu0 0.0
    %2100 = vmatprep.subr.mxu0 0.0
    %2101 = vmatpush1.xpose.msra.mxu0 0.0
    %2102 = vmatprep.subr.mxu0 0.0
    %2103 = vmatpush1.xpose.msra.mxu0 0.0
    %2104 = vmatprep.subr.mxu0 0.0
    %2105 = vmatpush1.xpose.msra.mxu0 0.0
    %2106 = vmatprep.subr.mxu0 0.0
    %2107 = vmatpush1.xpose.msra.mxu0 0.0
    %2108 = vmatprep.subr.mxu0 0.0
    %2109 = vmatpush1.xpose.msra.mxu0 0.0
    %2110 = vmatprep.subr.mxu0 0.0
    %2111 = vmatpush1.xpose.msra.mxu0 0.0
    %2112 = vmatprep.subr.mxu0 0.0
    %2113 = vmatpush1.xpose.msra.mxu0 0.0
    %2114 = vmatprep.mubr.f32.mxu0 0.0
    %2115 = vmatmul.mubr.f32.gmra.mrb[0].mxu0 %v1835
    %v2116 = vpop.f32.mrb[0].mxu0
    %v2117 = vadd.f32 0.0, %v2116
    %v2118 = vpop.f32.mrb[0].mxu0
    %2119 = vdwg.mxu0
    %2121 = vset.pattern.permute.xlu0 0
    %2122 = vperm.xlu0 %2121, %v1775
    %v2123 = vpop.permute.xlu0 %2122
    %2126 = vset.pattern.permute.xlu0 0
    %2127 = vperm.xlu0 %2126, %v1777
    %v2128 = vpop.permute.xlu0 %2127
    %2131 = vset.pattern.permute.xlu0 0
    %2132 = vperm.xlu0 %2131, %v1786
    %v2133 = vpop.permute.xlu0 %2132
    %2136 = vset.pattern.permute.xlu0 0
    %2137 = vperm.xlu0 %2136, %v1788
    %v2138 = vpop.permute.xlu0 %2137
    %2141 = vset.pattern.permute.xlu0 0
    %2142 = vperm.xlu0 %2141, %v1797
    %v2143 = vpop.permute.xlu0 %2142
    %2146 = vset.pattern.permute.xlu0 0
    %2147 = vperm.xlu0 %2146, %v1799
    %v2148 = vpop.permute.xlu0 %2147
    %2151 = vset.pattern.permute.xlu0 0
    %2152 = vperm.xlu0 %2151, %v1808
    %v2153 = vpop.permute.xlu0 %2152
    %2156 = vset.pattern.permute.xlu0 0
    %2157 = vperm.xlu0 %2156, %v1810
    %v2158 = vpop.permute.xlu0 %2157
    %v2160 = vlaneseq
    %v2161 = vshrl.u32 %v2160, 7
    %v2162 = vsub.s32 0, %v2161
    %v2163 = vrot.slane %v1907, %v2162
    %v2164 = vlaneseq
    %v2165 = vshrl.u32 %v2164, 7
    %v2166 = vsub.s32 0, %v2165
    %v2167 = vrot.slane %v1977, %v2166
    %v2168 = vlaneseq
    %v2169 = vshrl.u32 %v2168, 7
    %v2170 = vsub.s32 0, %v2169
    %v2171 = vrot.slane %v2047, %v2170
    %v2172 = vlaneseq
    %v2173 = vshrl.u32 %v2172, 7
    %v2174 = vsub.s32 0, %v2173
    %v2175 = vrot.slane %v2117, %v2174
    %v2176 = vadd.f32 %v2123, %v2163
    %v2177 = vadd.f32 %v2128, %v2163
    %v2178 = vadd.f32 %v2133, %v2167
    %v2179 = vadd.f32 %v2138, %v2167
    %v2180 = vadd.f32 %v2143, %v2171
    %v2181 = vadd.f32 %v2148, %v2171
    %v2182 = vadd.f32 %v2153, %v2175
    %v2183 = vadd.f32 %v2158, %v2175
    %vm2184 = vcmp.gt.f32.partialorder %v2176, 0.0
    %vm2185 = vcmp.gt.f32.partialorder %v2177, 0.0
    %vm2186 = vcmp.gt.f32.partialorder %v2178, 0.0
    %vm2187 = vcmp.gt.f32.partialorder %v2179, 0.0
    %vm2188 = vcmp.gt.f32.partialorder %v2180, 0.0
    %vm2189 = vcmp.gt.f32.partialorder %v2181, 0.0
    %vm2190 = vcmp.gt.f32.partialorder %v2182, 0.0
    %vm2191 = vcmp.gt.f32.partialorder %v2183, 0.0
    %v2192 = vmul.f32 %v2176, 0.2
    %v2193 = vmul.f32 %v2177, 0.2
    %v2194 = vmul.f32 %v2178, 0.2
    %v2195 = vmul.f32 %v2179, 0.2
    %v2196 = vmul.f32 %v2180, 0.2
    %v2197 = vmul.f32 %v2181, 0.2
    %v2198 = vmul.f32 %v2182, 0.2
    %v2199 = vmul.f32 %v2183, 0.2
    %v2200 = vsel %vm2184, %v2176, %v2192
    %v2201 = vsel %vm2185, %v2177, %v2193
    %v2202 = vsel %vm2186, %v2178, %v2194
    %v2203 = vsel %vm2187, %v2179, %v2195
    %v2204 = vsel %vm2188, %v2180, %v2196
    %v2205 = vsel %vm2189, %v2181, %v2197
    %v2206 = vsel %vm2190, %v2182, %v2198
    %v2207 = vsel %vm2191, %v2183, %v2199
    %v2208 = vsel %vm943, %v2200, -1e+30
    %v2209 = vsel %vm944, %v2201, -1e+30
    %v2210 = vsel %vm943, %v2202, -1e+30
    %v2211 = vsel %vm944, %v2203, -1e+30
    %v2212 = vsel %vm943, %v2204, -1e+30
    %v2213 = vsel %vm944, %v2205, -1e+30
    %v2214 = vsel %vm943, %v2206, -1e+30
    %v2215 = vsel %vm944, %v2207, -1e+30
    %v2216 = vsel %vm129, %v2208, -inf
    %2217 = vmax.xlane.f32.xlu0 %v2216
    %v2218 = vpop.xlane.xlu0 %2217
    %v2219 = vsel %vm129, %v2209, -inf
    %2220 = vmax.xlane.f32.xlu0 %v2219
    %v2221 = vpop.xlane.xlu0 %2220
    %v2222 = vsel %vm129, %v2210, -inf
    %2223 = vmax.xlane.f32.xlu0 %v2222
    %v2224 = vpop.xlane.xlu0 %2223
    %v2225 = vsel %vm129, %v2211, -inf
    %2226 = vmax.xlane.f32.xlu0 %v2225
    %v2227 = vpop.xlane.xlu0 %2226
    %v2228 = vsel %vm129, %v2212, -inf
    %2229 = vmax.xlane.f32.xlu0 %v2228
    %v2230 = vpop.xlane.xlu0 %2229
    %v2231 = vsel %vm129, %v2213, -inf
    %2232 = vmax.xlane.f32.xlu0 %v2231
    %v2233 = vpop.xlane.xlu0 %2232
    %v2234 = vsel %vm129, %v2214, -inf
    %2235 = vmax.xlane.f32.xlu0 %v2234
    %v2236 = vpop.xlane.xlu0 %2235
    %v2237 = vsel %vm129, %v2215, -inf
    %2238 = vmax.xlane.f32.xlu0 %v2237
    %v2239 = vpop.xlane.xlu0 %2238
    %v2240 = vsub.f32 %v2208, %v2218
    %v2241 = vsub.f32 %v2209, %v2221
    %v2242 = vsub.f32 %v2210, %v2224
    %v2243 = vsub.f32 %v2211, %v2227
    %v2244 = vsub.f32 %v2212, %v2230
    %v2245 = vsub.f32 %v2213, %v2233
    %v2246 = vsub.f32 %v2214, %v2236
    %v2247 = vsub.f32 %v2215, %v2239
    %v2248 = vmul.f32 %v2240, 1.442695
    %v2249 = vpow.pop %v2248
    %v2250 = vmul.f32 %v2241, 1.442695
    %v2251 = vpow.pop %v2250
    %v2252 = vmul.f32 %v2242, 1.442695
    %v2253 = vpow.pop %v2252
    %v2254 = vmul.f32 %v2243, 1.442695
    %v2255 = vpow.pop %v2254
    %v2256 = vmul.f32 %v2244, 1.442695
    %v2257 = vpow.pop %v2256
    %v2258 = vmul.f32 %v2245, 1.442695
    %v2259 = vpow.pop %v2258
    %v2260 = vmul.f32 %v2246, 1.442695
    %v2261 = vpow.pop %v2260
    %v2262 = vmul.f32 %v2247, 1.442695
    %v2263 = vpow.pop %v2262
    %v2264 = vsel %vm129, %v2249, 0.0
    %2265 = vadd.xlane.f32.xlu0 %v2264
    %v2266 = vpop.xlane.xlu0 %2265
    %v2267 = vsel %vm129, %v2251, 0.0
    %2268 = vadd.xlane.f32.xlu0 %v2267
    %v2269 = vpop.xlane.xlu0 %2268
    %v2270 = vsel %vm129, %v2253, 0.0
    %2271 = vadd.xlane.f32.xlu0 %v2270
    %v2272 = vpop.xlane.xlu0 %2271
    %v2273 = vsel %vm129, %v2255, 0.0
    %2274 = vadd.xlane.f32.xlu0 %v2273
    %v2275 = vpop.xlane.xlu0 %2274
    %v2276 = vsel %vm129, %v2257, 0.0
    %2277 = vadd.xlane.f32.xlu0 %v2276
    %v2278 = vpop.xlane.xlu0 %2277
    %v2279 = vsel %vm129, %v2259, 0.0
    %2280 = vadd.xlane.f32.xlu0 %v2279
    %v2281 = vpop.xlane.xlu0 %2280
    %v2282 = vsel %vm129, %v2261, 0.0
    %2283 = vadd.xlane.f32.xlu0 %v2282
    %v2284 = vpop.xlane.xlu0 %2283
    %v2285 = vsel %vm129, %v2263, 0.0
    %2286 = vadd.xlane.f32.xlu0 %v2285
    %v2287 = vpop.xlane.xlu0 %2286
    %v2288 = vrcp.pop %v2266
    %v2289 = vmul.f32 %v2249, %v2288
    %v2290 = vrcp.pop %v2269
    %v2291 = vmul.f32 %v2251, %v2290
    %v2292 = vrcp.pop %v2272
    %v2293 = vmul.f32 %v2253, %v2292
    %v2294 = vrcp.pop %v2275
    %v2295 = vmul.f32 %v2255, %v2294
    %v2296 = vrcp.pop %v2278
    %v2297 = vmul.f32 %v2257, %v2296
    %v2298 = vrcp.pop %v2281
    %v2299 = vmul.f32 %v2259, %v2298
    %v2300 = vrcp.pop %v2284
    %v2301 = vmul.f32 %v2261, %v2300
    %v2302 = vrcp.pop %v2287
    %v2303 = vmul.f32 %v2263, %v2302
    %v2305 = vsel %vm129, %v2289, 0
    %v2308 = vsel %vm129, %v2291, 0
    %2310 = vmatprep.subr.mxu0 0.0
    %2311 = vmatpush1.msra.mxu0 %v1509
    %2312 = vmatprep.subr.mxu0 0.0
    %2313 = vmatpush1.msra.mxu0 %v1514
    %2314 = vmatprep.subr.mxu0 0.0
    %2315 = vmatpush1.msra.mxu0 0.0
    %2316 = vmatprep.subr.mxu0 0.0
    %2317 = vmatpush1.msra.mxu0 0.0
    %2318 = vmatprep.subr.mxu0 0.0
    %2319 = vmatpush1.msra.mxu0 0.0
    %2320 = vmatprep.subr.mxu0 0.0
    %2321 = vmatpush1.msra.mxu0 0.0
    %2322 = vmatprep.subr.mxu0 0.0
    %2323 = vmatpush1.msra.mxu0 0.0
    %2324 = vmatprep.subr.mxu0 0.0
    %2325 = vmatpush1.msra.mxu0 0.0
    %2326 = vmatprep.subr.mxu0 0.0
    %2327 = vmatpush1.msra.mxu0 0.0
    %2328 = vmatprep.subr.mxu0 0.0
    %2329 = vmatpush1.msra.mxu0 0.0
    %2330 = vmatprep.subr.mxu0 0.0
    %2331 = vmatpush1.msra.mxu0 0.0
    %2332 = vmatprep.subr.mxu0 0.0
    %2333 = vmatpush1.msra.mxu0 0.0
    %2334 = vmatprep.subr.mxu0 0.0
    %2335 = vmatpush1.msra.mxu0 0.0
    %2336 = vmatprep.subr.mxu0 0.0
    %2337 = vmatpush1.msra.mxu0 0.0
    %2338 = vmatprep.subr.mxu0 0.0
    %2339 = vmatpush1.msra.mxu0 0.0
    %2340 = vmatprep.subr.mxu0 0.0
    %2341 = vmatpush1.msra.mxu0 0.0
    %2342 = vmatprep.subr.mxu0 0.0
    %2343 = vmatpush1.msra.mxu0 0.0
    %2344 = vmatprep.subr.mxu0 0.0
    %2345 = vmatpush1.msra.mxu0 0.0
    %2346 = vmatprep.subr.mxu0 0.0
    %2347 = vmatpush1.msra.mxu0 0.0
    %2348 = vmatprep.subr.mxu0 0.0
    %2349 = vmatpush1.msra.mxu0 0.0
    %2350 = vmatprep.subr.mxu0 0.0
    %2351 = vmatpush1.msra.mxu0 0.0
    %2352 = vmatprep.subr.mxu0 0.0
    %2353 = vmatpush1.msra.mxu0 0.0
    %2354 = vmatprep.subr.mxu0 0.0
    %2355 = vmatpush1.msra.mxu0 0.0
    %2356 = vmatprep.subr.mxu0 0.0
    %2357 = vmatpush1.msra.mxu0 0.0
    %2358 = vmatprep.subr.mxu0 0.0
    %2359 = vmatpush1.msra.mxu0 0.0
    %2360 = vmatprep.subr.mxu0 0.0
    %2361 = vmatpush1.msra.mxu0 0.0
    %2362 = vmatprep.subr.mxu0 0.0
    %2363 = vmatpush1.msra.mxu0 0.0
    %2364 = vmatprep.subr.mxu0 0.0
    %2365 = vmatpush1.msra.mxu0 0.0
    %2366 = vmatprep.subr.mxu0 0.0
    %2367 = vmatpush1.msra.mxu0 0.0
    %2368 = vmatprep.subr.mxu0 0.0
    %2369 = vmatpush1.msra.mxu0 0.0
    %2370 = vmatprep.subr.mxu0 0.0
    %2371 = vmatpush1.msra.mxu0 0.0
    %2372 = vmatprep.subr.mxu0 0.0
    %2373 = vmatpush1.msra.mxu0 0.0
    %2374 = vmatprep.mubr.f32.mxu0 0.0
    %2375 = vmatmul.mubr.f32.gmra.mrb[0].mxu0 %v2305
    %v2376 = vpop.f32.mrb[0].mxu0
    %v2377 = vadd.f32 0.0, %v2376
    %v2378 = vpop.f32.mrb[0].mxu0
    %2379 = vmatprep.mubr.f32.mxu0 0.0
    %2380 = vmatmul.mubr.f32.gmra.mrb[0].mxu0 %v2308
    %v2381 = vpop.f32.mrb[0].mxu0
    %v2382 = vadd.f32 0.0, %v2381
    %v2383 = vpop.f32.mrb[0].mxu0
    %2384 = vdwg.mxu0
    %v2386 = vsel %vm129, %v2293, 0
    %v2389 = vsel %vm129, %v2295, 0
    %2391 = vmatprep.subr.mxu0 0.0
    %2392 = vmatpush1.msra.mxu0 %v1584
    %2393 = vmatprep.subr.mxu0 0.0
    %2394 = vmatpush1.msra.mxu0 %v1589
    %2395 = vmatprep.subr.mxu0 0.0
    %2396 = vmatpush1.msra.mxu0 0.0
    %2397 = vmatprep.subr.mxu0 0.0
    %2398 = vmatpush1.msra.mxu0 0.0
    %2399 = vmatprep.subr.mxu0 0.0
    %2400 = vmatpush1.msra.mxu0 0.0
    %2401 = vmatprep.subr.mxu0 0.0
    %2402 = vmatpush1.msra.mxu0 0.0
    %2403 = vmatprep.subr.mxu0 0.0
    %2404 = vmatpush1.msra.mxu0 0.0
    %2405 = vmatprep.subr.mxu0 0.0
    %2406 = vmatpush1.msra.mxu0 0.0
    %2407 = vmatprep.subr.mxu0 0.0
    %2408 = vmatpush1.msra.mxu0 0.0
    %2409 = vmatprep.subr.mxu0 0.0
    %2410 = vmatpush1.msra.mxu0 0.0
    %2411 = vmatprep.subr.mxu0 0.0
    %2412 = vmatpush1.msra.mxu0 0.0
    %2413 = vmatprep.subr.mxu0 0.0
    %2414 = vmatpush1.msra.mxu0 0.0
    %2415 = vmatprep.subr.mxu0 0.0
    %2416 = vmatpush1.msra.mxu0 0.0
    %2417 = vmatprep.subr.mxu0 0.0
    %2418 = vmatpush1.msra.mxu0 0.0
    %2419 = vmatprep.subr.mxu0 0.0
    %2420 = vmatpush1.msra.mxu0 0.0
    %2421 = vmatprep.subr.mxu0 0.0
    %2422 = vmatpush1.msra.mxu0 0.0
    %2423 = vmatprep.subr.mxu0 0.0
    %2424 = vmatpush1.msra.mxu0 0.0
    %2425 = vmatprep.subr.mxu0 0.0
    %2426 = vmatpush1.msra.mxu0 0.0
    %2427 = vmatprep.subr.mxu0 0.0
    %2428 = vmatpush1.msra.mxu0 0.0
    %2429 = vmatprep.subr.mxu0 0.0
    %2430 = vmatpush1.msra.mxu0 0.0
    %2431 = vmatprep.subr.mxu0 0.0
    %2432 = vmatpush1.msra.mxu0 0.0
    %2433 = vmatprep.subr.mxu0 0.0
    %2434 = vmatpush1.msra.mxu0 0.0
    %2435 = vmatprep.subr.mxu0 0.0
    %2436 = vmatpush1.msra.mxu0 0.0
    %2437 = vmatprep.subr.mxu0 0.0
    %2438 = vmatpush1.msra.mxu0 0.0
    %2439 = vmatprep.subr.mxu0 0.0
    %2440 = vmatpush1.msra.mxu0 0.0
    %2441 = vmatprep.subr.mxu0 0.0
    %2442 = vmatpush1.msra.mxu0 0.0
    %2443 = vmatprep.subr.mxu0 0.0
    %2444 = vmatpush1.msra.mxu0 0.0
    %2445 = vmatprep.subr.mxu0 0.0
    %2446 = vmatpush1.msra.mxu0 0.0
    %2447 = vmatprep.subr.mxu0 0.0
    %2448 = vmatpush1.msra.mxu0 0.0
    %2449 = vmatprep.subr.mxu0 0.0
    %2450 = vmatpush1.msra.mxu0 0.0
    %2451 = vmatprep.subr.mxu0 0.0
    %2452 = vmatpush1.msra.mxu0 0.0
    %2453 = vmatprep.subr.mxu0 0.0
    %2454 = vmatpush1.msra.mxu0 0.0
    %2455 = vmatprep.mubr.f32.mxu0 0.0
    %2456 = vmatmul.mubr.f32.gmra.mrb[0].mxu0 %v2386
    %v2457 = vpop.f32.mrb[0].mxu0
    %v2458 = vadd.f32 0.0, %v2457
    %v2459 = vpop.f32.mrb[0].mxu0
    %2460 = vmatprep.mubr.f32.mxu0 0.0
    %2461 = vmatmul.mubr.f32.gmra.mrb[0].mxu0 %v2389
    %v2462 = vpop.f32.mrb[0].mxu0
    %v2463 = vadd.f32 0.0, %v2462
    %v2464 = vpop.f32.mrb[0].mxu0
    %2465 = vdwg.mxu0
    %v2467 = vsel %vm129, %v2297, 0
    %v2470 = vsel %vm129, %v2299, 0
    %2472 = vmatprep.subr.mxu0 0.0
    %2473 = vmatpush1.msra.mxu0 %v1659
    %2474 = vmatprep.subr.mxu0 0.0
    %2475 = vmatpush1.msra.mxu0 %v1664
    %2476 = vmatprep.subr.mxu0 0.0
    %2477 = vmatpush1.msra.mxu0 0.0
    %2478 = vmatprep.subr.mxu0 0.0
    %2479 = vmatpush1.msra.mxu0 0.0
    %2480 = vmatprep.subr.mxu0 0.0
    %2481 = vmatpush1.msra.mxu0 0.0
    %2482 = vmatprep.subr.mxu0 0.0
    %2483 = vmatpush1.msra.mxu0 0.0
    %2484 = vmatprep.subr.mxu0 0.0
    %2485 = vmatpush1.msra.mxu0 0.0
    %2486 = vmatprep.subr.mxu0 0.0
    %2487 = vmatpush1.msra.mxu0 0.0
    %2488 = vmatprep.subr.mxu0 0.0
    %2489 = vmatpush1.msra.mxu0 0.0
    %2490 = vmatprep.subr.mxu0 0.0
    %2491 = vmatpush1.msra.mxu0 0.0
    %2492 = vmatprep.subr.mxu0 0.0
    %2493 = vmatpush1.msra.mxu0 0.0
    %2494 = vmatprep.subr.mxu0 0.0
    %2495 = vmatpush1.msra.mxu0 0.0
    %2496 = vmatprep.subr.mxu0 0.0
    %2497 = vmatpush1.msra.mxu0 0.0
    %2498 = vmatprep.subr.mxu0 0.0
    %2499 = vmatpush1.msra.mxu0 0.0
    %2500 = vmatprep.subr.mxu0 0.0
    %2501 = vmatpush1.msra.mxu0 0.0
    %2502 = vmatprep.subr.mxu0 0.0
    %2503 = vmatpush1.msra.mxu0 0.0
    %2504 = vmatprep.subr.mxu0 0.0
    %2505 = vmatpush1.msra.mxu0 0.0
    %2506 = vmatprep.subr.mxu0 0.0
    %2507 = vmatpush1.msra.mxu0 0.0
    %2508 = vmatprep.subr.mxu0 0.0
    %2509 = vmatpush1.msra.mxu0 0.0
    %2510 = vmatprep.subr.mxu0 0.0
    %2511 = vmatpush1.msra.mxu0 0.0
    %2512 = vmatprep.subr.mxu0 0.0
    %2513 = vmatpush1.msra.mxu0 0.0
    %2514 = vmatprep.subr.mxu0 0.0
    %2515 = vmatpush1.msra.mxu0 0.0
    %2516 = vmatprep.subr.mxu0 0.0
    %2517 = vmatpush1.msra.mxu0 0.0
    %2518 = vmatprep.subr.mxu0 0.0
    %2519 = vmatpush1.msra.mxu0 0.0
    %2520 = vmatprep.subr.mxu0 0.0
    %2521 = vmatpush1.msra.mxu0 0.0
    %2522 = vmatprep.subr.mxu0 0.0
    %2523 = vmatpush1.msra.mxu0 0.0
    %2524 = vmatprep.subr.mxu0 0.0
    %2525 = vmatpush1.msra.mxu0 0.0
    %2526 = vmatprep.subr.mxu0 0.0
    %2527 = vmatpush1.msra.mxu0 0.0
    %2528 = vmatprep.subr.mxu0 0.0
    %2529 = vmatpush1.msra.mxu0 0.0
    %2530 = vmatprep.subr.mxu0 0.0
    %2531 = vmatpush1.msra.mxu0 0.0
    %2532 = vmatprep.subr.mxu0 0.0
    %2533 = vmatpush1.msra.mxu0 0.0
    %2534 = vmatprep.subr.mxu0 0.0
    %2535 = vmatpush1.msra.mxu0 0.0
    %2536 = vmatprep.mubr.f32.mxu0 0.0
    %2537 = vmatmul.mubr.f32.gmra.mrb[0].mxu0 %v2467
    %v2538 = vpop.f32.mrb[0].mxu0
    %v2539 = vadd.f32 0.0, %v2538
    %v2540 = vpop.f32.mrb[0].mxu0
    %2541 = vmatprep.mubr.f32.mxu0 0.0
    %2542 = vmatmul.mubr.f32.gmra.mrb[0].mxu0 %v2470
    %v2543 = vpop.f32.mrb[0].mxu0
    %v2544 = vadd.f32 0.0, %v2543
    %v2545 = vpop.f32.mrb[0].mxu0
    %2546 = vdwg.mxu0
    %v2548 = vsel %vm129, %v2301, 0
    %v2551 = vsel %vm129, %v2303, 0
    %2553 = vmatprep.subr.mxu0 0.0
    %2554 = vmatpush1.msra.mxu0 %v1734
    %2555 = vmatprep.subr.mxu0 0.0
    %2556 = vmatpush1.msra.mxu0 %v1739
    %2557 = vmatprep.subr.mxu0 0.0
    %2558 = vmatpush1.msra.mxu0 0.0
    %2559 = vmatprep.subr.mxu0 0.0
    %2560 = vmatpush1.msra.mxu0 0.0
    %2561 = vmatprep.subr.mxu0 0.0
    %2562 = vmatpush1.msra.mxu0 0.0
    %2563 = vmatprep.subr.mxu0 0.0
    %2564 = vmatpush1.msra.mxu0 0.0
    %2565 = vmatprep.subr.mxu0 0.0
    %2566 = vmatpush1.msra.mxu0 0.0
    %2567 = vmatprep.subr.mxu0 0.0
    %2568 = vmatpush1.msra.mxu0 0.0
    %2569 = vmatprep.subr.mxu0 0.0
    %2570 = vmatpush1.msra.mxu0 0.0
    %2571 = vmatprep.subr.mxu0 0.0
    %2572 = vmatpush1.msra.mxu0 0.0
    %2573 = vmatprep.subr.mxu0 0.0
    %2574 = vmatpush1.msra.mxu0 0.0
    %2575 = vmatprep.subr.mxu0 0.0
    %2576 = vmatpush1.msra.mxu0 0.0
    %2577 = vmatprep.subr.mxu0 0.0
    %2578 = vmatpush1.msra.mxu0 0.0
    %2579 = vmatprep.subr.mxu0 0.0
    %2580 = vmatpush1.msra.mxu0 0.0
    %2581 = vmatprep.subr.mxu0 0.0
    %2582 = vmatpush1.msra.mxu0 0.0
    %2583 = vmatprep.subr.mxu0 0.0
    %2584 = vmatpush1.msra.mxu0 0.0
    %2585 = vmatprep.subr.mxu0 0.0
    %2586 = vmatpush1.msra.mxu0 0.0
    %2587 = vmatprep.subr.mxu0 0.0
    %2588 = vmatpush1.msra.mxu0 0.0
    %2589 = vmatprep.subr.mxu0 0.0
    %2590 = vmatpush1.msra.mxu0 0.0
    %2591 = vmatprep.subr.mxu0 0.0
    %2592 = vmatpush1.msra.mxu0 0.0
    %2593 = vmatprep.subr.mxu0 0.0
    %2594 = vmatpush1.msra.mxu0 0.0
    %2595 = vmatprep.subr.mxu0 0.0
    %2596 = vmatpush1.msra.mxu0 0.0
    %2597 = vmatprep.subr.mxu0 0.0
    %2598 = vmatpush1.msra.mxu0 0.0
    %2599 = vmatprep.subr.mxu0 0.0
    %2600 = vmatpush1.msra.mxu0 0.0
    %2601 = vmatprep.subr.mxu0 0.0
    %2602 = vmatpush1.msra.mxu0 0.0
    %2603 = vmatprep.subr.mxu0 0.0
    %2604 = vmatpush1.msra.mxu0 0.0
    %2605 = vmatprep.subr.mxu0 0.0
    %2606 = vmatpush1.msra.mxu0 0.0
    %2607 = vmatprep.subr.mxu0 0.0
    %2608 = vmatpush1.msra.mxu0 0.0
    %2609 = vmatprep.subr.mxu0 0.0
    %2610 = vmatpush1.msra.mxu0 0.0
    %2611 = vmatprep.subr.mxu0 0.0
    %2612 = vmatpush1.msra.mxu0 0.0
    %2613 = vmatprep.subr.mxu0 0.0
    %2614 = vmatpush1.msra.mxu0 0.0
    %2615 = vmatprep.subr.mxu0 0.0
    %2616 = vmatpush1.msra.mxu0 0.0
    %2617 = vmatprep.mubr.f32.mxu0 0.0
    %2618 = vmatmul.mubr.f32.gmra.mrb[0].mxu0 %v2548
    %v2619 = vpop.f32.mrb[0].mxu0
    %v2620 = vadd.f32 0.0, %v2619
    %v2621 = vpop.f32.mrb[0].mxu0
    %2622 = vmatprep.mubr.f32.mxu0 0.0
    %2623 = vmatmul.mubr.f32.gmra.mrb[0].mxu0 %v2551
    %v2624 = vpop.f32.mrb[0].mxu0
    %v2625 = vadd.f32 0.0, %v2624
    %v2626 = vpop.f32.mrb[0].mxu0
    %2627 = vdwg.mxu0
    %v2628 = vadd.f32 %v2377, %v2458
    %v2629 = vadd.f32 %v2628, %v2539
    %v2630 = vadd.f32 %v2629, %v2620
    %v2631 = vadd.f32 %v2382, %v2463
    %v2632 = vadd.f32 %v2631, %v2544
    %v2633 = vadd.f32 %v2632, %v2625
    %v2634 = vmul.f32 %v2630, 0.25
    %v2635 = vmul.f32 %v2633, 0.25
    %v2637 = vlaneseq
    %v2638 = vshrl.u32 %v2637, 7
    %v2639 = vsub.s32 0, %v2638
    %v2640 = vrot.slane %v1435, %v2639
    %v2642 = vadd.f32 %v2634, %v2640
    %v2643 = vadd.f32 %v2635, %v2640
    %v2644 = vcombine.high %v2642, 0.0
    %v2646 = vunpack.c.l.s4 1983009808
    %v2647 = vunpack.c.0.s8 %v2646
    %v2648 = vlaneseq
    %v2649 = vshrl.u32 %v2648, 7
    %v2650 = vsub.s32 %v2647, %v2649
    %v2651 = vrot.slane %v2642, %v2650
    %v2653 = vunpack.c.l.s4 1983009808
    %v2654 = vunpack.c.0.s8 %v2653
    %v2655 = vlaneseq
    %v2656 = vshrl.u32 %v2655, 7
    %v2657 = vsub.s32 %v2654, %v2656
    %v2658 = vrot.slane %v2644, %v2657
    %v2659 = vcombine.high %v2643, 0.0
    %v2661 = vunpack.c.l.s4 1983009808
    %v2662 = vunpack.c.0.s8 %v2661
    %v2663 = vlaneseq
    %v2664 = vshrl.u32 %v2663, 7
    %v2665 = vsub.s32 %v2662, %v2664
    %v2666 = vrot.slane %v2643, %v2665
    %v2668 = vunpack.c.l.s4 1983009808
    %v2669 = vunpack.c.0.s8 %v2668
    %v2670 = vlaneseq
    %v2671 = vshrl.u32 %v2670, 7
    %v2672 = vsub.s32 %v2669, %v2671
    %v2673 = vrot.slane %v2659, %v2672
    %v2674 = vcombine.low %v2651, %v2666
    %v2675 = vcombine.high %v2651, %v2666
    %v2677 = vunpack.c.l.s4 1934713408
    %v2678 = vunpack.c.0.s8 %v2677
    %v2679 = vlaneseq
    %v2680 = vshrl.u32 %v2679, 7
    %v2681 = vsub.s32 %v2678, %v2680
    %v2682 = vrot.slane %v2674, %v2681
    %v2684 = vunpack.c.l.s4 1934713408
    %v2685 = vunpack.c.0.s8 %v2684
    %v2686 = vlaneseq
    %v2687 = vshrl.u32 %v2686, 7
    %v2688 = vsub.s32 %v2685, %v2687
    %v2689 = vrot.slane %v2675, %v2688
    %v2690 = vcombine.low %v2658, %v2673
    %v2691 = vcombine.high %v2658, %v2673
    %v2693 = vunpack.c.l.s4 1934713408
    %v2694 = vunpack.c.0.s8 %v2693
    %v2695 = vlaneseq
    %v2696 = vshrl.u32 %v2695, 7
    %v2697 = vsub.s32 %v2694, %v2696
    %v2698 = vrot.slane %v2690, %v2697
    %v2700 = vunpack.c.l.s4 1934713408
    %v2701 = vunpack.c.0.s8 %v2700
    %v2702 = vlaneseq
    %v2703 = vshrl.u32 %v2702, 7
    %v2704 = vsub.s32 %v2701, %v2703
    %v2705 = vrot.slane %v2691, %v2704
    %v2706 = vcombine.high %v2682, 0.0
    %v2707 = vcombine.high %v2689, 0.0
    %v2708 = vcombine.high %v2698, 0.0
    %v2709 = vcombine.high %v2705, 0.0
    %v2710 = vld [vmem:[%s10] sm:$0xff]
    %v2711 = vld [vmem:[%s10 + $0x8] sm:$0xff]
    %v2712 = vld [vmem:[%s10 + $0x10] sm:$0xff]
    %v2713 = vld [vmem:[%s10 + $0x18] sm:$0xff]
    %v2714 = vld [vmem:[%s10 + $0x20] sm:$0xff]
    %v2715 = vld [vmem:[%s10 + $0x28] sm:$0xff]
    %v2716 = vld [vmem:[%s10 + $0x30] sm:$0xff]
    %v2717 = vld [vmem:[%s10 + $0x38] sm:$0xff]
    %v2718 = vld [vmem:[%s10 + $0x40] sm:$0xff]
    %v2719 = vld [vmem:[%s10 + $0x48] sm:$0xff]
    %v2720 = vld [vmem:[%s10 + $0x50] sm:$0xff]
    %v2721 = vld [vmem:[%s10 + $0x58] sm:$0xff]
    %v2722 = vld [vmem:[%s10 + $0x60] sm:$0xff]
    %v2723 = vld [vmem:[%s10 + $0x68] sm:$0xff]
    %v2724 = vld [vmem:[%s10 + $0x70] sm:$0xff]
    %v2725 = vld [vmem:[%s10 + $0x78] sm:$0xff]
    %v2726 = vld [vmem:[%s10 + $0x80] sm:$0xff]
    %v2727 = vld [vmem:[%s10 + $0x88] sm:$0xff]
    %v2728 = vld [vmem:[%s10 + $0x90] sm:$0xff]
    %v2729 = vld [vmem:[%s10 + $0x98] sm:$0xff]
    %v2730 = vld [vmem:[%s10 + $0xa0] sm:$0xff]
    %v2731 = vld [vmem:[%s10 + $0xa8] sm:$0xff]
    %v2732 = vld [vmem:[%s10 + $0xb0] sm:$0xff]
    %v2733 = vld [vmem:[%s10 + $0xb8] sm:$0xff]
    %v2734 = vld [vmem:[%s10 + $0xc0] sm:$0xff]
    %v2735 = vld [vmem:[%s10 + $0xc8] sm:$0xff]
    %v2736 = vld [vmem:[%s10 + $0xd0] sm:$0xff]
    %v2737 = vld [vmem:[%s10 + $0xd8] sm:$0xff]
    %v2738 = vld [vmem:[%s10 + $0xe0] sm:$0xff]
    %v2739 = vld [vmem:[%s10 + $0xe8] sm:$0xff]
    %v2740 = vld [vmem:[%s10 + $0xf0] sm:$0xff]
    %v2741 = vld [vmem:[%s10 + $0xf8] sm:$0xff]
    %v2742 = vld [vmem:[%s10 + $0x100] sm:$0xff]
    %v2743 = vld [vmem:[%s10 + $0x108] sm:$0xff]
    %v2744 = vld [vmem:[%s10 + $0x110] sm:$0xff]
    %v2745 = vld [vmem:[%s10 + $0x118] sm:$0xff]
    %v2746 = vld [vmem:[%s10 + $0x120] sm:$0xff]
    %v2747 = vld [vmem:[%s10 + $0x128] sm:$0xff]
    %v2748 = vld [vmem:[%s10 + $0x130] sm:$0xff]
    %v2749 = vld [vmem:[%s10 + $0x138] sm:$0xff]
    %v2750 = vld [vmem:[%s10 + $0x140] sm:$0xff]
    %v2751 = vld [vmem:[%s10 + $0x148] sm:$0xff]
    %v2752 = vld [vmem:[%s10 + $0x150] sm:$0xff]
    %v2753 = vld [vmem:[%s10 + $0x158] sm:$0xff]
    %v2754 = vld [vmem:[%s10 + $0x160] sm:$0xff]
    %v2755 = vld [vmem:[%s10 + $0x168] sm:$0xff]
    %v2756 = vld [vmem:[%s10 + $0x170] sm:$0xff]
    %v2757 = vld [vmem:[%s10 + $0x178] sm:$0xff]
    %v2758 = vld [vmem:[%s10 + $0x180] sm:$0xff]
    %v2759 = vld [vmem:[%s10 + $0x188] sm:$0xff]
    %v2760 = vld [vmem:[%s10 + $0x190] sm:$0xff]
    %v2761 = vld [vmem:[%s10 + $0x198] sm:$0xff]
    %v2762 = vld [vmem:[%s10 + $0x1a0] sm:$0xff]
    %v2763 = vld [vmem:[%s10 + $0x1a8] sm:$0xff]
    %v2764 = vld [vmem:[%s10 + $0x1b0] sm:$0xff]
    %v2765 = vld [vmem:[%s10 + $0x1b8] sm:$0xff]
    %v2766 = vld [vmem:[%s10 + $0x1c0] sm:$0xff]
    %v2767 = vld [vmem:[%s10 + $0x1c8] sm:$0xff]
    %v2768 = vld [vmem:[%s10 + $0x1d0] sm:$0xff]
    %v2769 = vld [vmem:[%s10 + $0x1d8] sm:$0xff]
    %v2770 = vld [vmem:[%s10 + $0x1e0] sm:$0xff]
    %v2771 = vld [vmem:[%s10 + $0x1e8] sm:$0xff]
    %v2772 = vld [vmem:[%s10 + $0x1f0] sm:$0xff]
    %v2773 = vld [vmem:[%s10 + $0x1f8] sm:$0xff]
    %v2774 = vld [vmem:[%s10 + $0x200] sm:$0xff]
    %v2775 = vld [vmem:[%s10 + $0x208] sm:$0xff]
    %v2776 = vld [vmem:[%s10 + $0x210] sm:$0xff]
    %v2777 = vld [vmem:[%s10 + $0x218] sm:$0xff]
    %v2778 = vld [vmem:[%s10 + $0x220] sm:$0xff]
    %v2779 = vld [vmem:[%s10 + $0x228] sm:$0xff]
    %v2780 = vld [vmem:[%s10 + $0x230] sm:$0xff]
    %v2781 = vld [vmem:[%s10 + $0x238] sm:$0xff]
    %v2782 = vld [vmem:[%s10 + $0x240] sm:$0xff]
    %v2783 = vld [vmem:[%s10 + $0x248] sm:$0xff]
    %v2784 = vld [vmem:[%s10 + $0x250] sm:$0xff]
    %v2785 = vld [vmem:[%s10 + $0x258] sm:$0xff]
    %v2786 = vld [vmem:[%s10 + $0x260] sm:$0xff]
    %v2787 = vld [vmem:[%s10 + $0x268] sm:$0xff]
    %v2788 = vld [vmem:[%s10 + $0x270] sm:$0xff]
    %v2789 = vld [vmem:[%s10 + $0x278] sm:$0xff]
    %v2790 = vld [vmem:[%s10 + $0x280] sm:$0xff]
    %v2791 = vld [vmem:[%s10 + $0x288] sm:$0xff]
    %v2792 = vld [vmem:[%s10 + $0x290] sm:$0xff]
    %v2793 = vld [vmem:[%s10 + $0x298] sm:$0xff]
    %v2794 = vld [vmem:[%s10 + $0x2a0] sm:$0xff]
    %v2795 = vld [vmem:[%s10 + $0x2a8] sm:$0xff]
    %v2796 = vld [vmem:[%s10 + $0x2b0] sm:$0xff]
    %v2797 = vld [vmem:[%s10 + $0x2b8] sm:$0xff]
    %v2798 = vld [vmem:[%s10 + $0x2c0] sm:$0xff]
    %v2799 = vld [vmem:[%s10 + $0x2c8] sm:$0xff]
    %v2800 = vld [vmem:[%s10 + $0x2d0] sm:$0xff]
    %v2801 = vld [vmem:[%s10 + $0x2d8] sm:$0xff]
    %v2802 = vld [vmem:[%s10 + $0x2e0] sm:$0xff]
    %v2803 = vld [vmem:[%s10 + $0x2e8] sm:$0xff]
    %v2804 = vld [vmem:[%s10 + $0x2f0] sm:$0xff]
    %v2805 = vld [vmem:[%s10 + $0x2f8] sm:$0xff]
    %v2806 = vld [vmem:[%s10 + $0x300] sm:$0xff]
    %v2807 = vld [vmem:[%s10 + $0x308] sm:$0xff]
    %v2808 = vld [vmem:[%s10 + $0x310] sm:$0xff]
    %v2809 = vld [vmem:[%s10 + $0x318] sm:$0xff]
    %v2810 = vld [vmem:[%s10 + $0x320] sm:$0xff]
    %v2811 = vld [vmem:[%s10 + $0x328] sm:$0xff]
    %v2812 = vld [vmem:[%s10 + $0x330] sm:$0xff]
    %v2813 = vld [vmem:[%s10 + $0x338] sm:$0xff]
    %v2814 = vld [vmem:[%s10 + $0x340] sm:$0xff]
    %v2815 = vld [vmem:[%s10 + $0x348] sm:$0xff]
    %v2816 = vld [vmem:[%s10 + $0x350] sm:$0xff]
    %v2817 = vld [vmem:[%s10 + $0x358] sm:$0xff]
    %v2818 = vld [vmem:[%s10 + $0x360] sm:$0xff]
    %v2819 = vld [vmem:[%s10 + $0x368] sm:$0xff]
    %v2820 = vld [vmem:[%s10 + $0x370] sm:$0xff]
    %v2821 = vld [vmem:[%s10 + $0x378] sm:$0xff]
    %v2822 = vld [vmem:[%s10 + $0x380] sm:$0xff]
    %v2823 = vld [vmem:[%s10 + $0x388] sm:$0xff]
    %v2824 = vld [vmem:[%s10 + $0x390] sm:$0xff]
    %v2825 = vld [vmem:[%s10 + $0x398] sm:$0xff]
    %v2826 = vld [vmem:[%s10 + $0x3a0] sm:$0xff]
    %v2827 = vld [vmem:[%s10 + $0x3a8] sm:$0xff]
    %v2828 = vld [vmem:[%s10 + $0x3b0] sm:$0xff]
    %v2829 = vld [vmem:[%s10 + $0x3b8] sm:$0xff]
    %v2830 = vld [vmem:[%s10 + $0x3c0] sm:$0xff]
    %v2831 = vld [vmem:[%s10 + $0x3c8] sm:$0xff]
    %v2832 = vld [vmem:[%s10 + $0x3d0] sm:$0xff]
    %v2833 = vld [vmem:[%s10 + $0x3d8] sm:$0xff]
    %v2834 = vld [vmem:[%s10 + $0x3e0] sm:$0xff]
    %v2835 = vld [vmem:[%s10 + $0x3e8] sm:$0xff]
    %v2836 = vld [vmem:[%s10 + $0x3f0] sm:$0xff]
    %v2837 = vld [vmem:[%s10 + $0x3f8] sm:$0xff]
    %v2838 = vld [vmem:[%s11] sm:$0x1]
    %v2839 = vld [vmem:[%s11 + $0x1] sm:$0x1]
    %v2840 = vld [vmem:[%s11 + $0x2] sm:$0x1]
    %v2841 = vld [vmem:[%s11 + $0x3] sm:$0x1]
    %v2842 = vld [vmem:[%s11 + $0x4] sm:$0x1]
    %v2843 = vld [vmem:[%s11 + $0x5] sm:$0x1]
    %v2844 = vld [vmem:[%s11 + $0x6] sm:$0x1]
    %v2845 = vld [vmem:[%s11 + $0x7] sm:$0x1]
    %v2854 = vlaneseq
    %v2855 = vshrl.u32 %v2854, 7
    %v2856 = vsub.s32 0, %v2855
    %v2857 = vrot.slane %v2838, %v2856
    %v2858 = vlaneseq
    %v2859 = vshrl.u32 %v2858, 7
    %v2860 = vsub.s32 0, %v2859
    %v2861 = vrot.slane %v2839, %v2860
    %v2862 = vlaneseq
    %v2863 = vshrl.u32 %v2862, 7
    %v2864 = vsub.s32 0, %v2863
    %v2865 = vrot.slane %v2840, %v2864
    %v2866 = vlaneseq
    %v2867 = vshrl.u32 %v2866, 7
    %v2868 = vsub.s32 0, %v2867
    %v2869 = vrot.slane %v2841, %v2868
    %v2870 = vlaneseq
    %v2871 = vshrl.u32 %v2870, 7
    %v2872 = vsub.s32 0, %v2871
    %v2873 = vrot.slane %v2842, %v2872
    %v2874 = vlaneseq
    %v2875 = vshrl.u32 %v2874, 7
    %v2876 = vsub.s32 0, %v2875
    %v2877 = vrot.slane %v2843, %v2876
    %v2878 = vlaneseq
    %v2879 = vshrl.u32 %v2878, 7
    %v2880 = vsub.s32 0, %v2879
    %v2881 = vrot.slane %v2844, %v2880
    %v2882 = vlaneseq
    %v2883 = vshrl.u32 %v2882, 7
    %v2884 = vsub.s32 0, %v2883
    %v2885 = vrot.slane %v2845, %v2884
    %2894 = vmatprep.subr.mxu0 0.0
    %2895 = vmatpush1.msra.mxu0 %v2710
    %2896 = vmatprep.subr.mxu0 0.0
    %2897 = vmatpush1.msra.mxu0 %v2711
    %2898 = vmatprep.subr.mxu0 0.0
    %2899 = vmatpush1.msra.mxu0 %v2712
    %2900 = vmatprep.subr.mxu0 0.0
    %2901 = vmatpush1.msra.mxu0 %v2713
    %2902 = vmatprep.subr.mxu0 0.0
    %2903 = vmatpush1.msra.mxu0 %v2714
    %2904 = vmatprep.subr.mxu0 0.0
    %2905 = vmatpush1.msra.mxu0 %v2715
    %2906 = vmatprep.subr.mxu0 0.0
    %2907 = vmatpush1.msra.mxu0 %v2716
    %2908 = vmatprep.subr.mxu0 0.0
    %2909 = vmatpush1.msra.mxu0 %v2717
    %2910 = vmatprep.subr.mxu0 0.0
    %2911 = vmatpush1.msra.mxu0 %v2718
    %2912 = vmatprep.subr.mxu0 0.0
    %2913 = vmatpush1.msra.mxu0 %v2719
    %2914 = vmatprep.subr.mxu0 0.0
    %2915 = vmatpush1.msra.mxu0 %v2720
    %2916 = vmatprep.subr.mxu0 0.0
    %2917 = vmatpush1.msra.mxu0 %v2721
    %2918 = vmatprep.subr.mxu0 0.0
    %2919 = vmatpush1.msra.mxu0 %v2722
    %2920 = vmatprep.subr.mxu0 0.0
    %2921 = vmatpush1.msra.mxu0 %v2723
    %2922 = vmatprep.subr.mxu0 0.0
    %2923 = vmatpush1.msra.mxu0 %v2724
    %2924 = vmatprep.subr.mxu0 0.0
    %2925 = vmatpush1.msra.mxu0 %v2725
    %2926 = vmatprep.subr.mxu0 0.0
    %2927 = vmatpush1.msra.mxu0 0.0
    %2928 = vmatprep.subr.mxu0 0.0
    %2929 = vmatpush1.msra.mxu0 0.0
    %2930 = vmatprep.subr.mxu0 0.0
    %2931 = vmatpush1.msra.mxu0 0.0
    %2932 = vmatprep.subr.mxu0 0.0
    %2933 = vmatpush1.msra.mxu0 0.0
    %2934 = vmatprep.subr.mxu0 0.0
    %2935 = vmatpush1.msra.mxu0 0.0
    %2936 = vmatprep.subr.mxu0 0.0
    %2937 = vmatpush1.msra.mxu0 0.0
    %2938 = vmatprep.subr.mxu0 0.0
    %2939 = vmatpush1.msra.mxu0 0.0
    %2940 = vmatprep.subr.mxu0 0.0
    %2941 = vmatpush1.msra.mxu0 0.0
    %2942 = vmatprep.subr.mxu0 0.0
    %2943 = vmatpush1.msra.mxu0 0.0
    %2944 = vmatprep.subr.mxu0 0.0
    %2945 = vmatpush1.msra.mxu0 0.0
    %2946 = vmatprep.subr.mxu0 0.0
    %2947 = vmatpush1.msra.mxu0 0.0
    %2948 = vmatprep.subr.mxu0 0.0
    %2949 = vmatpush1.msra.mxu0 0.0
    %2950 = vmatprep.subr.mxu0 0.0
    %2951 = vmatpush1.msra.mxu0 0.0
    %2952 = vmatprep.subr.mxu0 0.0
    %2953 = vmatpush1.msra.mxu0 0.0
    %2954 = vmatprep.subr.mxu0 0.0
    %2955 = vmatpush1.msra.mxu0 0.0
    %2956 = vmatprep.subr.mxu0 0.0
    %2957 = vmatpush1.msra.mxu0 0.0
    %2958 = vmatprep.mubr.f32.mxu0 0.0
    %2959 = vmatmul.mubr.f32.gmra.mrb[0].mxu0 %v2682
    %v2960 = vpop.f32.mrb[0].mxu0
    %v2961 = vadd.f32 %v2857, %v2960
    %v2962 = vpop.f32.mrb[0].mxu0
    %2963 = vdwg.mxu0
    %2964 = vmatprep.subr.mxu0 0.0
    %2965 = vmatpush1.msra.mxu0 %v2726
    %2966 = vmatprep.subr.mxu0 0.0
    %2967 = vmatpush1.msra.mxu0 %v2727
    %2968 = vmatprep.subr.mxu0 0.0
    %2969 = vmatpush1.msra.mxu0 %v2728
    %2970 = vmatprep.subr.mxu0 0.0
    %2971 = vmatpush1.msra.mxu0 %v2729
    %2972 = vmatprep.subr.mxu0 0.0
    %2973 = vmatpush1.msra.mxu0 %v2730
    %2974 = vmatprep.subr.mxu0 0.0
    %2975 = vmatpush1.msra.mxu0 %v2731
    %2976 = vmatprep.subr.mxu0 0.0
    %2977 = vmatpush1.msra.mxu0 %v2732
    %2978 = vmatprep.subr.mxu0 0.0
    %2979 = vmatpush1.msra.mxu0 %v2733
    %2980 = vmatprep.subr.mxu0 0.0
    %2981 = vmatpush1.msra.mxu0 %v2734
    %2982 = vmatprep.subr.mxu0 0.0
    %2983 = vmatpush1.msra.mxu0 %v2735
    %2984 = vmatprep.subr.mxu0 0.0
    %2985 = vmatpush1.msra.mxu0 %v2736
    %2986 = vmatprep.subr.mxu0 0.0
    %2987 = vmatpush1.msra.mxu0 %v2737
    %2988 = vmatprep.subr.mxu0 0.0
    %2989 = vmatpush1.msra.mxu0 %v2738
    %2990 = vmatprep.subr.mxu0 0.0
    %2991 = vmatpush1.msra.mxu0 %v2739
    %2992 = vmatprep.subr.mxu0 0.0
    %2993 = vmatpush1.msra.mxu0 %v2740
    %2994 = vmatprep.subr.mxu0 0.0
    %2995 = vmatpush1.msra.mxu0 %v2741
    %2996 = vmatprep.subr.mxu0 0.0
    %2997 = vmatpush1.msra.mxu0 0.0
    %2998 = vmatprep.subr.mxu0 0.0
    %2999 = vmatpush1.msra.mxu0 0.0
    %3000 = vmatprep.subr.mxu0 0.0
    %3001 = vmatpush1.msra.mxu0 0.0
    %3002 = vmatprep.subr.mxu0 0.0
    %3003 = vmatpush1.msra.mxu0 0.0
    %3004 = vmatprep.subr.mxu0 0.0
    %3005 = vmatpush1.msra.mxu0 0.0
    %3006 = vmatprep.subr.mxu0 0.0
    %3007 = vmatpush1.msra.mxu0 0.0
    %3008 = vmatprep.subr.mxu0 0.0
    %3009 = vmatpush1.msra.mxu0 0.0
    %3010 = vmatprep.subr.mxu0 0.0
    %3011 = vmatpush1.msra.mxu0 0.0
    %3012 = vmatprep.subr.mxu0 0.0
    %3013 = vmatpush1.msra.mxu0 0.0
    %3014 = vmatprep.subr.mxu0 0.0
    %3015 = vmatpush1.msra.mxu0 0.0
    %3016 = vmatprep.subr.mxu0 0.0
    %3017 = vmatpush1.msra.mxu0 0.0
    %3018 = vmatprep.subr.mxu0 0.0
    %3019 = vmatpush1.msra.mxu0 0.0
    %3020 = vmatprep.subr.mxu0 0.0
    %3021 = vmatpush1.msra.mxu0 0.0
    %3022 = vmatprep.subr.mxu0 0.0
    %3023 = vmatpush1.msra.mxu0 0.0
    %3024 = vmatprep.subr.mxu0 0.0
    %3025 = vmatpush1.msra.mxu0 0.0
    %3026 = vmatprep.subr.mxu0 0.0
    %3027 = vmatpush1.msra.mxu0 0.0
    %3028 = vmatprep.mubr.f32.mxu0 0.0
    %3029 = vmatmul.mubr.f32.gmra.mrb[0].mxu0 %v2706
    %v3030 = vpop.f32.mrb[0].mxu0
    %v3031 = vadd.f32 %v2861, %v3030
    %v3032 = vpop.f32.mrb[0].mxu0
    %3033 = vdwg.mxu0
    %3034 = vmatprep.subr.mxu0 0.0
    %3035 = vmatpush1.msra.mxu0 %v2742
    %3036 = vmatprep.subr.mxu0 0.0
    %3037 = vmatpush1.msra.mxu0 %v2743
    %3038 = vmatprep.subr.mxu0 0.0
    %3039 = vmatpush1.msra.mxu0 %v2744
    %3040 = vmatprep.subr.mxu0 0.0
    %3041 = vmatpush1.msra.mxu0 %v2745
    %3042 = vmatprep.subr.mxu0 0.0
    %3043 = vmatpush1.msra.mxu0 %v2746
    %3044 = vmatprep.subr.mxu0 0.0
    %3045 = vmatpush1.msra.mxu0 %v2747
    %3046 = vmatprep.subr.mxu0 0.0
    %3047 = vmatpush1.msra.mxu0 %v2748
    %3048 = vmatprep.subr.mxu0 0.0
    %3049 = vmatpush1.msra.mxu0 %v2749
    %3050 = vmatprep.subr.mxu0 0.0
    %3051 = vmatpush1.msra.mxu0 %v2750
    %3052 = vmatprep.subr.mxu0 0.0
    %3053 = vmatpush1.msra.mxu0 %v2751
    %3054 = vmatprep.subr.mxu0 0.0
    %3055 = vmatpush1.msra.mxu0 %v2752
    %3056 = vmatprep.subr.mxu0 0.0
    %3057 = vmatpush1.msra.mxu0 %v2753
    %3058 = vmatprep.subr.mxu0 0.0
    %3059 = vmatpush1.msra.mxu0 %v2754
    %3060 = vmatprep.subr.mxu0 0.0
    %3061 = vmatpush1.msra.mxu0 %v2755
    %3062 = vmatprep.subr.mxu0 0.0
    %3063 = vmatpush1.msra.mxu0 %v2756
    %3064 = vmatprep.subr.mxu0 0.0
    %3065 = vmatpush1.msra.mxu0 %v2757
    %3066 = vmatprep.subr.mxu0 0.0
    %3067 = vmatpush1.msra.mxu0 0.0
    %3068 = vmatprep.subr.mxu0 0.0
    %3069 = vmatpush1.msra.mxu0 0.0
    %3070 = vmatprep.subr.mxu0 0.0
    %3071 = vmatpush1.msra.mxu0 0.0
    %3072 = vmatprep.subr.mxu0 0.0
    %3073 = vmatpush1.msra.mxu0 0.0
    %3074 = vmatprep.subr.mxu0 0.0
    %3075 = vmatpush1.msra.mxu0 0.0
    %3076 = vmatprep.subr.mxu0 0.0
    %3077 = vmatpush1.msra.mxu0 0.0
    %3078 = vmatprep.subr.mxu0 0.0
    %3079 = vmatpush1.msra.mxu0 0.0
    %3080 = vmatprep.subr.mxu0 0.0
    %3081 = vmatpush1.msra.mxu0 0.0
    %3082 = vmatprep.subr.mxu0 0.0
    %3083 = vmatpush1.msra.mxu0 0.0
    %3084 = vmatprep.subr.mxu0 0.0
    %3085 = vmatpush1.msra.mxu0 0.0
    %3086 = vmatprep.subr.mxu0 0.0
    %3087 = vmatpush1.msra.mxu0 0.0
    %3088 = vmatprep.subr.mxu0 0.0
    %3089 = vmatpush1.msra.mxu0 0.0
    %3090 = vmatprep.subr.mxu0 0.0
    %3091 = vmatpush1.msra.mxu0 0.0
    %3092 = vmatprep.subr.mxu0 0.0
    %3093 = vmatpush1.msra.mxu0 0.0
    %3094 = vmatprep.subr.mxu0 0.0
    %3095 = vmatpush1.msra.mxu0 0.0
    %3096 = vmatprep.subr.mxu0 0.0
    %3097 = vmatpush1.msra.mxu0 0.0
    %3098 = vmatprep.mubr.f32.mxu0 0.0
    %3099 = vmatmul.mubr.f32.gmra.mrb[0].mxu0 %v2689
    %v3100 = vpop.f32.mrb[0].mxu0
    %v3101 = vadd.f32 %v2865, %v3100
    %v3102 = vpop.f32.mrb[0].mxu0
    %3103 = vdwg.mxu0
    %3104 = vmatprep.subr.mxu0 0.0
    %3105 = vmatpush1.msra.mxu0 %v2758
    %3106 = vmatprep.subr.mxu0 0.0
    %3107 = vmatpush1.msra.mxu0 %v2759
    %3108 = vmatprep.subr.mxu0 0.0
    %3109 = vmatpush1.msra.mxu0 %v2760
    %3110 = vmatprep.subr.mxu0 0.0
    %3111 = vmatpush1.msra.mxu0 %v2761
    %3112 = vmatprep.subr.mxu0 0.0
    %3113 = vmatpush1.msra.mxu0 %v2762
    %3114 = vmatprep.subr.mxu0 0.0
    %3115 = vmatpush1.msra.mxu0 %v2763
    %3116 = vmatprep.subr.mxu0 0.0
    %3117 = vmatpush1.msra.mxu0 %v2764
    %3118 = vmatprep.subr.mxu0 0.0
    %3119 = vmatpush1.msra.mxu0 %v2765
    %3120 = vmatprep.subr.mxu0 0.0
    %3121 = vmatpush1.msra.mxu0 %v2766
    %3122 = vmatprep.subr.mxu0 0.0
    %3123 = vmatpush1.msra.mxu0 %v2767
    %3124 = vmatprep.subr.mxu0 0.0
    %3125 = vmatpush1.msra.mxu0 %v2768
    %3126 = vmatprep.subr.mxu0 0.0
    %3127 = vmatpush1.msra.mxu0 %v2769
    %3128 = vmatprep.subr.mxu0 0.0
    %3129 = vmatpush1.msra.mxu0 %v2770
    %3130 = vmatprep.subr.mxu0 0.0
    %3131 = vmatpush1.msra.mxu0 %v2771
    %3132 = vmatprep.subr.mxu0 0.0
    %3133 = vmatpush1.msra.mxu0 %v2772
    %3134 = vmatprep.subr.mxu0 0.0
    %3135 = vmatpush1.msra.mxu0 %v2773
    %3136 = vmatprep.subr.mxu0 0.0
    %3137 = vmatpush1.msra.mxu0 0.0
    %3138 = vmatprep.subr.mxu0 0.0
    %3139 = vmatpush1.msra.mxu0 0.0
    %3140 = vmatprep.subr.mxu0 0.0
    %3141 = vmatpush1.msra.mxu0 0.0
    %3142 = vmatprep.subr.mxu0 0.0
    %3143 = vmatpush1.msra.mxu0 0.0
    %3144 = vmatprep.subr.mxu0 0.0
    %3145 = vmatpush1.msra.mxu0 0.0
    %3146 = vmatprep.subr.mxu0 0.0
    %3147 = vmatpush1.msra.mxu0 0.0
    %3148 = vmatprep.subr.mxu0 0.0
    %3149 = vmatpush1.msra.mxu0 0.0
    %3150 = vmatprep.subr.mxu0 0.0
    %3151 = vmatpush1.msra.mxu0 0.0
    %3152 = vmatprep.subr.mxu0 0.0
    %3153 = vmatpush1.msra.mxu0 0.0
    %3154 = vmatprep.subr.mxu0 0.0
    %3155 = vmatpush1.msra.mxu0 0.0
    %3156 = vmatprep.subr.mxu0 0.0
    %3157 = vmatpush1.msra.mxu0 0.0
    %3158 = vmatprep.subr.mxu0 0.0
    %3159 = vmatpush1.msra.mxu0 0.0
    %3160 = vmatprep.subr.mxu0 0.0
    %3161 = vmatpush1.msra.mxu0 0.0
    %3162 = vmatprep.subr.mxu0 0.0
    %3163 = vmatpush1.msra.mxu0 0.0
    %3164 = vmatprep.subr.mxu0 0.0
    %3165 = vmatpush1.msra.mxu0 0.0
    %3166 = vmatprep.subr.mxu0 0.0
    %3167 = vmatpush1.msra.mxu0 0.0
    %3168 = vmatprep.mubr.f32.mxu0 0.0
    %3169 = vmatmul.mubr.f32.gmra.mrb[0].mxu0 %v2707
    %v3170 = vpop.f32.mrb[0].mxu0
    %v3171 = vadd.f32 %v2869, %v3170
    %v3172 = vpop.f32.mrb[0].mxu0
    %3173 = vdwg.mxu0
    %3174 = vmatprep.subr.mxu0 0.0
    %3175 = vmatpush1.msra.mxu0 %v2774
    %3176 = vmatprep.subr.mxu0 0.0
    %3177 = vmatpush1.msra.mxu0 %v2775
    %3178 = vmatprep.subr.mxu0 0.0
    %3179 = vmatpush1.msra.mxu0 %v2776
    %3180 = vmatprep.subr.mxu0 0.0
    %3181 = vmatpush1.msra.mxu0 %v2777
    %3182 = vmatprep.subr.mxu0 0.0
    %3183 = vmatpush1.msra.mxu0 %v2778
    %3184 = vmatprep.subr.mxu0 0.0
    %3185 = vmatpush1.msra.mxu0 %v2779
    %3186 = vmatprep.subr.mxu0 0.0
    %3187 = vmatpush1.msra.mxu0 %v2780
    %3188 = vmatprep.subr.mxu0 0.0
    %3189 = vmatpush1.msra.mxu0 %v2781
    %3190 = vmatprep.subr.mxu0 0.0
    %3191 = vmatpush1.msra.mxu0 %v2782
    %3192 = vmatprep.subr.mxu0 0.0
    %3193 = vmatpush1.msra.mxu0 %v2783
    %3194 = vmatprep.subr.mxu0 0.0
    %3195 = vmatpush1.msra.mxu0 %v2784
    %3196 = vmatprep.subr.mxu0 0.0
    %3197 = vmatpush1.msra.mxu0 %v2785
    %3198 = vmatprep.subr.mxu0 0.0
    %3199 = vmatpush1.msra.mxu0 %v2786
    %3200 = vmatprep.subr.mxu0 0.0
    %3201 = vmatpush1.msra.mxu0 %v2787
    %3202 = vmatprep.subr.mxu0 0.0
    %3203 = vmatpush1.msra.mxu0 %v2788
    %3204 = vmatprep.subr.mxu0 0.0
    %3205 = vmatpush1.msra.mxu0 %v2789
    %3206 = vmatprep.subr.mxu0 0.0
    %3207 = vmatpush1.msra.mxu0 0.0
    %3208 = vmatprep.subr.mxu0 0.0
    %3209 = vmatpush1.msra.mxu0 0.0
    %3210 = vmatprep.subr.mxu0 0.0
    %3211 = vmatpush1.msra.mxu0 0.0
    %3212 = vmatprep.subr.mxu0 0.0
    %3213 = vmatpush1.msra.mxu0 0.0
    %3214 = vmatprep.subr.mxu0 0.0
    %3215 = vmatpush1.msra.mxu0 0.0
    %3216 = vmatprep.subr.mxu0 0.0
    %3217 = vmatpush1.msra.mxu0 0.0
    %3218 = vmatprep.subr.mxu0 0.0
    %3219 = vmatpush1.msra.mxu0 0.0
    %3220 = vmatprep.subr.mxu0 0.0
    %3221 = vmatpush1.msra.mxu0 0.0
    %3222 = vmatprep.subr.mxu0 0.0
    %3223 = vmatpush1.msra.mxu0 0.0
    %3224 = vmatprep.subr.mxu0 0.0
    %3225 = vmatpush1.msra.mxu0 0.0
    %3226 = vmatprep.subr.mxu0 0.0
    %3227 = vmatpush1.msra.mxu0 0.0
    %3228 = vmatprep.subr.mxu0 0.0
    %3229 = vmatpush1.msra.mxu0 0.0
    %3230 = vmatprep.subr.mxu0 0.0
    %3231 = vmatpush1.msra.mxu0 0.0
    %3232 = vmatprep.subr.mxu0 0.0
    %3233 = vmatpush1.msra.mxu0 0.0
    %3234 = vmatprep.subr.mxu0 0.0
    %3235 = vmatpush1.msra.mxu0 0.0
    %3236 = vmatprep.subr.mxu0 0.0
    %3237 = vmatpush1.msra.mxu0 0.0
    %3238 = vmatprep.mubr.f32.mxu0 0.0
    %3239 = vmatmul.mubr.f32.gmra.mrb[0].mxu0 %v2698
    %v3240 = vpop.f32.mrb[0].mxu0
    %v3241 = vadd.f32 %v2873, %v3240
    %v3242 = vpop.f32.mrb[0].mxu0
    %3243 = vdwg.mxu0
    %3244 = vmatprep.subr.mxu0 0.0
    %3245 = vmatpush1.msra.mxu0 %v2790
    %3246 = vmatprep.subr.mxu0 0.0
    %3247 = vmatpush1.msra.mxu0 %v2791
    %3248 = vmatprep.subr.mxu0 0.0
    %3249 = vmatpush1.msra.mxu0 %v2792
    %3250 = vmatprep.subr.mxu0 0.0
    %3251 = vmatpush1.msra.mxu0 %v2793
    %3252 = vmatprep.subr.mxu0 0.0
    %3253 = vmatpush1.msra.mxu0 %v2794
    %3254 = vmatprep.subr.mxu0 0.0
    %3255 = vmatpush1.msra.mxu0 %v2795
    %3256 = vmatprep.subr.mxu0 0.0
    %3257 = vmatpush1.msra.mxu0 %v2796
    %3258 = vmatprep.subr.mxu0 0.0
    %3259 = vmatpush1.msra.mxu0 %v2797
    %3260 = vmatprep.subr.mxu0 0.0
    %3261 = vmatpush1.msra.mxu0 %v2798
    %3262 = vmatprep.subr.mxu0 0.0
    %3263 = vmatpush1.msra.mxu0 %v2799
    %3264 = vmatprep.subr.mxu0 0.0
    %3265 = vmatpush1.msra.mxu0 %v2800
    %3266 = vmatprep.subr.mxu0 0.0
    %3267 = vmatpush1.msra.mxu0 %v2801
    %3268 = vmatprep.subr.mxu0 0.0
    %3269 = vmatpush1.msra.mxu0 %v2802
    %3270 = vmatprep.subr.mxu0 0.0
    %3271 = vmatpush1.msra.mxu0 %v2803
    %3272 = vmatprep.subr.mxu0 0.0
    %3273 = vmatpush1.msra.mxu0 %v2804
    %3274 = vmatprep.subr.mxu0 0.0
    %3275 = vmatpush1.msra.mxu0 %v2805
    %3276 = vmatprep.subr.mxu0 0.0
    %3277 = vmatpush1.msra.mxu0 0.0
    %3278 = vmatprep.subr.mxu0 0.0
    %3279 = vmatpush1.msra.mxu0 0.0
    %3280 = vmatprep.subr.mxu0 0.0
    %3281 = vmatpush1.msra.mxu0 0.0
    %3282 = vmatprep.subr.mxu0 0.0
    %3283 = vmatpush1.msra.mxu0 0.0
    %3284 = vmatprep.subr.mxu0 0.0
    %3285 = vmatpush1.msra.mxu0 0.0
    %3286 = vmatprep.subr.mxu0 0.0
    %3287 = vmatpush1.msra.mxu0 0.0
    %3288 = vmatprep.subr.mxu0 0.0
    %3289 = vmatpush1.msra.mxu0 0.0
    %3290 = vmatprep.subr.mxu0 0.0
    %3291 = vmatpush1.msra.mxu0 0.0
    %3292 = vmatprep.subr.mxu0 0.0
    %3293 = vmatpush1.msra.mxu0 0.0
    %3294 = vmatprep.subr.mxu0 0.0
    %3295 = vmatpush1.msra.mxu0 0.0
    %3296 = vmatprep.subr.mxu0 0.0
    %3297 = vmatpush1.msra.mxu0 0.0
    %3298 = vmatprep.subr.mxu0 0.0
    %3299 = vmatpush1.msra.mxu0 0.0
    %3300 = vmatprep.subr.mxu0 0.0
    %3301 = vmatpush1.msra.mxu0 0.0
    %3302 = vmatprep.subr.mxu0 0.0
    %3303 = vmatpush1.msra.mxu0 0.0
    %3304 = vmatprep.subr.mxu0 0.0
    %3305 = vmatpush1.msra.mxu0 0.0
    %3306 = vmatprep.subr.mxu0 0.0
    %3307 = vmatpush1.msra.mxu0 0.0
    %3308 = vmatprep.mubr.f32.mxu0 0.0
    %3309 = vmatmul.mubr.f32.gmra.mrb[0].mxu0 %v2708
    %v3310 = vpop.f32.mrb[0].mxu0
    %v3311 = vadd.f32 %v2877, %v3310
    %v3312 = vpop.f32.mrb[0].mxu0
    %3313 = vdwg.mxu0
    %3314 = vmatprep.subr.mxu0 0.0
    %3315 = vmatpush1.msra.mxu0 %v2806
    %3316 = vmatprep.subr.mxu0 0.0
    %3317 = vmatpush1.msra.mxu0 %v2807
    %3318 = vmatprep.subr.mxu0 0.0
    %3319 = vmatpush1.msra.mxu0 %v2808
    %3320 = vmatprep.subr.mxu0 0.0
    %3321 = vmatpush1.msra.mxu0 %v2809
    %3322 = vmatprep.subr.mxu0 0.0
    %3323 = vmatpush1.msra.mxu0 %v2810
    %3324 = vmatprep.subr.mxu0 0.0
    %3325 = vmatpush1.msra.mxu0 %v2811
    %3326 = vmatprep.subr.mxu0 0.0
    %3327 = vmatpush1.msra.mxu0 %v2812
    %3328 = vmatprep.subr.mxu0 0.0
    %3329 = vmatpush1.msra.mxu0 %v2813
    %3330 = vmatprep.subr.mxu0 0.0
    %3331 = vmatpush1.msra.mxu0 %v2814
    %3332 = vmatprep.subr.mxu0 0.0
    %3333 = vmatpush1.msra.mxu0 %v2815
    %3334 = vmatprep.subr.mxu0 0.0
    %3335 = vmatpush1.msra.mxu0 %v2816
    %3336 = vmatprep.subr.mxu0 0.0
    %3337 = vmatpush1.msra.mxu0 %v2817
    %3338 = vmatprep.subr.mxu0 0.0
    %3339 = vmatpush1.msra.mxu0 %v2818
    %3340 = vmatprep.subr.mxu0 0.0
    %3341 = vmatpush1.msra.mxu0 %v2819
    %3342 = vmatprep.subr.mxu0 0.0
    %3343 = vmatpush1.msra.mxu0 %v2820
    %3344 = vmatprep.subr.mxu0 0.0
    %3345 = vmatpush1.msra.mxu0 %v2821
    %3346 = vmatprep.subr.mxu0 0.0
    %3347 = vmatpush1.msra.mxu0 0.0
    %3348 = vmatprep.subr.mxu0 0.0
    %3349 = vmatpush1.msra.mxu0 0.0
    %3350 = vmatprep.subr.mxu0 0.0
    %3351 = vmatpush1.msra.mxu0 0.0
    %3352 = vmatprep.subr.mxu0 0.0
    %3353 = vmatpush1.msra.mxu0 0.0
    %3354 = vmatprep.subr.mxu0 0.0
    %3355 = vmatpush1.msra.mxu0 0.0
    %3356 = vmatprep.subr.mxu0 0.0
    %3357 = vmatpush1.msra.mxu0 0.0
    %3358 = vmatprep.subr.mxu0 0.0
    %3359 = vmatpush1.msra.mxu0 0.0
    %3360 = vmatprep.subr.mxu0 0.0
    %3361 = vmatpush1.msra.mxu0 0.0
    %3362 = vmatprep.subr.mxu0 0.0
    %3363 = vmatpush1.msra.mxu0 0.0
    %3364 = vmatprep.subr.mxu0 0.0
    %3365 = vmatpush1.msra.mxu0 0.0
    %3366 = vmatprep.subr.mxu0 0.0
    %3367 = vmatpush1.msra.mxu0 0.0
    %3368 = vmatprep.subr.mxu0 0.0
    %3369 = vmatpush1.msra.mxu0 0.0
    %3370 = vmatprep.subr.mxu0 0.0
    %3371 = vmatpush1.msra.mxu0 0.0
    %3372 = vmatprep.subr.mxu0 0.0
    %3373 = vmatpush1.msra.mxu0 0.0
    %3374 = vmatprep.subr.mxu0 0.0
    %3375 = vmatpush1.msra.mxu0 0.0
    %3376 = vmatprep.subr.mxu0 0.0
    %3377 = vmatpush1.msra.mxu0 0.0
    %3378 = vmatprep.mubr.f32.mxu0 0.0
    %3379 = vmatmul.mubr.f32.gmra.mrb[0].mxu0 %v2705
    %v3380 = vpop.f32.mrb[0].mxu0
    %v3381 = vadd.f32 %v2881, %v3380
    %v3382 = vpop.f32.mrb[0].mxu0
    %3383 = vdwg.mxu0
    %3384 = vmatprep.subr.mxu0 0.0
    %3385 = vmatpush1.msra.mxu0 %v2822
    %3386 = vmatprep.subr.mxu0 0.0
    %3387 = vmatpush1.msra.mxu0 %v2823
    %3388 = vmatprep.subr.mxu0 0.0
    %3389 = vmatpush1.msra.mxu0 %v2824
    %3390 = vmatprep.subr.mxu0 0.0
    %3391 = vmatpush1.msra.mxu0 %v2825
    %3392 = vmatprep.subr.mxu0 0.0
    %3393 = vmatpush1.msra.mxu0 %v2826
    %3394 = vmatprep.subr.mxu0 0.0
    %3395 = vmatpush1.msra.mxu0 %v2827
    %3396 = vmatprep.subr.mxu0 0.0
    %3397 = vmatpush1.msra.mxu0 %v2828
    %3398 = vmatprep.subr.mxu0 0.0
    %3399 = vmatpush1.msra.mxu0 %v2829
    %3400 = vmatprep.subr.mxu0 0.0
    %3401 = vmatpush1.msra.mxu0 %v2830
    %3402 = vmatprep.subr.mxu0 0.0
    %3403 = vmatpush1.msra.mxu0 %v2831
    %3404 = vmatprep.subr.mxu0 0.0
    %3405 = vmatpush1.msra.mxu0 %v2832
    %3406 = vmatprep.subr.mxu0 0.0
    %3407 = vmatpush1.msra.mxu0 %v2833
    %3408 = vmatprep.subr.mxu0 0.0
    %3409 = vmatpush1.msra.mxu0 %v2834
    %3410 = vmatprep.subr.mxu0 0.0
    %3411 = vmatpush1.msra.mxu0 %v2835
    %3412 = vmatprep.subr.mxu0 0.0
    %3413 = vmatpush1.msra.mxu0 %v2836
    %3414 = vmatprep.subr.mxu0 0.0
    %3415 = vmatpush1.msra.mxu0 %v2837
    %3416 = vmatprep.subr.mxu0 0.0
    %3417 = vmatpush1.msra.mxu0 0.0
    %3418 = vmatprep.subr.mxu0 0.0
    %3419 = vmatpush1.msra.mxu0 0.0
    %3420 = vmatprep.subr.mxu0 0.0
    %3421 = vmatpush1.msra.mxu0 0.0
    %3422 = vmatprep.subr.mxu0 0.0
    %3423 = vmatpush1.msra.mxu0 0.0
    %3424 = vmatprep.subr.mxu0 0.0
    %3425 = vmatpush1.msra.mxu0 0.0
    %3426 = vmatprep.subr.mxu0 0.0
    %3427 = vmatpush1.msra.mxu0 0.0
    %3428 = vmatprep.subr.mxu0 0.0
    %3429 = vmatpush1.msra.mxu0 0.0
    %3430 = vmatprep.subr.mxu0 0.0
    %3431 = vmatpush1.msra.mxu0 0.0
    %3432 = vmatprep.subr.mxu0 0.0
    %3433 = vmatpush1.msra.mxu0 0.0
    %3434 = vmatprep.subr.mxu0 0.0
    %3435 = vmatpush1.msra.mxu0 0.0
    %3436 = vmatprep.subr.mxu0 0.0
    %3437 = vmatpush1.msra.mxu0 0.0
    %3438 = vmatprep.subr.mxu0 0.0
    %3439 = vmatpush1.msra.mxu0 0.0
    %3440 = vmatprep.subr.mxu0 0.0
    %3441 = vmatpush1.msra.mxu0 0.0
    %3442 = vmatprep.subr.mxu0 0.0
    %3443 = vmatpush1.msra.mxu0 0.0
    %3444 = vmatprep.subr.mxu0 0.0
    %3445 = vmatpush1.msra.mxu0 0.0
    %3446 = vmatprep.subr.mxu0 0.0
    %3447 = vmatpush1.msra.mxu0 0.0
    %3448 = vmatprep.mubr.f32.mxu0 0.0
    %3449 = vmatmul.mubr.f32.gmra.mrb[0].mxu0 %v2709
    %v3450 = vpop.f32.mrb[0].mxu0
    %v3451 = vadd.f32 %v2885, %v3450
    %v3452 = vpop.f32.mrb[0].mxu0
    %3453 = vdwg.mxu0
    %v3454 = vmax.f32 %v2961, 0.0
    %v3455 = vmax.f32 %v3031, 0.0
    %v3456 = vmax.f32 %v3101, 0.0
    %v3457 = vmax.f32 %v3171, 0.0
    %v3458 = vmax.f32 %v3241, 0.0
    %v3459 = vmax.f32 %v3311, 0.0
    %v3460 = vmax.f32 %v3381, 0.0
    %v3461 = vmax.f32 %v3451, 0.0
    %v3462 = vld [vmem:[%s12] sm:$0xff]
    %v3463 = vld [vmem:[%s12 + $0x8] sm:$0xff]
    %v3464 = vld [vmem:[%s12 + $0x10] sm:$0xff]
    %v3465 = vld [vmem:[%s12 + $0x18] sm:$0xff]
    %v3466 = vld [vmem:[%s12 + $0x20] sm:$0xff]
    %v3467 = vld [vmem:[%s12 + $0x28] sm:$0xff]
    %v3468 = vld [vmem:[%s12 + $0x30] sm:$0xff]
    %v3469 = vld [vmem:[%s12 + $0x38] sm:$0xff]
    %v3470 = vld [vmem:[%s12 + $0x40] sm:$0xff]
    %v3471 = vld [vmem:[%s12 + $0x48] sm:$0xff]
    %v3472 = vld [vmem:[%s12 + $0x50] sm:$0xff]
    %v3473 = vld [vmem:[%s12 + $0x58] sm:$0xff]
    %v3474 = vld [vmem:[%s12 + $0x60] sm:$0xff]
    %v3475 = vld [vmem:[%s12 + $0x68] sm:$0xff]
    %v3476 = vld [vmem:[%s12 + $0x70] sm:$0xff]
    %v3477 = vld [vmem:[%s12 + $0x78] sm:$0xff]
    %v3478 = vld [vmem:[%s12 + $0x80] sm:$0xff]
    %v3479 = vld [vmem:[%s12 + $0x88] sm:$0xff]
    %v3480 = vld [vmem:[%s12 + $0x90] sm:$0xff]
    %v3481 = vld [vmem:[%s12 + $0x98] sm:$0xff]
    %v3482 = vld [vmem:[%s12 + $0xa0] sm:$0xff]
    %v3483 = vld [vmem:[%s12 + $0xa8] sm:$0xff]
    %v3484 = vld [vmem:[%s12 + $0xb0] sm:$0xff]
    %v3485 = vld [vmem:[%s12 + $0xb8] sm:$0xff]
    %v3486 = vld [vmem:[%s12 + $0xc0] sm:$0xff]
    %v3487 = vld [vmem:[%s12 + $0xc8] sm:$0xff]
    %v3488 = vld [vmem:[%s12 + $0xd0] sm:$0xff]
    %v3489 = vld [vmem:[%s12 + $0xd8] sm:$0xff]
    %v3490 = vld [vmem:[%s12 + $0xe0] sm:$0xff]
    %v3491 = vld [vmem:[%s12 + $0xe8] sm:$0xff]
    %v3492 = vld [vmem:[%s12 + $0xf0] sm:$0xff]
    %v3493 = vld [vmem:[%s12 + $0xf8] sm:$0xff]
    %v3494 = vld [vmem:[%s12 + $0x100] sm:$0xff]
    %v3495 = vld [vmem:[%s12 + $0x108] sm:$0xff]
    %v3496 = vld [vmem:[%s12 + $0x110] sm:$0xff]
    %v3497 = vld [vmem:[%s12 + $0x118] sm:$0xff]
    %v3498 = vld [vmem:[%s12 + $0x120] sm:$0xff]
    %v3499 = vld [vmem:[%s12 + $0x128] sm:$0xff]
    %v3500 = vld [vmem:[%s12 + $0x130] sm:$0xff]
    %v3501 = vld [vmem:[%s12 + $0x138] sm:$0xff]
    %v3502 = vld [vmem:[%s12 + $0x140] sm:$0xff]
    %v3503 = vld [vmem:[%s12 + $0x148] sm:$0xff]
    %v3504 = vld [vmem:[%s12 + $0x150] sm:$0xff]
    %v3505 = vld [vmem:[%s12 + $0x158] sm:$0xff]
    %v3506 = vld [vmem:[%s12 + $0x160] sm:$0xff]
    %v3507 = vld [vmem:[%s12 + $0x168] sm:$0xff]
    %v3508 = vld [vmem:[%s12 + $0x170] sm:$0xff]
    %v3509 = vld [vmem:[%s12 + $0x178] sm:$0xff]
    %v3510 = vld [vmem:[%s12 + $0x180] sm:$0xff]
    %v3511 = vld [vmem:[%s12 + $0x188] sm:$0xff]
    %v3512 = vld [vmem:[%s12 + $0x190] sm:$0xff]
    %v3513 = vld [vmem:[%s12 + $0x198] sm:$0xff]
    %v3514 = vld [vmem:[%s12 + $0x1a0] sm:$0xff]
    %v3515 = vld [vmem:[%s12 + $0x1a8] sm:$0xff]
    %v3516 = vld [vmem:[%s12 + $0x1b0] sm:$0xff]
    %v3517 = vld [vmem:[%s12 + $0x1b8] sm:$0xff]
    %v3518 = vld [vmem:[%s12 + $0x1c0] sm:$0xff]
    %v3519 = vld [vmem:[%s12 + $0x1c8] sm:$0xff]
    %v3520 = vld [vmem:[%s12 + $0x1d0] sm:$0xff]
    %v3521 = vld [vmem:[%s12 + $0x1d8] sm:$0xff]
    %v3522 = vld [vmem:[%s12 + $0x1e0] sm:$0xff]
    %v3523 = vld [vmem:[%s12 + $0x1e8] sm:$0xff]
    %v3524 = vld [vmem:[%s12 + $0x1f0] sm:$0xff]
    %v3525 = vld [vmem:[%s12 + $0x1f8] sm:$0xff]
    %v3526 = vld [vmem:[%s13] sm:$0x1]
    %v3527 = vld [vmem:[%s13 + $0x1] sm:$0x1]
    %v3528 = vld [vmem:[%s13 + $0x2] sm:$0x1]
    %v3529 = vld [vmem:[%s13 + $0x3] sm:$0x1]
    %v3530 = vld [vmem:[%s13 + $0x4] sm:$0x1]
    %v3531 = vld [vmem:[%s13 + $0x5] sm:$0x1]
    %v3532 = vld [vmem:[%s13 + $0x6] sm:$0x1]
    %v3533 = vld [vmem:[%s13 + $0x7] sm:$0x1]
    %v3542 = vlaneseq
    %v3543 = vshrl.u32 %v3542, 7
    %v3544 = vsub.s32 0, %v3543
    %v3545 = vrot.slane %v3526, %v3544
    %v3546 = vlaneseq
    %v3547 = vshrl.u32 %v3546, 7
    %v3548 = vsub.s32 0, %v3547
    %v3549 = vrot.slane %v3527, %v3548
    %v3550 = vlaneseq
    %v3551 = vshrl.u32 %v3550, 7
    %v3552 = vsub.s32 0, %v3551
    %v3553 = vrot.slane %v3528, %v3552
    %v3554 = vlaneseq
    %v3555 = vshrl.u32 %v3554, 7
    %v3556 = vsub.s32 0, %v3555
    %v3557 = vrot.slane %v3529, %v3556
    %v3558 = vlaneseq
    %v3559 = vshrl.u32 %v3558, 7
    %v3560 = vsub.s32 0, %v3559
    %v3561 = vrot.slane %v3530, %v3560
    %v3562 = vlaneseq
    %v3563 = vshrl.u32 %v3562, 7
    %v3564 = vsub.s32 0, %v3563
    %v3565 = vrot.slane %v3531, %v3564
    %v3566 = vlaneseq
    %v3567 = vshrl.u32 %v3566, 7
    %v3568 = vsub.s32 0, %v3567
    %v3569 = vrot.slane %v3532, %v3568
    %v3570 = vlaneseq
    %v3571 = vshrl.u32 %v3570, 7
    %v3572 = vsub.s32 0, %v3571
    %v3573 = vrot.slane %v3533, %v3572
    %v3583 = vsel %vm468, %v3454, 0
    %3585 = vmatprep.subr.mxu0 0.0
    %3586 = vmatpush1.msra.mxu0 %v3462
    %3587 = vmatprep.subr.mxu0 0.0
    %3588 = vmatpush1.msra.mxu0 %v3463
    %3589 = vmatprep.subr.mxu0 0.0
    %3590 = vmatpush1.msra.mxu0 %v3464
    %3591 = vmatprep.subr.mxu0 0.0
    %3592 = vmatpush1.msra.mxu0 %v3465
    %3593 = vmatprep.subr.mxu0 0.0
    %3594 = vmatpush1.msra.mxu0 %v3466
    %3595 = vmatprep.subr.mxu0 0.0
    %3596 = vmatpush1.msra.mxu0 %v3467
    %3597 = vmatprep.subr.mxu0 0.0
    %3598 = vmatpush1.msra.mxu0 %v3468
    %3599 = vmatprep.subr.mxu0 0.0
    %3600 = vmatpush1.msra.mxu0 %v3469
    %3601 = vmatprep.subr.mxu0 0.0
    %3602 = vmatpush1.msra.mxu0 0.0
    %3603 = vmatprep.subr.mxu0 0.0
    %3604 = vmatpush1.msra.mxu0 0.0
    %3605 = vmatprep.subr.mxu0 0.0
    %3606 = vmatpush1.msra.mxu0 0.0
    %3607 = vmatprep.subr.mxu0 0.0
    %3608 = vmatpush1.msra.mxu0 0.0
    %3609 = vmatprep.subr.mxu0 0.0
    %3610 = vmatpush1.msra.mxu0 0.0
    %3611 = vmatprep.subr.mxu0 0.0
    %3612 = vmatpush1.msra.mxu0 0.0
    %3613 = vmatprep.subr.mxu0 0.0
    %3614 = vmatpush1.msra.mxu0 0.0
    %3615 = vmatprep.subr.mxu0 0.0
    %3616 = vmatpush1.msra.mxu0 0.0
    %3617 = vmatprep.subr.mxu0 0.0
    %3618 = vmatpush1.msra.mxu0 0.0
    %3619 = vmatprep.subr.mxu0 0.0
    %3620 = vmatpush1.msra.mxu0 0.0
    %3621 = vmatprep.subr.mxu0 0.0
    %3622 = vmatpush1.msra.mxu0 0.0
    %3623 = vmatprep.subr.mxu0 0.0
    %3624 = vmatpush1.msra.mxu0 0.0
    %3625 = vmatprep.subr.mxu0 0.0
    %3626 = vmatpush1.msra.mxu0 0.0
    %3627 = vmatprep.subr.mxu0 0.0
    %3628 = vmatpush1.msra.mxu0 0.0
    %3629 = vmatprep.subr.mxu0 0.0
    %3630 = vmatpush1.msra.mxu0 0.0
    %3631 = vmatprep.subr.mxu0 0.0
    %3632 = vmatpush1.msra.mxu0 0.0
    %3633 = vmatprep.subr.mxu0 0.0
    %3634 = vmatpush1.msra.mxu0 0.0
    %3635 = vmatprep.subr.mxu0 0.0
    %3636 = vmatpush1.msra.mxu0 0.0
    %3637 = vmatprep.subr.mxu0 0.0
    %3638 = vmatpush1.msra.mxu0 0.0
    %3639 = vmatprep.subr.mxu0 0.0
    %3640 = vmatpush1.msra.mxu0 0.0
    %3641 = vmatprep.subr.mxu0 0.0
    %3642 = vmatpush1.msra.mxu0 0.0
    %3643 = vmatprep.subr.mxu0 0.0
    %3644 = vmatpush1.msra.mxu0 0.0
    %3645 = vmatprep.subr.mxu0 0.0
    %3646 = vmatpush1.msra.mxu0 0.0
    %3647 = vmatprep.subr.mxu0 0.0
    %3648 = vmatpush1.msra.mxu0 0.0
    %3649 = vmatprep.mubr.f32.mxu0 0.0
    %3650 = vmatmul.mubr.f32.gmra.mrb[0].mxu0 %v3583
    %v3651 = vpop.f32.mrb[0].mxu0
    %v3652 = vadd.f32 %v3545, %v3651
    %v3653 = vpop.f32.mrb[0].mxu0
    %3654 = vdwg.mxu0
    %v3656 = vsel %vm468, %v3455, 0
    %3658 = vmatprep.subr.mxu0 0.0
    %3659 = vmatpush1.msra.mxu0 %v3470
    %3660 = vmatprep.subr.mxu0 0.0
    %3661 = vmatpush1.msra.mxu0 %v3471
    %3662 = vmatprep.subr.mxu0 0.0
    %3663 = vmatpush1.msra.mxu0 %v3472
    %3664 = vmatprep.subr.mxu0 0.0
    %3665 = vmatpush1.msra.mxu0 %v3473
    %3666 = vmatprep.subr.mxu0 0.0
    %3667 = vmatpush1.msra.mxu0 %v3474
    %3668 = vmatprep.subr.mxu0 0.0
    %3669 = vmatpush1.msra.mxu0 %v3475
    %3670 = vmatprep.subr.mxu0 0.0
    %3671 = vmatpush1.msra.mxu0 %v3476
    %3672 = vmatprep.subr.mxu0 0.0
    %3673 = vmatpush1.msra.mxu0 %v3477
    %3674 = vmatprep.subr.mxu0 0.0
    %3675 = vmatpush1.msra.mxu0 0.0
    %3676 = vmatprep.subr.mxu0 0.0
    %3677 = vmatpush1.msra.mxu0 0.0
    %3678 = vmatprep.subr.mxu0 0.0
    %3679 = vmatpush1.msra.mxu0 0.0
    %3680 = vmatprep.subr.mxu0 0.0
    %3681 = vmatpush1.msra.mxu0 0.0
    %3682 = vmatprep.subr.mxu0 0.0
    %3683 = vmatpush1.msra.mxu0 0.0
    %3684 = vmatprep.subr.mxu0 0.0
    %3685 = vmatpush1.msra.mxu0 0.0
    %3686 = vmatprep.subr.mxu0 0.0
    %3687 = vmatpush1.msra.mxu0 0.0
    %3688 = vmatprep.subr.mxu0 0.0
    %3689 = vmatpush1.msra.mxu0 0.0
    %3690 = vmatprep.subr.mxu0 0.0
    %3691 = vmatpush1.msra.mxu0 0.0
    %3692 = vmatprep.subr.mxu0 0.0
    %3693 = vmatpush1.msra.mxu0 0.0
    %3694 = vmatprep.subr.mxu0 0.0
    %3695 = vmatpush1.msra.mxu0 0.0
    %3696 = vmatprep.subr.mxu0 0.0
    %3697 = vmatpush1.msra.mxu0 0.0
    %3698 = vmatprep.subr.mxu0 0.0
    %3699 = vmatpush1.msra.mxu0 0.0
    %3700 = vmatprep.subr.mxu0 0.0
    %3701 = vmatpush1.msra.mxu0 0.0
    %3702 = vmatprep.subr.mxu0 0.0
    %3703 = vmatpush1.msra.mxu0 0.0
    %3704 = vmatprep.subr.mxu0 0.0
    %3705 = vmatpush1.msra.mxu0 0.0
    %3706 = vmatprep.subr.mxu0 0.0
    %3707 = vmatpush1.msra.mxu0 0.0
    %3708 = vmatprep.subr.mxu0 0.0
    %3709 = vmatpush1.msra.mxu0 0.0
    %3710 = vmatprep.subr.mxu0 0.0
    %3711 = vmatpush1.msra.mxu0 0.0
    %3712 = vmatprep.subr.mxu0 0.0
    %3713 = vmatpush1.msra.mxu0 0.0
    %3714 = vmatprep.subr.mxu0 0.0
    %3715 = vmatpush1.msra.mxu0 0.0
    %3716 = vmatprep.subr.mxu0 0.0
    %3717 = vmatpush1.msra.mxu0 0.0
    %3718 = vmatprep.subr.mxu0 0.0
    %3719 = vmatpush1.msra.mxu0 0.0
    %3720 = vmatprep.subr.mxu0 0.0
    %3721 = vmatpush1.msra.mxu0 0.0
    %3722 = vmatprep.mubr.f32.mxu0 0.0
    %3723 = vmatmul.mubr.f32.gmra.mrb[0].mxu0 %v3656
    %v3724 = vpop.f32.mrb[0].mxu0
    %v3725 = vadd.f32 %v3549, %v3724
    %v3726 = vpop.f32.mrb[0].mxu0
    %3727 = vdwg.mxu0
    %v3729 = vsel %vm468, %v3456, 0
    %3731 = vmatprep.subr.mxu0 0.0
    %3732 = vmatpush1.msra.mxu0 %v3478
    %3733 = vmatprep.subr.mxu0 0.0
    %3734 = vmatpush1.msra.mxu0 %v3479
    %3735 = vmatprep.subr.mxu0 0.0
    %3736 = vmatpush1.msra.mxu0 %v3480
    %3737 = vmatprep.subr.mxu0 0.0
    %3738 = vmatpush1.msra.mxu0 %v3481
    %3739 = vmatprep.subr.mxu0 0.0
    %3740 = vmatpush1.msra.mxu0 %v3482
    %3741 = vmatprep.subr.mxu0 0.0
    %3742 = vmatpush1.msra.mxu0 %v3483
    %3743 = vmatprep.subr.mxu0 0.0
    %3744 = vmatpush1.msra.mxu0 %v3484
    %3745 = vmatprep.subr.mxu0 0.0
    %3746 = vmatpush1.msra.mxu0 %v3485
    %3747 = vmatprep.subr.mxu0 0.0
    %3748 = vmatpush1.msra.mxu0 0.0
    %3749 = vmatprep.subr.mxu0 0.0
    %3750 = vmatpush1.msra.mxu0 0.0
    %3751 = vmatprep.subr.mxu0 0.0
    %3752 = vmatpush1.msra.mxu0 0.0
    %3753 = vmatprep.subr.mxu0 0.0
    %3754 = vmatpush1.msra.mxu0 0.0
    %3755 = vmatprep.subr.mxu0 0.0
    %3756 = vmatpush1.msra.mxu0 0.0
    %3757 = vmatprep.subr.mxu0 0.0
    %3758 = vmatpush1.msra.mxu0 0.0
    %3759 = vmatprep.subr.mxu0 0.0
    %3760 = vmatpush1.msra.mxu0 0.0
    %3761 = vmatprep.subr.mxu0 0.0
    %3762 = vmatpush1.msra.mxu0 0.0
    %3763 = vmatprep.subr.mxu0 0.0
    %3764 = vmatpush1.msra.mxu0 0.0
    %3765 = vmatprep.subr.mxu0 0.0
    %3766 = vmatpush1.msra.mxu0 0.0
    %3767 = vmatprep.subr.mxu0 0.0
    %3768 = vmatpush1.msra.mxu0 0.0
    %3769 = vmatprep.subr.mxu0 0.0
    %3770 = vmatpush1.msra.mxu0 0.0
    %3771 = vmatprep.subr.mxu0 0.0
    %3772 = vmatpush1.msra.mxu0 0.0
    %3773 = vmatprep.subr.mxu0 0.0
    %3774 = vmatpush1.msra.mxu0 0.0
    %3775 = vmatprep.subr.mxu0 0.0
    %3776 = vmatpush1.msra.mxu0 0.0
    %3777 = vmatprep.subr.mxu0 0.0
    %3778 = vmatpush1.msra.mxu0 0.0
    %3779 = vmatprep.subr.mxu0 0.0
    %3780 = vmatpush1.msra.mxu0 0.0
    %3781 = vmatprep.subr.mxu0 0.0
    %3782 = vmatpush1.msra.mxu0 0.0
    %3783 = vmatprep.subr.mxu0 0.0
    %3784 = vmatpush1.msra.mxu0 0.0
    %3785 = vmatprep.subr.mxu0 0.0
    %3786 = vmatpush1.msra.mxu0 0.0
    %3787 = vmatprep.subr.mxu0 0.0
    %3788 = vmatpush1.msra.mxu0 0.0
    %3789 = vmatprep.subr.mxu0 0.0
    %3790 = vmatpush1.msra.mxu0 0.0
    %3791 = vmatprep.subr.mxu0 0.0
    %3792 = vmatpush1.msra.mxu0 0.0
    %3793 = vmatprep.subr.mxu0 0.0
    %3794 = vmatpush1.msra.mxu0 0.0
    %3795 = vmatprep.mubr.f32.mxu0 0.0
    %3796 = vmatmul.mubr.f32.gmra.mrb[0].mxu0 %v3729
    %v3797 = vpop.f32.mrb[0].mxu0
    %v3798 = vadd.f32 %v3553, %v3797
    %v3799 = vpop.f32.mrb[0].mxu0
    %3800 = vdwg.mxu0
    %v3802 = vsel %vm468, %v3457, 0
    %3804 = vmatprep.subr.mxu0 0.0
    %3805 = vmatpush1.msra.mxu0 %v3486
    %3806 = vmatprep.subr.mxu0 0.0
    %3807 = vmatpush1.msra.mxu0 %v3487
    %3808 = vmatprep.subr.mxu0 0.0
    %3809 = vmatpush1.msra.mxu0 %v3488
    %3810 = vmatprep.subr.mxu0 0.0
    %3811 = vmatpush1.msra.mxu0 %v3489
    %3812 = vmatprep.subr.mxu0 0.0
    %3813 = vmatpush1.msra.mxu0 %v3490
    %3814 = vmatprep.subr.mxu0 0.0
    %3815 = vmatpush1.msra.mxu0 %v3491
    %3816 = vmatprep.subr.mxu0 0.0
    %3817 = vmatpush1.msra.mxu0 %v3492
    %3818 = vmatprep.subr.mxu0 0.0
    %3819 = vmatpush1.msra.mxu0 %v3493
    %3820 = vmatprep.subr.mxu0 0.0
    %3821 = vmatpush1.msra.mxu0 0.0
    %3822 = vmatprep.subr.mxu0 0.0
    %3823 = vmatpush1.msra.mxu0 0.0
    %3824 = vmatprep.subr.mxu0 0.0
    %3825 = vmatpush1.msra.mxu0 0.0
    %3826 = vmatprep.subr.mxu0 0.0
    %3827 = vmatpush1.msra.mxu0 0.0
    %3828 = vmatprep.subr.mxu0 0.0
    %3829 = vmatpush1.msra.mxu0 0.0
    %3830 = vmatprep.subr.mxu0 0.0
    %3831 = vmatpush1.msra.mxu0 0.0
    %3832 = vmatprep.subr.mxu0 0.0
    %3833 = vmatpush1.msra.mxu0 0.0
    %3834 = vmatprep.subr.mxu0 0.0
    %3835 = vmatpush1.msra.mxu0 0.0
    %3836 = vmatprep.subr.mxu0 0.0
    %3837 = vmatpush1.msra.mxu0 0.0
    %3838 = vmatprep.subr.mxu0 0.0
    %3839 = vmatpush1.msra.mxu0 0.0
    %3840 = vmatprep.subr.mxu0 0.0
    %3841 = vmatpush1.msra.mxu0 0.0
    %3842 = vmatprep.subr.mxu0 0.0
    %3843 = vmatpush1.msra.mxu0 0.0
    %3844 = vmatprep.subr.mxu0 0.0
    %3845 = vmatpush1.msra.mxu0 0.0
    %3846 = vmatprep.subr.mxu0 0.0
    %3847 = vmatpush1.msra.mxu0 0.0
    %3848 = vmatprep.subr.mxu0 0.0
    %3849 = vmatpush1.msra.mxu0 0.0
    %3850 = vmatprep.subr.mxu0 0.0
    %3851 = vmatpush1.msra.mxu0 0.0
    %3852 = vmatprep.subr.mxu0 0.0
    %3853 = vmatpush1.msra.mxu0 0.0
    %3854 = vmatprep.subr.mxu0 0.0
    %3855 = vmatpush1.msra.mxu0 0.0
    %3856 = vmatprep.subr.mxu0 0.0
    %3857 = vmatpush1.msra.mxu0 0.0
    %3858 = vmatprep.subr.mxu0 0.0
    %3859 = vmatpush1.msra.mxu0 0.0
    %3860 = vmatprep.subr.mxu0 0.0
    %3861 = vmatpush1.msra.mxu0 0.0
    %3862 = vmatprep.subr.mxu0 0.0
    %3863 = vmatpush1.msra.mxu0 0.0
    %3864 = vmatprep.subr.mxu0 0.0
    %3865 = vmatpush1.msra.mxu0 0.0
    %3866 = vmatprep.subr.mxu0 0.0
    %3867 = vmatpush1.msra.mxu0 0.0
    %3868 = vmatprep.mubr.f32.mxu0 0.0
    %3869 = vmatmul.mubr.f32.gmra.mrb[0].mxu0 %v3802
    %v3870 = vpop.f32.mrb[0].mxu0
    %v3871 = vadd.f32 %v3557, %v3870
    %v3872 = vpop.f32.mrb[0].mxu0
    %3873 = vdwg.mxu0
    %v3875 = vsel %vm468, %v3458, 0
    %3877 = vmatprep.subr.mxu0 0.0
    %3878 = vmatpush1.msra.mxu0 %v3494
    %3879 = vmatprep.subr.mxu0 0.0
    %3880 = vmatpush1.msra.mxu0 %v3495
    %3881 = vmatprep.subr.mxu0 0.0
    %3882 = vmatpush1.msra.mxu0 %v3496
    %3883 = vmatprep.subr.mxu0 0.0
    %3884 = vmatpush1.msra.mxu0 %v3497
    %3885 = vmatprep.subr.mxu0 0.0
    %3886 = vmatpush1.msra.mxu0 %v3498
    %3887 = vmatprep.subr.mxu0 0.0
    %3888 = vmatpush1.msra.mxu0 %v3499
    %3889 = vmatprep.subr.mxu0 0.0
    %3890 = vmatpush1.msra.mxu0 %v3500
    %3891 = vmatprep.subr.mxu0 0.0
    %3892 = vmatpush1.msra.mxu0 %v3501
    %3893 = vmatprep.subr.mxu0 0.0
    %3894 = vmatpush1.msra.mxu0 0.0
    %3895 = vmatprep.subr.mxu0 0.0
    %3896 = vmatpush1.msra.mxu0 0.0
    %3897 = vmatprep.subr.mxu0 0.0
    %3898 = vmatpush1.msra.mxu0 0.0
    %3899 = vmatprep.subr.mxu0 0.0
    %3900 = vmatpush1.msra.mxu0 0.0
    %3901 = vmatprep.subr.mxu0 0.0
    %3902 = vmatpush1.msra.mxu0 0.0
    %3903 = vmatprep.subr.mxu0 0.0
    %3904 = vmatpush1.msra.mxu0 0.0
    %3905 = vmatprep.subr.mxu0 0.0
    %3906 = vmatpush1.msra.mxu0 0.0
    %3907 = vmatprep.subr.mxu0 0.0
    %3908 = vmatpush1.msra.mxu0 0.0
    %3909 = vmatprep.subr.mxu0 0.0
    %3910 = vmatpush1.msra.mxu0 0.0
    %3911 = vmatprep.subr.mxu0 0.0
    %3912 = vmatpush1.msra.mxu0 0.0
    %3913 = vmatprep.subr.mxu0 0.0
    %3914 = vmatpush1.msra.mxu0 0.0
    %3915 = vmatprep.subr.mxu0 0.0
    %3916 = vmatpush1.msra.mxu0 0.0
    %3917 = vmatprep.subr.mxu0 0.0
    %3918 = vmatpush1.msra.mxu0 0.0
    %3919 = vmatprep.subr.mxu0 0.0
    %3920 = vmatpush1.msra.mxu0 0.0
    %3921 = vmatprep.subr.mxu0 0.0
    %3922 = vmatpush1.msra.mxu0 0.0
    %3923 = vmatprep.subr.mxu0 0.0
    %3924 = vmatpush1.msra.mxu0 0.0
    %3925 = vmatprep.subr.mxu0 0.0
    %3926 = vmatpush1.msra.mxu0 0.0
    %3927 = vmatprep.subr.mxu0 0.0
    %3928 = vmatpush1.msra.mxu0 0.0
    %3929 = vmatprep.subr.mxu0 0.0
    %3930 = vmatpush1.msra.mxu0 0.0
    %3931 = vmatprep.subr.mxu0 0.0
    %3932 = vmatpush1.msra.mxu0 0.0
    %3933 = vmatprep.subr.mxu0 0.0
    %3934 = vmatpush1.msra.mxu0 0.0
    %3935 = vmatprep.subr.mxu0 0.0
    %3936 = vmatpush1.msra.mxu0 0.0
    %3937 = vmatprep.subr.mxu0 0.0
    %3938 = vmatpush1.msra.mxu0 0.0
    %3939 = vmatprep.subr.mxu0 0.0
    %3940 = vmatpush1.msra.mxu0 0.0
    %3941 = vmatprep.mubr.f32.mxu0 0.0
    %3942 = vmatmul.mubr.f32.gmra.mrb[0].mxu0 %v3875
    %v3943 = vpop.f32.mrb[0].mxu0
    %v3944 = vadd.f32 %v3561, %v3943
    %v3945 = vpop.f32.mrb[0].mxu0
    %3946 = vdwg.mxu0
    %v3948 = vsel %vm468, %v3459, 0
    %3950 = vmatprep.subr.mxu0 0.0
    %3951 = vmatpush1.msra.mxu0 %v3502
    %3952 = vmatprep.subr.mxu0 0.0
    %3953 = vmatpush1.msra.mxu0 %v3503
    %3954 = vmatprep.subr.mxu0 0.0
    %3955 = vmatpush1.msra.mxu0 %v3504
    %3956 = vmatprep.subr.mxu0 0.0
    %3957 = vmatpush1.msra.mxu0 %v3505
    %3958 = vmatprep.subr.mxu0 0.0
    %3959 = vmatpush1.msra.mxu0 %v3506
    %3960 = vmatprep.subr.mxu0 0.0
    %3961 = vmatpush1.msra.mxu0 %v3507
    %3962 = vmatprep.subr.mxu0 0.0
    %3963 = vmatpush1.msra.mxu0 %v3508
    %3964 = vmatprep.subr.mxu0 0.0
    %3965 = vmatpush1.msra.mxu0 %v3509
    %3966 = vmatprep.subr.mxu0 0.0
    %3967 = vmatpush1.msra.mxu0 0.0
    %3968 = vmatprep.subr.mxu0 0.0
    %3969 = vmatpush1.msra.mxu0 0.0
    %3970 = vmatprep.subr.mxu0 0.0
    %3971 = vmatpush1.msra.mxu0 0.0
    %3972 = vmatprep.subr.mxu0 0.0
    %3973 = vmatpush1.msra.mxu0 0.0
    %3974 = vmatprep.subr.mxu0 0.0
    %3975 = vmatpush1.msra.mxu0 0.0
    %3976 = vmatprep.subr.mxu0 0.0
    %3977 = vmatpush1.msra.mxu0 0.0
    %3978 = vmatprep.subr.mxu0 0.0
    %3979 = vmatpush1.msra.mxu0 0.0
    %3980 = vmatprep.subr.mxu0 0.0
    %3981 = vmatpush1.msra.mxu0 0.0
    %3982 = vmatprep.subr.mxu0 0.0
    %3983 = vmatpush1.msra.mxu0 0.0
    %3984 = vmatprep.subr.mxu0 0.0
    %3985 = vmatpush1.msra.mxu0 0.0
    %3986 = vmatprep.subr.mxu0 0.0
    %3987 = vmatpush1.msra.mxu0 0.0
    %3988 = vmatprep.subr.mxu0 0.0
    %3989 = vmatpush1.msra.mxu0 0.0
    %3990 = vmatprep.subr.mxu0 0.0
    %3991 = vmatpush1.msra.mxu0 0.0
    %3992 = vmatprep.subr.mxu0 0.0
    %3993 = vmatpush1.msra.mxu0 0.0
    %3994 = vmatprep.subr.mxu0 0.0
    %3995 = vmatpush1.msra.mxu0 0.0
    %3996 = vmatprep.subr.mxu0 0.0
    %3997 = vmatpush1.msra.mxu0 0.0
    %3998 = vmatprep.subr.mxu0 0.0
    %3999 = vmatpush1.msra.mxu0 0.0
    %4000 = vmatprep.subr.mxu0 0.0
    %4001 = vmatpush1.msra.mxu0 0.0
    %4002 = vmatprep.subr.mxu0 0.0
    %4003 = vmatpush1.msra.mxu0 0.0
    %4004 = vmatprep.subr.mxu0 0.0
    %4005 = vmatpush1.msra.mxu0 0.0
    %4006 = vmatprep.subr.mxu0 0.0
    %4007 = vmatpush1.msra.mxu0 0.0
    %4008 = vmatprep.subr.mxu0 0.0
    %4009 = vmatpush1.msra.mxu0 0.0
    %4010 = vmatprep.subr.mxu0 0.0
    %4011 = vmatpush1.msra.mxu0 0.0
    %4012 = vmatprep.subr.mxu0 0.0
    %4013 = vmatpush1.msra.mxu0 0.0
    %4014 = vmatprep.mubr.f32.mxu0 0.0
    %4015 = vmatmul.mubr.f32.gmra.mrb[0].mxu0 %v3948
    %v4016 = vpop.f32.mrb[0].mxu0
    %v4017 = vadd.f32 %v3565, %v4016
    %v4018 = vpop.f32.mrb[0].mxu0
    %4019 = vdwg.mxu0
    %v4021 = vsel %vm468, %v3460, 0
    %4023 = vmatprep.subr.mxu0 0.0
    %4024 = vmatpush1.msra.mxu0 %v3510
    %4025 = vmatprep.subr.mxu0 0.0
    %4026 = vmatpush1.msra.mxu0 %v3511
    %4027 = vmatprep.subr.mxu0 0.0
    %4028 = vmatpush1.msra.mxu0 %v3512
    %4029 = vmatprep.subr.mxu0 0.0
    %4030 = vmatpush1.msra.mxu0 %v3513
    %4031 = vmatprep.subr.mxu0 0.0
    %4032 = vmatpush1.msra.mxu0 %v3514
    %4033 = vmatprep.subr.mxu0 0.0
    %4034 = vmatpush1.msra.mxu0 %v3515
    %4035 = vmatprep.subr.mxu0 0.0
    %4036 = vmatpush1.msra.mxu0 %v3516
    %4037 = vmatprep.subr.mxu0 0.0
    %4038 = vmatpush1.msra.mxu0 %v3517
    %4039 = vmatprep.subr.mxu0 0.0
    %4040 = vmatpush1.msra.mxu0 0.0
    %4041 = vmatprep.subr.mxu0 0.0
    %4042 = vmatpush1.msra.mxu0 0.0
    %4043 = vmatprep.subr.mxu0 0.0
    %4044 = vmatpush1.msra.mxu0 0.0
    %4045 = vmatprep.subr.mxu0 0.0
    %4046 = vmatpush1.msra.mxu0 0.0
    %4047 = vmatprep.subr.mxu0 0.0
    %4048 = vmatpush1.msra.mxu0 0.0
    %4049 = vmatprep.subr.mxu0 0.0
    %4050 = vmatpush1.msra.mxu0 0.0
    %4051 = vmatprep.subr.mxu0 0.0
    %4052 = vmatpush1.msra.mxu0 0.0
    %4053 = vmatprep.subr.mxu0 0.0
    %4054 = vmatpush1.msra.mxu0 0.0
    %4055 = vmatprep.subr.mxu0 0.0
    %4056 = vmatpush1.msra.mxu0 0.0
    %4057 = vmatprep.subr.mxu0 0.0
    %4058 = vmatpush1.msra.mxu0 0.0
    %4059 = vmatprep.subr.mxu0 0.0
    %4060 = vmatpush1.msra.mxu0 0.0
    %4061 = vmatprep.subr.mxu0 0.0
    %4062 = vmatpush1.msra.mxu0 0.0
    %4063 = vmatprep.subr.mxu0 0.0
    %4064 = vmatpush1.msra.mxu0 0.0
    %4065 = vmatprep.subr.mxu0 0.0
    %4066 = vmatpush1.msra.mxu0 0.0
    %4067 = vmatprep.subr.mxu0 0.0
    %4068 = vmatpush1.msra.mxu0 0.0
    %4069 = vmatprep.subr.mxu0 0.0
    %4070 = vmatpush1.msra.mxu0 0.0
    %4071 = vmatprep.subr.mxu0 0.0
    %4072 = vmatpush1.msra.mxu0 0.0
    %4073 = vmatprep.subr.mxu0 0.0
    %4074 = vmatpush1.msra.mxu0 0.0
    %4075 = vmatprep.subr.mxu0 0.0
    %4076 = vmatpush1.msra.mxu0 0.0
    %4077 = vmatprep.subr.mxu0 0.0
    %4078 = vmatpush1.msra.mxu0 0.0
    %4079 = vmatprep.subr.mxu0 0.0
    %4080 = vmatpush1.msra.mxu0 0.0
    %4081 = vmatprep.subr.mxu0 0.0
    %4082 = vmatpush1.msra.mxu0 0.0
    %4083 = vmatprep.subr.mxu0 0.0
    %4084 = vmatpush1.msra.mxu0 0.0
    %4085 = vmatprep.subr.mxu0 0.0
    %4086 = vmatpush1.msra.mxu0 0.0
    %4087 = vmatprep.mubr.f32.mxu0 0.0
    %4088 = vmatmul.mubr.f32.gmra.mrb[0].mxu0 %v4021
    %v4089 = vpop.f32.mrb[0].mxu0
    %v4090 = vadd.f32 %v3569, %v4089
    %v4091 = vpop.f32.mrb[0].mxu0
    %4092 = vdwg.mxu0
    %v4094 = vsel %vm468, %v3461, 0
    %4096 = vmatprep.subr.mxu0 0.0
    %4097 = vmatpush1.msra.mxu0 %v3518
    %4098 = vmatprep.subr.mxu0 0.0
    %4099 = vmatpush1.msra.mxu0 %v3519
    %4100 = vmatprep.subr.mxu0 0.0
    %4101 = vmatpush1.msra.mxu0 %v3520
    %4102 = vmatprep.subr.mxu0 0.0
    %4103 = vmatpush1.msra.mxu0 %v3521
    %4104 = vmatprep.subr.mxu0 0.0
    %4105 = vmatpush1.msra.mxu0 %v3522
    %4106 = vmatprep.subr.mxu0 0.0
    %4107 = vmatpush1.msra.mxu0 %v3523
    %4108 = vmatprep.subr.mxu0 0.0
    %4109 = vmatpush1.msra.mxu0 %v3524
    %4110 = vmatprep.subr.mxu0 0.0
    %4111 = vmatpush1.msra.mxu0 %v3525
    %4112 = vmatprep.subr.mxu0 0.0
    %4113 = vmatpush1.msra.mxu0 0.0
    %4114 = vmatprep.subr.mxu0 0.0
    %4115 = vmatpush1.msra.mxu0 0.0
    %4116 = vmatprep.subr.mxu0 0.0
    %4117 = vmatpush1.msra.mxu0 0.0
    %4118 = vmatprep.subr.mxu0 0.0
    %4119 = vmatpush1.msra.mxu0 0.0
    %4120 = vmatprep.subr.mxu0 0.0
    %4121 = vmatpush1.msra.mxu0 0.0
    %4122 = vmatprep.subr.mxu0 0.0
    %4123 = vmatpush1.msra.mxu0 0.0
    %4124 = vmatprep.subr.mxu0 0.0
    %4125 = vmatpush1.msra.mxu0 0.0
    %4126 = vmatprep.subr.mxu0 0.0
    %4127 = vmatpush1.msra.mxu0 0.0
    %4128 = vmatprep.subr.mxu0 0.0
    %4129 = vmatpush1.msra.mxu0 0.0
    %4130 = vmatprep.subr.mxu0 0.0
    %4131 = vmatpush1.msra.mxu0 0.0
    %4132 = vmatprep.subr.mxu0 0.0
    %4133 = vmatpush1.msra.mxu0 0.0
    %4134 = vmatprep.subr.mxu0 0.0
    %4135 = vmatpush1.msra.mxu0 0.0
    %4136 = vmatprep.subr.mxu0 0.0
    %4137 = vmatpush1.msra.mxu0 0.0
    %4138 = vmatprep.subr.mxu0 0.0
    %4139 = vmatpush1.msra.mxu0 0.0
    %4140 = vmatprep.subr.mxu0 0.0
    %4141 = vmatpush1.msra.mxu0 0.0
    %4142 = vmatprep.subr.mxu0 0.0
    %4143 = vmatpush1.msra.mxu0 0.0
    %4144 = vmatprep.subr.mxu0 0.0
    %4145 = vmatpush1.msra.mxu0 0.0
    %4146 = vmatprep.subr.mxu0 0.0
    %4147 = vmatpush1.msra.mxu0 0.0
    %4148 = vmatprep.subr.mxu0 0.0
    %4149 = vmatpush1.msra.mxu0 0.0
    %4150 = vmatprep.subr.mxu0 0.0
    %4151 = vmatpush1.msra.mxu0 0.0
    %4152 = vmatprep.subr.mxu0 0.0
    %4153 = vmatpush1.msra.mxu0 0.0
    %4154 = vmatprep.subr.mxu0 0.0
    %4155 = vmatpush1.msra.mxu0 0.0
    %4156 = vmatprep.subr.mxu0 0.0
    %4157 = vmatpush1.msra.mxu0 0.0
    %4158 = vmatprep.subr.mxu0 0.0
    %4159 = vmatpush1.msra.mxu0 0.0
    %4160 = vmatprep.mubr.f32.mxu0 0.0
    %4161 = vmatmul.mubr.f32.gmra.mrb[0].mxu0 %v4094
    %v4162 = vpop.f32.mrb[0].mxu0
    %v4163 = vadd.f32 %v3573, %v4162
    %v4164 = vpop.f32.mrb[0].mxu0
    %4165 = vdwg.mxu0
    %vm4166 = vcmask 58368
    %4167 = vst.msk [vmem:[#allocation2] sm:$0x3] %vm4166, %v3652
    %4168 = vst.msk [vmem:[#allocation2 + $0x2] sm:$0x3] %vm4166, %v3725
    %4169 = vst.msk [vmem:[#allocation2 + $0x4] sm:$0x3] %vm4166, %v3798
    %4170 = vst.msk [vmem:[#allocation2 + $0x6] sm:$0x3] %vm4166, %v3871
    %4171 = vst.msk [vmem:[#allocation2 + $0x8] sm:$0x3] %vm4166, %v3944
    %4172 = vst.msk [vmem:[#allocation2 + $0xa] sm:$0x3] %vm4166, %v4017
    %4173 = vst.msk [vmem:[#allocation2 + $0xc] sm:$0x3] %vm4166, %v4090
    %4174 = vst.msk [vmem:[#allocation2 + $0xe] sm:$0x3] %vm4166, %v4163
    // Predicated region
    $region58: #{gat_mlp_forward.1} parent=1 // pred_check
      _
    $region59: #{gat_mlp_forward.1} parent=1 // pred_check_branch
      %4176 = sbr.rel (0) target = $region61
    $region60: #{gat_mlp_forward.1} parent=1 // pred_region
      %s4178 = ssub.s32 256, 256
      %4179 = vsyncadd [#allocation3], %s4178
      %s4180 = sshll.u32 [#allocation2], 4
      %s4181 = int_to_ptr.vmem [resolvable:$true] %s4180
      %4186 = dma.vmem_to_hbm [thread:$0]  %s4181, 256, %s14, [#allocation3], 32, 32, 2
    $region61: #{gat_mlp_forward.1} parent=1 // pred_fallthru
      _
    // Predicated region
    $region62: #{gat_mlp_forward.1} parent=1 // pred_check
      _
    $region63: #{gat_mlp_forward.1} parent=1 // pred_check_branch
      %4188 = sbr.rel (0) target = $region65
    $region64: #{gat_mlp_forward.1} parent=1 // pred_region
      %4189 = dma.done [#allocation3], 256
    $region65: #{gat_mlp_forward.1} parent=1 // pred_fallthru
      _
    %4190 = vsyncpa [#allocation3], 1

</llo_original>
